<compile_context>
chip_gen: v7x
topology: tpu7x:2x2x1
jax: 0.10.0
libtpu: 0.0.40
codegen_flags: <defaults>
</compile_context>

<pallas_src>
import numpy as np
import jax
import jax.numpy as jnp
from jax import lax
from jax.experimental import pallas as pl
from jax.experimental.pallas import tpu as pltpu


# ---------------------------------------------------------------------------
# Fused kernel: embedding -> BiLSTM -> hidden2tag -> CRF Viterbi decode
# ---------------------------------------------------------------------------
def _bilstm_crf_kernel(tok_ref,                        # (T*B, 1) int32, time-major rows
                       embtbl_ref,                     # (V, E)  f32 embedding table
                       wih_ref, bih_ref,               # (E, 8H) (1, 8H)  [fwd|bwd] fused
                       whh_f_ref, whh_b_ref,           # (H, 4H) each
                       wout_f_ref, wout_b_ref, bout_ref,  # (H,K) (H,K) (1,K)
                       trans_t_ref, start_ref, end_ref,   # (K,K)[next,prev] (1,K) (1,K)
                       em_ref,                         # (T*B, K) f32 out
                       path_ref,                       # (B, T)  int32 out
                       hf_sc, hb_sc):                  # (T*B, H) f32 scratch per direction
    H = whh_f_ref.shape[0]
    K = trans_t_ref.shape[0]
    V = embtbl_ref.shape[0]
    B, T = path_ref.shape
    TB = em_ref.shape[0]
    f32 = jnp.float32

    def sigm(x):
        # exact sigmoid via tanh: EUP transcendental + cheap VALU, no divide
        return 0.5 * (jnp.tanh(0.5 * x) + 1.0)

    # ---- in-kernel embedding lookup: one-hot rows -> one MXU matmul ----
    # TODO(synk): for large vocabularies replace the one-hot matmul with a
    # scalar-prefetch / DMA row gather (K-dim = V is too big for the MXU there).
    tok = tok_ref[...]                                           # (T*B, 1)
    vocab_iota = lax.broadcasted_iota(jnp.int32, (TB, V), 1)
    onehot = (vocab_iota == tok).astype(f32)                     # (T*B, V)
    emb = jnp.dot(onehot, embtbl_ref[...], preferred_element_type=f32)   # (T*B, E)

    # ---- single fused input projection for BOTH directions: (T*B,E)@(E,8H) ----
    xp = jnp.dot(emb, wih_ref[...], preferred_element_type=f32) + bih_ref[...]
    xpf = xp[:, :4 * H]                                          # fwd gate pre-acts
    xpb = xp[:, 4 * H:]                                          # bwd gate pre-acts

    # hoist loop-invariant recurrent weights
    whh_f = whh_f_ref[...]
    whh_b = whh_b_ref[...]

    def lstm_step(xp_t, h, c, whh):
        # fused gates: one (B,H)@(H,4H) recurrent matmul, gate order i,f,g,o
        gates = xp_t + jnp.dot(h, whh, preferred_element_type=f32)   # (B, 4H)
        i = sigm(gates[:, 0:H])
        f = sigm(gates[:, H:2 * H])
        g = jnp.tanh(gates[:, 2 * H:3 * H])
        o = sigm(gates[:, 3 * H:4 * H])
        c_new = f * c + i * g
        h_new = o * jnp.tanh(c_new)
        return h_new, c_new

    # ---- forward recurrence (fully unrolled; T is small & static) ----
    h = jnp.zeros((B, H), f32)
    c = jnp.zeros((B, H), f32)
    for t in range(T):
        h, c = lstm_step(xpf[t * B:(t + 1) * B], h, c, whh_f)
        hf_sc[t * B:(t + 1) * B, :] = h

    # ---- backward recurrence ----
    h = jnp.zeros((B, H), f32)
    c = jnp.zeros((B, H), f32)
    for t in range(T - 1, -1, -1):
        h, c = lstm_step(xpb[t * B:(t + 1) * B], h, c, whh_b)
        hb_sc[t * B:(t + 1) * B, :] = h

    # ---- batched hidden2tag epilogue: two (T*B,H)@(H,K) matmuls ----
    em = (jnp.dot(hf_sc[...], wout_f_ref[...], preferred_element_type=f32)
          + jnp.dot(hb_sc[...], wout_b_ref[...], preferred_element_type=f32)
          + bout_ref[...])                                       # (T*B, K)
    em_ref[...] = em

    # ---- CRF Viterbi decode on the in-VMEM emissions value ----
    def argmax_last(x, keepdims=False):
        # first-max tie-break, matching np.argmax
        m = jnp.max(x, axis=-1, keepdims=True)
        iota = lax.broadcasted_iota(jnp.int32, x.shape, x.ndim - 1)
        cand = jnp.where(x == m, iota, jnp.int32(x.shape[-1]))
        return jnp.min(cand, axis=-1, keepdims=keepdims).astype(jnp.int32)

    trans3 = trans_t_ref[...][None, :, :]                        # hoisted (1, K_next, K_prev)

    score = start_ref[...] + em[0:B]                             # (B, K)
    hist = []                                                    # backpointers per step (values)
    for t in range(1, T):
        e_t = em[t * B:(t + 1) * B]                              # (B, K)
        # cand[b, next, prev] = score[b, prev] + trans[prev, next] + e_t[b, next]
        cand = score[:, None, :] + trans3 + e_t[:, :, None]      # (B, K, K)
        hist.append(argmax_last(cand))                           # (B, K) best prev per next
        score = jnp.max(cand, axis=-1)
    final = score + end_ref[...]

    best = argmax_last(final, keepdims=True)                     # (B, 1)
    col = lax.broadcasted_iota(jnp.int32, (B, T), 1)
    path = jnp.where(col == (T - 1), best, 0)                    # dense (B, T) in vregs
    tag_iota = lax.broadcasted_iota(jnp.int32, (B, K), 1)
    for t in range(T - 2, -1, -1):
        bp = hist[t]                                             # backpointers of step t+1
        best = jnp.sum(jnp.where(tag_iota == best, bp, 0),
                       axis=-1, keepdims=True).astype(jnp.int32)
        path = jnp.where(col == t, best, path)
    path_ref[...] = path                                         # single lane-dense store


# ---------------------------------------------------------------------------
# Wrapper: BiLSTM_CRF.forward(sentences)  (tags=None -> crf.decode path)
# ---------------------------------------------------------------------------
def bilstm_crf_decode(tokens, p):
    """tokens: (B, T) int32.  Returns (best path (B, T) int32, emissions (T, B, K))."""
    B, T = tokens.shape
    H = p["Whh_f"].shape[1]            # hidden_dim // 2
    K = p["Wout"].shape[0]             # tagset size

    tok_tm = jnp.transpose(tokens, (1, 0)).reshape(T * B, 1).astype(jnp.int32)

    # Fused [fwd | bwd] input-projection weights, PyTorch gate order i,f,g,o preserved
    # as column blocks inside each direction.
    wih_cat = jnp.concatenate([p["Wih_f"].T, p["Wih_b"].T], axis=1)          # (E, 8H)
    bih_cat = jnp.concatenate([p["bih_f"] + p["bhh_f"],
                               p["bih_b"] + p["bhh_b"]]).reshape(1, 8 * H)   # (1, 8H)

    wout_t = p["Wout"].T                                                     # (2H, K)
    args = (
        tok_tm,
        p["embedding"].astype(jnp.float32),
        wih_cat, bih_cat,
        p["Whh_f"].T, p["Whh_b"].T,
        wout_t[:H, :], wout_t[H:, :], p["bout"][None, :],
        p["trans"].T,                                            # trans_t[next, prev]
        p["start"][None, :],
        p["end"][None, :],
    )

    vmem = pl.BlockSpec(memory_space=pltpu.MemorySpace.VMEM)

    # For module-default / large T,B on v7x: grid over T with BlockSpec-pipelined
    # token/emission blocks, carry h/c in scratch, shard batch across the 2 TCs
    # ("parallel" axis), and cast matmul operands to bf16.  At these verification
    # sizes the whole problem fits comfortably in VMEM of every generation, so a
    # single invocation is both simplest and fastest.
    em2d, path = pl.pallas_call(
        _bilstm_crf_kernel,
        out_shape=(jax.ShapeDtypeStruct((T * B, K), jnp.float32),
                   jax.ShapeDtypeStruct((B, T), jnp.int32)),
        in_specs=[vmem] * 12,
        out_specs=(vmem, vmem),
        scratch_shapes=[pltpu.VMEM((T * B, H), jnp.float32),
                        pltpu.VMEM((T * B, H), jnp.float32)],
    )(*args)

    return path, em2d.reshape(T, B, K)
    # TODO(synk): CRF negative log-likelihood branch (tags is not None) not implemented;
    # only the inference/decode branch of forward() is reproduced.


# ---------------------------------------------------------------------------
# Pure-JAX / numpy reference for verification
# ---------------------------------------------------------------------------
def _ref_forward(tokens, p):
    emb = p["embedding"][tokens].astype(jnp.float32)             # (B, T, E)
    x_tm = jnp.transpose(emb, (1, 0, 2))                         # (T, B, E)
    B = tokens.shape[0]
    H = p["Whh_f"].shape[1]

    def sig(x):
        return 1.0 / (1.0 + jnp.exp(-x))

    def run_dir(xs, wih, whh, b):
        def step(carry, x):
            h, c = carry
            gates = x @ wih.T + h @ whh.T + b
            i = sig(gates[:, :H]); f = sig(gates[:, H:2 * H])
            g = jnp.tanh(gates[:, 2 * H:3 * H]); o = sig(gates[:, 3 * H:])
            c = f * c + i * g
            h = o * jnp.tanh(c)
            return (h, c), h
        init = (jnp.zeros((B, H)), jnp.zeros((B, H)))
        _, hs = lax.scan(step, init, xs)
        return hs

    hf = run_dir(x_tm, p["Wih_f"], p["Whh_f"], p["bih_f"] + p["bhh_f"])
    hb = run_dir(x_tm[::-1], p["Wih_b"], p["Whh_b"], p["bih_b"] + p["bhh_b"])[::-1]
    h = jnp.concatenate([hf, hb], axis=-1)                       # (T, B, 2H)
    em = h @ p["Wout"].T + p["bout"]                             # (T, B, K)

    em_np = np.asarray(em)
    trans = np.asarray(p["trans"]); start = np.asarray(p["start"]); end = np.asarray(p["end"])
    T, _, K = em_np.shape
    paths = np.zeros((B, T), np.int32)
    for b in range(B):
        score = start + em_np[0, b]
        hist = []
        for t in range(1, T):
            cand = score[:, None] + trans + em_np[t, b][None, :]     # (prev, next)
            hist.append(np.argmax(cand, axis=0))
            score = np.max(cand, axis=0)
        score = score + end
        best = int(np.argmax(score))
        seq = [best]
        for hrec in reversed(hist):
            best = int(hrec[best])
            seq.append(best)
        paths[b] = np.array(list(reversed(seq)), np.int32)
    return paths, em


# ---------------------------------------------------------------------------
if __name__ == "__main__":
    # small, deterministic config (module defaults are E=100, hidden=128; scaled down)
    V, K_TAGS = 50, 5          # vocab_size, tagset_size
    E, HID = 32, 32            # embedding_dim, hidden_dim (H = HID // 2 = 16)
    B, T = 2, 8
    PAD_WORD_IDX = 0
    H = HID // 2

    key = jax.random.PRNGKey(0)
    ks = jax.random.split(key, 16)
    u = lambda k, shape, b: jax.random.uniform(k, shape, jnp.float32, -b, b)
    bnd = 1.0 / np.sqrt(H)

    emb_tbl = jax.random.normal(ks[0], (V, E), jnp.float32)
    emb_tbl = emb_tbl.at[PAD_WORD_IDX].set(0.0)                  # nn.Embedding padding_idx row

    params = {
        "embedding": emb_tbl,
        "Wih_f": u(ks[1], (4 * H, E), bnd), "Whh_f": u(ks[2], (4 * H, H), bnd),
        "bih_f": u(ks[3], (4 * H,), bnd),   "bhh_f": u(ks[4], (4 * H,), bnd),
        "Wih_b": u(ks[5], (4 * H, E), bnd), "Whh_b": u(ks[6], (4 * H, H), bnd),
        "bih_b": u(ks[7], (4 * H,), bnd),   "bhh_b": u(ks[8], (4 * H,), bnd),
        "Wout": u(ks[9], (K_TAGS, HID), 1.0 / np.sqrt(HID)),
        "bout": u(ks[10], (K_TAGS,), 1.0 / np.sqrt(HID)),
        "start": u(ks[11], (K_TAGS,), 0.1),
        "end":   u(ks[12], (K_TAGS,), 0.1),
        "trans": u(ks[13], (K_TAGS, K_TAGS), 0.1),
    }

    sentences = jax.random.randint(ks[14], (B, T), 0, V, dtype=jnp.int32)

    path, emissions_tm = bilstm_crf_decode(sentences, params)
    path = jax.block_until_ready(path)

    ref_path, ref_em = _ref_forward(sentences, params)
    np.testing.assert_allclose(np.asarray(emissions_tm), np.asarray(ref_em),
                               rtol=1e-3, atol=1e-3)
    np.testing.assert_array_equal(np.asarray(path), ref_path)

    print("KERNEL_OK")
</pallas_src>

<mosaic_0001>
module attributes {stable_mosaic.version = 11 : i64} {
  func.func @_bilstm_crf_kernel(%arg0: memref<16x1xi32, #tpu.memory_space<vmem>>, %arg1: memref<50x32xf32, #tpu.memory_space<vmem>>, %arg2: memref<32x128xf32, #tpu.memory_space<vmem>>, %arg3: memref<1x128xf32, #tpu.memory_space<vmem>>, %arg4: memref<16x64xf32, #tpu.memory_space<vmem>>, %arg5: memref<16x64xf32, #tpu.memory_space<vmem>>, %arg6: memref<16x5xf32, #tpu.memory_space<vmem>>, %arg7: memref<16x5xf32, #tpu.memory_space<vmem>>, %arg8: memref<1x5xf32, #tpu.memory_space<vmem>>, %arg9: memref<5x5xf32, #tpu.memory_space<vmem>>, %arg10: memref<1x5xf32, #tpu.memory_space<vmem>>, %arg11: memref<1x5xf32, #tpu.memory_space<vmem>>, %arg12: memref<16x5xf32, #tpu.memory_space<vmem>>, %arg13: memref<2x8xi32, #tpu.memory_space<vmem>>, %arg14: memref<16x16xf32, #tpu.memory_space<vmem>>, %arg15: memref<16x16xf32, #tpu.memory_space<vmem>>) attributes {dimension_semantics = [], scalar_prefetch = 0 : i64, scratch_operands = 2 : i64, tpu.core_type = #tpu.core_type<tc>} {
    %c0 = arith.constant 0 : index
    %c0_0 = arith.constant 0 : index
    %0 = vector.load %arg0[%c0, %c0_0] : memref<16x1xi32, #tpu.memory_space<vmem>>, vector<16x1xi32>
    %1 = tpu.iota {dimensions = array<i32: 1>} : vector<16x50xi32>
    %2 = vector.broadcast %0 : vector<16x1xi32> to vector<16x50xi32>
    %3 = arith.cmpi eq, %1, %2 : vector<16x50xi32>
    %4 = arith.extui %3 : vector<16x50xi1> to vector<16x50xi32>
    %5 = arith.sitofp %4 : vector<16x50xi32> to vector<16x50xf32>
    %c0_1 = arith.constant 0 : index
    %c0_2 = arith.constant 0 : index
    %6 = vector.load %arg1[%c0_1, %c0_2] : memref<50x32xf32, #tpu.memory_space<vmem>>, vector<50x32xf32>
    %cst = arith.constant dense<0.000000e+00> : vector<16x32xf32>
    %7 = tpu.matmul %5, %6, %cst {dimension_numbers = #tpu.dot_dimension_numbers<[1], [0], [0], [1], [0, 0, 1, 1], [], []>} : vector<16x50xf32>, vector<50x32xf32>, vector<16x32xf32> -> vector<16x32xf32>
    %c0_3 = arith.constant 0 : index
    %c0_4 = arith.constant 0 : index
    %8 = vector.load %arg2[%c0_3, %c0_4] : memref<32x128xf32, #tpu.memory_space<vmem>>, vector<32x128xf32>
    %cst_5 = arith.constant dense<0.000000e+00> : vector<16x128xf32>
    %9 = tpu.matmul %7, %8, %cst_5 {dimension_numbers = #tpu.dot_dimension_numbers<[1], [0], [0], [1], [0, 0, 1, 1], [], []>} : vector<16x32xf32>, vector<32x128xf32>, vector<16x128xf32> -> vector<16x128xf32>
    %c0_6 = arith.constant 0 : index
    %c0_7 = arith.constant 0 : index
    %10 = vector.load %arg3[%c0_6, %c0_7] : memref<1x128xf32, #tpu.memory_space<vmem>>, vector<1x128xf32>
    %11 = vector.broadcast %10 : vector<1x128xf32> to vector<16x128xf32>
    %12 = arith.addf %9, %11 : vector<16x128xf32>
    %13 = vector.extract_strided_slice %12 {offsets = [0, 0], sizes = [16, 64], strides = [1, 1]} : vector<16x128xf32> to vector<16x64xf32>
    %14 = vector.extract_strided_slice %12 {offsets = [0, 64], sizes = [16, 64], strides = [1, 1]} : vector<16x128xf32> to vector<16x64xf32>
    %c0_8 = arith.constant 0 : index
    %c0_9 = arith.constant 0 : index
    %15 = vector.load %arg4[%c0_8, %c0_9] : memref<16x64xf32, #tpu.memory_space<vmem>>, vector<16x64xf32>
    %c0_10 = arith.constant 0 : index
    %c0_11 = arith.constant 0 : index
    %16 = vector.load %arg5[%c0_10, %c0_11] : memref<16x64xf32, #tpu.memory_space<vmem>>, vector<16x64xf32>
    %cst_12 = arith.constant 0.000000e+00 : f32
    %17 = vector.broadcast %cst_12 : f32 to vector<2x16xf32>
    %cst_13 = arith.constant 0.000000e+00 : f32
    %18 = vector.broadcast %cst_13 : f32 to vector<2x16xf32>
    %19 = vector.extract_strided_slice %13 {offsets = [0, 0], sizes = [2, 64], strides = [1, 1]} : vector<16x64xf32> to vector<2x64xf32>
    %cst_14 = arith.constant dense<0.000000e+00> : vector<2x64xf32>
    %20 = tpu.matmul %17, %15, %cst_14 {dimension_numbers = #tpu.dot_dimension_numbers<[1], [0], [0], [1], [0, 0, 1, 1], [], []>} : vector<2x16xf32>, vector<16x64xf32>, vector<2x64xf32> -> vector<2x64xf32>
    %21 = arith.addf %19, %20 : vector<2x64xf32>
    %22 = vector.extract_strided_slice %21 {offsets = [0, 0], sizes = [2, 16], strides = [1, 1]} : vector<2x64xf32> to vector<2x16xf32>
    %cst_15 = arith.constant 5.000000e-01 : f32
    %23 = vector.broadcast %cst_15 : f32 to vector<2x16xf32>
    %24 = arith.mulf %23, %22 : vector<2x16xf32>
    %25 = math.tanh %24 : vector<2x16xf32>
    %cst_16 = arith.constant 1.000000e+00 : f32
    %26 = vector.broadcast %cst_16 : f32 to vector<2x16xf32>
    %27 = arith.addf %25, %26 : vector<2x16xf32>
    %cst_17 = arith.constant 5.000000e-01 : f32
    %28 = vector.broadcast %cst_17 : f32 to vector<2x16xf32>
    %29 = arith.mulf %28, %27 : vector<2x16xf32>
    %30 = vector.extract_strided_slice %21 {offsets = [0, 16], sizes = [2, 16], strides = [1, 1]} : vector<2x64xf32> to vector<2x16xf32>
    %cst_18 = arith.constant 5.000000e-01 : f32
    %31 = vector.broadcast %cst_18 : f32 to vector<2x16xf32>
    %32 = arith.mulf %31, %30 : vector<2x16xf32>
    %33 = math.tanh %32 : vector<2x16xf32>
    %cst_19 = arith.constant 1.000000e+00 : f32
    %34 = vector.broadcast %cst_19 : f32 to vector<2x16xf32>
    %35 = arith.addf %33, %34 : vector<2x16xf32>
    %cst_20 = arith.constant 5.000000e-01 : f32
    %36 = vector.broadcast %cst_20 : f32 to vector<2x16xf32>
    %37 = arith.mulf %36, %35 : vector<2x16xf32>
    %38 = vector.extract_strided_slice %21 {offsets = [0, 32], sizes = [2, 16], strides = [1, 1]} : vector<2x64xf32> to vector<2x16xf32>
    %39 = math.tanh %38 : vector<2x16xf32>
    %40 = vector.extract_strided_slice %21 {offsets = [0, 48], sizes = [2, 16], strides = [1, 1]} : vector<2x64xf32> to vector<2x16xf32>
    %cst_21 = arith.constant 5.000000e-01 : f32
    %41 = vector.broadcast %cst_21 : f32 to vector<2x16xf32>
    %42 = arith.mulf %41, %40 : vector<2x16xf32>
    %43 = math.tanh %42 : vector<2x16xf32>
    %cst_22 = arith.constant 1.000000e+00 : f32
    %44 = vector.broadcast %cst_22 : f32 to vector<2x16xf32>
    %45 = arith.addf %43, %44 : vector<2x16xf32>
    %cst_23 = arith.constant 5.000000e-01 : f32
    %46 = vector.broadcast %cst_23 : f32 to vector<2x16xf32>
    %47 = arith.mulf %46, %45 : vector<2x16xf32>
    %48 = arith.mulf %37, %18 : vector<2x16xf32>
    %49 = arith.mulf %29, %39 : vector<2x16xf32>
    %50 = arith.addf %48, %49 : vector<2x16xf32>
    %51 = math.tanh %50 : vector<2x16xf32>
    %52 = arith.mulf %47, %51 : vector<2x16xf32>
    %c0_24 = arith.constant 0 : index
    %c0_25 = arith.constant 0 : index
    %53 = vector.load %arg14[%c0_24, %c0_25] : memref<16x16xf32, #tpu.memory_space<vmem>>, vector<2x16xf32>
    tpu.vector_store %arg14[%c0_24, %c0_25], %52 {strides = array<i32>} : memref<16x16xf32, #tpu.memory_space<vmem>>, vector<2x16xf32>,
    %54 = vector.extract_strided_slice %13 {offsets = [2, 0], sizes = [2, 64], strides = [1, 1]} : vector<16x64xf32> to vector<2x64xf32>
    %cst_26 = arith.constant dense<0.000000e+00> : vector<2x64xf32>
    %55 = tpu.matmul %52, %15, %cst_26 {dimension_numbers = #tpu.dot_dimension_numbers<[1], [0], [0], [1], [0, 0, 1, 1], [], []>} : vector<2x16xf32>, vector<16x64xf32>, vector<2x64xf32> -> vector<2x64xf32>
    %56 = arith.addf %54, %55 : vector<2x64xf32>
    %57 = vector.extract_strided_slice %56 {offsets = [0, 0], sizes = [2, 16], strides = [1, 1]} : vector<2x64xf32> to vector<2x16xf32>
    %cst_27 = arith.constant 5.000000e-01 : f32
    %58 = vector.broadcast %cst_27 : f32 to vector<2x16xf32>
    %59 = arith.mulf %58, %57 : vector<2x16xf32>
    %60 = math.tanh %59 : vector<2x16xf32>
    %cst_28 = arith.constant 1.000000e+00 : f32
    %61 = vector.broadcast %cst_28 : f32 to vector<2x16xf32>
    %62 = arith.addf %60, %61 : vector<2x16xf32>
    %cst_29 = arith.constant 5.000000e-01 : f32
    %63 = vector.broadcast %cst_29 : f32 to vector<2x16xf32>
    %64 = arith.mulf %63, %62 : vector<2x16xf32>
    %65 = vector.extract_strided_slice %56 {offsets = [0, 16], sizes = [2, 16], strides = [1, 1]} : vector<2x64xf32> to vector<2x16xf32>
    %cst_30 = arith.constant 5.000000e-01 : f32
    %66 = vector.broadcast %cst_30 : f32 to vector<2x16xf32>
    %67 = arith.mulf %66, %65 : vector<2x16xf32>
    %68 = math.tanh %67 : vector<2x16xf32>
    %cst_31 = arith.constant 1.000000e+00 : f32
    %69 = vector.broadcast %cst_31 : f32 to vector<2x16xf32>
    %70 = arith.addf %68, %69 : vector<2x16xf32>
    %cst_32 = arith.constant 5.000000e-01 : f32
    %71 = vector.broadcast %cst_32 : f32 to vector<2x16xf32>
    %72 = arith.mulf %71, %70 : vector<2x16xf32>
    %73 = vector.extract_strided_slice %56 {offsets = [0, 32], sizes = [2, 16], strides = [1, 1]} : vector<2x64xf32> to vector<2x16xf32>
    %74 = math.tanh %73 : vector<2x16xf32>
    %75 = vector.extract_strided_slice %56 {offsets = [0, 48], sizes = [2, 16], strides = [1, 1]} : vector<2x64xf32> to vector<2x16xf32>
    %cst_33 = arith.constant 5.000000e-01 : f32
    %76 = vector.broadcast %cst_33 : f32 to vector<2x16xf32>
    %77 = arith.mulf %76, %75 : vector<2x16xf32>
    %78 = math.tanh %77 : vector<2x16xf32>
    %cst_34 = arith.constant 1.000000e+00 : f32
    %79 = vector.broadcast %cst_34 : f32 to vector<2x16xf32>
    %80 = arith.addf %78, %79 : vector<2x16xf32>
    %cst_35 = arith.constant 5.000000e-01 : f32
    %81 = vector.broadcast %cst_35 : f32 to vector<2x16xf32>
    %82 = arith.mulf %81, %80 : vector<2x16xf32>
    %83 = arith.mulf %72, %50 : vector<2x16xf32>
    %84 = arith.mulf %64, %74 : vector<2x16xf32>
    %85 = arith.addf %83, %84 : vector<2x16xf32>
    %86 = math.tanh %85 : vector<2x16xf32>
    %87 = arith.mulf %82, %86 : vector<2x16xf32>
    %c2 = arith.constant 2 : index
    %c0_36 = arith.constant 0 : index
    %88 = vector.load %arg14[%c2, %c0_36] : memref<16x16xf32, #tpu.memory_space<vmem>>, vector<2x16xf32>
    tpu.vector_store %arg14[%c2, %c0_36], %87 {strides = array<i32>} : memref<16x16xf32, #tpu.memory_space<vmem>>, vector<2x16xf32>,
    %89 = vector.extract_strided_slice %13 {offsets = [4, 0], sizes = [2, 64], strides = [1, 1]} : vector<16x64xf32> to vector<2x64xf32>
    %cst_37 = arith.constant dense<0.000000e+00> : vector<2x64xf32>
    %90 = tpu.matmul %87, %15, %cst_37 {dimension_numbers = #tpu.dot_dimension_numbers<[1], [0], [0], [1], [0, 0, 1, 1], [], []>} : vector<2x16xf32>, vector<16x64xf32>, vector<2x64xf32> -> vector<2x64xf32>
    %91 = arith.addf %89, %90 : vector<2x64xf32>
    %92 = vector.extract_strided_slice %91 {offsets = [0, 0], sizes = [2, 16], strides = [1, 1]} : vector<2x64xf32> to vector<2x16xf32>
    %cst_38 = arith.constant 5.000000e-01 : f32
    %93 = vector.broadcast %cst_38 : f32 to vector<2x16xf32>
    %94 = arith.mulf %93, %92 : vector<2x16xf32>
    %95 = math.tanh %94 : vector<2x16xf32>
    %cst_39 = arith.constant 1.000000e+00 : f32
    %96 = vector.broadcast %cst_39 : f32 to vector<2x16xf32>
    %97 = arith.addf %95, %96 : vector<2x16xf32>
    %cst_40 = arith.constant 5.000000e-01 : f32
    %98 = vector.broadcast %cst_40 : f32 to vector<2x16xf32>
    %99 = arith.mulf %98, %97 : vector<2x16xf32>
    %100 = vector.extract_strided_slice %91 {offsets = [0, 16], sizes = [2, 16], strides = [1, 1]} : vector<2x64xf32> to vector<2x16xf32>
    %cst_41 = arith.constant 5.000000e-01 : f32
    %101 = vector.broadcast %cst_41 : f32 to vector<2x16xf32>
    %102 = arith.mulf %101, %100 : vector<2x16xf32>
    %103 = math.tanh %102 : vector<2x16xf32>
    %cst_42 = arith.constant 1.000000e+00 : f32
    %104 = vector.broadcast %cst_42 : f32 to vector<2x16xf32>
    %105 = arith.addf %103, %104 : vector<2x16xf32>
    %cst_43 = arith.constant 5.000000e-01 : f32
    %106 = vector.broadcast %cst_43 : f32 to vector<2x16xf32>
    %107 = arith.mulf %106, %105 : vector<2x16xf32>
    %108 = vector.extract_strided_slice %91 {offsets = [0, 32], sizes = [2, 16], strides = [1, 1]} : vector<2x64xf32> to vector<2x16xf32>
    %109 = math.tanh %108 : vector<2x16xf32>
    %110 = vector.extract_strided_slice %91 {offsets = [0, 48], sizes = [2, 16], strides = [1, 1]} : vector<2x64xf32> to vector<2x16xf32>
    %cst_44 = arith.constant 5.000000e-01 : f32
    %111 = vector.broadcast %cst_44 : f32 to vector<2x16xf32>
    %112 = arith.mulf %111, %110 : vector<2x16xf32>
    %113 = math.tanh %112 : vector<2x16xf32>
    %cst_45 = arith.constant 1.000000e+00 : f32
    %114 = vector.broadcast %cst_45 : f32 to vector<2x16xf32>
    %115 = arith.addf %113, %114 : vector<2x16xf32>
    %cst_46 = arith.constant 5.000000e-01 : f32
    %116 = vector.broadcast %cst_46 : f32 to vector<2x16xf32>
    %117 = arith.mulf %116, %115 : vector<2x16xf32>
    %118 = arith.mulf %107, %85 : vector<2x16xf32>
    %119 = arith.mulf %99, %109 : vector<2x16xf32>
    %120 = arith.addf %118, %119 : vector<2x16xf32>
    %121 = math.tanh %120 : vector<2x16xf32>
    %122 = arith.mulf %117, %121 : vector<2x16xf32>
    %c4 = arith.constant 4 : index
    %c0_47 = arith.constant 0 : index
    %123 = vector.load %arg14[%c4, %c0_47] : memref<16x16xf32, #tpu.memory_space<vmem>>, vector<2x16xf32>
    tpu.vector_store %arg14[%c4, %c0_47], %122 {strides = array<i32>} : memref<16x16xf32, #tpu.memory_space<vmem>>, vector<2x16xf32>,
    %124 = vector.extract_strided_slice %13 {offsets = [6, 0], sizes = [2, 64], strides = [1, 1]} : vector<16x64xf32> to vector<2x64xf32>
    %cst_48 = arith.constant dense<0.000000e+00> : vector<2x64xf32>
    %125 = tpu.matmul %122, %15, %cst_48 {dimension_numbers = #tpu.dot_dimension_numbers<[1], [0], [0], [1], [0, 0, 1, 1], [], []>} : vector<2x16xf32>, vector<16x64xf32>, vector<2x64xf32> -> vector<2x64xf32>
    %126 = arith.addf %124, %125 : vector<2x64xf32>
    %127 = vector.extract_strided_slice %126 {offsets = [0, 0], sizes = [2, 16], strides = [1, 1]} : vector<2x64xf32> to vector<2x16xf32>
    %cst_49 = arith.constant 5.000000e-01 : f32
    %128 = vector.broadcast %cst_49 : f32 to vector<2x16xf32>
    %129 = arith.mulf %128, %127 : vector<2x16xf32>
    %130 = math.tanh %129 : vector<2x16xf32>
    %cst_50 = arith.constant 1.000000e+00 : f32
    %131 = vector.broadcast %cst_50 : f32 to vector<2x16xf32>
    %132 = arith.addf %130, %131 : vector<2x16xf32>
    %cst_51 = arith.constant 5.000000e-01 : f32
    %133 = vector.broadcast %cst_51 : f32 to vector<2x16xf32>
    %134 = arith.mulf %133, %132 : vector<2x16xf32>
    %135 = vector.extract_strided_slice %126 {offsets = [0, 16], sizes = [2, 16], strides = [1, 1]} : vector<2x64xf32> to vector<2x16xf32>
    %cst_52 = arith.constant 5.000000e-01 : f32
    %136 = vector.broadcast %cst_52 : f32 to vector<2x16xf32>
    %137 = arith.mulf %136, %135 : vector<2x16xf32>
    %138 = math.tanh %137 : vector<2x16xf32>
    %cst_53 = arith.constant 1.000000e+00 : f32
    %139 = vector.broadcast %cst_53 : f32 to vector<2x16xf32>
    %140 = arith.addf %138, %139 : vector<2x16xf32>
    %cst_54 = arith.constant 5.000000e-01 : f32
    %141 = vector.broadcast %cst_54 : f32 to vector<2x16xf32>
    %142 = arith.mulf %141, %140 : vector<2x16xf32>
    %143 = vector.extract_strided_slice %126 {offsets = [0, 32], sizes = [2, 16], strides = [1, 1]} : vector<2x64xf32> to vector<2x16xf32>
    %144 = math.tanh %143 : vector<2x16xf32>
    %145 = vector.extract_strided_slice %126 {offsets = [0, 48], sizes = [2, 16], strides = [1, 1]} : vector<2x64xf32> to vector<2x16xf32>
    %cst_55 = arith.constant 5.000000e-01 : f32
    %146 = vector.broadcast %cst_55 : f32 to vector<2x16xf32>
    %147 = arith.mulf %146, %145 : vector<2x16xf32>
    %148 = math.tanh %147 : vector<2x16xf32>
    %cst_56 = arith.constant 1.000000e+00 : f32
    %149 = vector.broadcast %cst_56 : f32 to vector<2x16xf32>
    %150 = arith.addf %148, %149 : vector<2x16xf32>
    %cst_57 = arith.constant 5.000000e-01 : f32
    %151 = vector.broadcast %cst_57 : f32 to vector<2x16xf32>
    %152 = arith.mulf %151, %150 : vector<2x16xf32>
    %153 = arith.mulf %142, %120 : vector<2x16xf32>
    %154 = arith.mulf %134, %144 : vector<2x16xf32>
    %155 = arith.addf %153, %154 : vector<2x16xf32>
    %156 = math.tanh %155 : vector<2x16xf32>
    %157 = arith.mulf %152, %156 : vector<2x16xf32>
    %c6 = arith.constant 6 : index
    %c0_58 = arith.constant 0 : index
    %158 = vector.load %arg14[%c6, %c0_58] : memref<16x16xf32, #tpu.memory_space<vmem>>, vector<2x16xf32>
    tpu.vector_store %arg14[%c6, %c0_58], %157 {strides = array<i32>} : memref<16x16xf32, #tpu.memory_space<vmem>>, vector<2x16xf32>,
    %159 = vector.extract_strided_slice %13 {offsets = [8, 0], sizes = [2, 64], strides = [1, 1]} : vector<16x64xf32> to vector<2x64xf32>
    %cst_59 = arith.constant dense<0.000000e+00> : vector<2x64xf32>
    %160 = tpu.matmul %157, %15, %cst_59 {dimension_numbers = #tpu.dot_dimension_numbers<[1], [0], [0], [1], [0, 0, 1, 1], [], []>} : vector<2x16xf32>, vector<16x64xf32>, vector<2x64xf32> -> vector<2x64xf32>
    %161 = arith.addf %159, %160 : vector<2x64xf32>
    %162 = vector.extract_strided_slice %161 {offsets = [0, 0], sizes = [2, 16], strides = [1, 1]} : vector<2x64xf32> to vector<2x16xf32>
    %cst_60 = arith.constant 5.000000e-01 : f32
    %163 = vector.broadcast %cst_60 : f32 to vector<2x16xf32>
    %164 = arith.mulf %163, %162 : vector<2x16xf32>
    %165 = math.tanh %164 : vector<2x16xf32>
    %cst_61 = arith.constant 1.000000e+00 : f32
    %166 = vector.broadcast %cst_61 : f32 to vector<2x16xf32>
    %167 = arith.addf %165, %166 : vector<2x16xf32>
    %cst_62 = arith.constant 5.000000e-01 : f32
    %168 = vector.broadcast %cst_62 : f32 to vector<2x16xf32>
    %169 = arith.mulf %168, %167 : vector<2x16xf32>
    %170 = vector.extract_strided_slice %161 {offsets = [0, 16], sizes = [2, 16], strides = [1, 1]} : vector<2x64xf32> to vector<2x16xf32>
    %cst_63 = arith.constant 5.000000e-01 : f32
    %171 = vector.broadcast %cst_63 : f32 to vector<2x16xf32>
    %172 = arith.mulf %171, %170 : vector<2x16xf32>
    %173 = math.tanh %172 : vector<2x16xf32>
    %cst_64 = arith.constant 1.000000e+00 : f32
    %174 = vector.broadcast %cst_64 : f32 to vector<2x16xf32>
    %175 = arith.addf %173, %174 : vector<2x16xf32>
    %cst_65 = arith.constant 5.000000e-01 : f32
    %176 = vector.broadcast %cst_65 : f32 to vector<2x16xf32>
    %177 = arith.mulf %176, %175 : vector<2x16xf32>
    %178 = vector.extract_strided_slice %161 {offsets = [0, 32], sizes = [2, 16], strides = [1, 1]} : vector<2x64xf32> to vector<2x16xf32>
    %179 = math.tanh %178 : vector<2x16xf32>
    %180 = vector.extract_strided_slice %161 {offsets = [0, 48], sizes = [2, 16], strides = [1, 1]} : vector<2x64xf32> to vector<2x16xf32>
    %cst_66 = arith.constant 5.000000e-01 : f32
    %181 = vector.broadcast %cst_66 : f32 to vector<2x16xf32>
    %182 = arith.mulf %181, %180 : vector<2x16xf32>
    %183 = math.tanh %182 : vector<2x16xf32>
    %cst_67 = arith.constant 1.000000e+00 : f32
    %184 = vector.broadcast %cst_67 : f32 to vector<2x16xf32>
    %185 = arith.addf %183, %184 : vector<2x16xf32>
    %cst_68 = arith.constant 5.000000e-01 : f32
    %186 = vector.broadcast %cst_68 : f32 to vector<2x16xf32>
    %187 = arith.mulf %186, %185 : vector<2x16xf32>
    %188 = arith.mulf %177, %155 : vector<2x16xf32>
    %189 = arith.mulf %169, %179 : vector<2x16xf32>
    %190 = arith.addf %188, %189 : vector<2x16xf32>
    %191 = math.tanh %190 : vector<2x16xf32>
    %192 = arith.mulf %187, %191 : vector<2x16xf32>
    %c8 = arith.constant 8 : index
    %c0_69 = arith.constant 0 : index
    %193 = vector.load %arg14[%c8, %c0_69] : memref<16x16xf32, #tpu.memory_space<vmem>>, vector<2x16xf32>
    tpu.vector_store %arg14[%c8, %c0_69], %192 {strides = array<i32>} : memref<16x16xf32, #tpu.memory_space<vmem>>, vector<2x16xf32>,
    %194 = vector.extract_strided_slice %13 {offsets = [10, 0], sizes = [2, 64], strides = [1, 1]} : vector<16x64xf32> to vector<2x64xf32>
    %cst_70 = arith.constant dense<0.000000e+00> : vector<2x64xf32>
    %195 = tpu.matmul %192, %15, %cst_70 {dimension_numbers = #tpu.dot_dimension_numbers<[1], [0], [0], [1], [0, 0, 1, 1], [], []>} : vector<2x16xf32>, vector<16x64xf32>, vector<2x64xf32> -> vector<2x64xf32>
    %196 = arith.addf %194, %195 : vector<2x64xf32>
    %197 = vector.extract_strided_slice %196 {offsets = [0, 0], sizes = [2, 16], strides = [1, 1]} : vector<2x64xf32> to vector<2x16xf32>
    %cst_71 = arith.constant 5.000000e-01 : f32
    %198 = vector.broadcast %cst_71 : f32 to vector<2x16xf32>
    %199 = arith.mulf %198, %197 : vector<2x16xf32>
    %200 = math.tanh %199 : vector<2x16xf32>
    %cst_72 = arith.constant 1.000000e+00 : f32
    %201 = vector.broadcast %cst_72 : f32 to vector<2x16xf32>
    %202 = arith.addf %200, %201 : vector<2x16xf32>
    %cst_73 = arith.constant 5.000000e-01 : f32
    %203 = vector.broadcast %cst_73 : f32 to vector<2x16xf32>
    %204 = arith.mulf %203, %202 : vector<2x16xf32>
    %205 = vector.extract_strided_slice %196 {offsets = [0, 16], sizes = [2, 16], strides = [1, 1]} : vector<2x64xf32> to vector<2x16xf32>
    %cst_74 = arith.constant 5.000000e-01 : f32
    %206 = vector.broadcast %cst_74 : f32 to vector<2x16xf32>
    %207 = arith.mulf %206, %205 : vector<2x16xf32>
    %208 = math.tanh %207 : vector<2x16xf32>
    %cst_75 = arith.constant 1.000000e+00 : f32
    %209 = vector.broadcast %cst_75 : f32 to vector<2x16xf32>
    %210 = arith.addf %208, %209 : vector<2x16xf32>
    %cst_76 = arith.constant 5.000000e-01 : f32
    %211 = vector.broadcast %cst_76 : f32 to vector<2x16xf32>
    %212 = arith.mulf %211, %210 : vector<2x16xf32>
    %213 = vector.extract_strided_slice %196 {offsets = [0, 32], sizes = [2, 16], strides = [1, 1]} : vector<2x64xf32> to vector<2x16xf32>
    %214 = math.tanh %213 : vector<2x16xf32>
    %215 = vector.extract_strided_slice %196 {offsets = [0, 48], sizes = [2, 16], strides = [1, 1]} : vector<2x64xf32> to vector<2x16xf32>
    %cst_77 = arith.constant 5.000000e-01 : f32
    %216 = vector.broadcast %cst_77 : f32 to vector<2x16xf32>
    %217 = arith.mulf %216, %215 : vector<2x16xf32>
    %218 = math.tanh %217 : vector<2x16xf32>
    %cst_78 = arith.constant 1.000000e+00 : f32
    %219 = vector.broadcast %cst_78 : f32 to vector<2x16xf32>
    %220 = arith.addf %218, %219 : vector<2x16xf32>
    %cst_79 = arith.constant 5.000000e-01 : f32
    %221 = vector.broadcast %cst_79 : f32 to vector<2x16xf32>
    %222 = arith.mulf %221, %220 : vector<2x16xf32>
    %223 = arith.mulf %212, %190 : vector<2x16xf32>
    %224 = arith.mulf %204, %214 : vector<2x16xf32>
    %225 = arith.addf %223, %224 : vector<2x16xf32>
    %226 = math.tanh %225 : vector<2x16xf32>
    %227 = arith.mulf %222, %226 : vector<2x16xf32>
    %c10 = arith.constant 10 : index
    %c0_80 = arith.constant 0 : index
    %228 = vector.load %arg14[%c10, %c0_80] : memref<16x16xf32, #tpu.memory_space<vmem>>, vector<2x16xf32>
    tpu.vector_store %arg14[%c10, %c0_80], %227 {strides = array<i32>} : memref<16x16xf32, #tpu.memory_space<vmem>>, vector<2x16xf32>,
    %229 = vector.extract_strided_slice %13 {offsets = [12, 0], sizes = [2, 64], strides = [1, 1]} : vector<16x64xf32> to vector<2x64xf32>
    %cst_81 = arith.constant dense<0.000000e+00> : vector<2x64xf32>
    %230 = tpu.matmul %227, %15, %cst_81 {dimension_numbers = #tpu.dot_dimension_numbers<[1], [0], [0], [1], [0, 0, 1, 1], [], []>} : vector<2x16xf32>, vector<16x64xf32>, vector<2x64xf32> -> vector<2x64xf32>
    %231 = arith.addf %229, %230 : vector<2x64xf32>
    %232 = vector.extract_strided_slice %231 {offsets = [0, 0], sizes = [2, 16], strides = [1, 1]} : vector<2x64xf32> to vector<2x16xf32>
    %cst_82 = arith.constant 5.000000e-01 : f32
    %233 = vector.broadcast %cst_82 : f32 to vector<2x16xf32>
    %234 = arith.mulf %233, %232 : vector<2x16xf32>
    %235 = math.tanh %234 : vector<2x16xf32>
    %cst_83 = arith.constant 1.000000e+00 : f32
    %236 = vector.broadcast %cst_83 : f32 to vector<2x16xf32>
    %237 = arith.addf %235, %236 : vector<2x16xf32>
    %cst_84 = arith.constant 5.000000e-01 : f32
    %238 = vector.broadcast %cst_84 : f32 to vector<2x16xf32>
    %239 = arith.mulf %238, %237 : vector<2x16xf32>
    %240 = vector.extract_strided_slice %231 {offsets = [0, 16], sizes = [2, 16], strides = [1, 1]} : vector<2x64xf32> to vector<2x16xf32>
    %cst_85 = arith.constant 5.000000e-01 : f32
    %241 = vector.broadcast %cst_85 : f32 to vector<2x16xf32>
    %242 = arith.mulf %241, %240 : vector<2x16xf32>
    %243 = math.tanh %242 : vector<2x16xf32>
    %cst_86 = arith.constant 1.000000e+00 : f32
    %244 = vector.broadcast %cst_86 : f32 to vector<2x16xf32>
    %245 = arith.addf %243, %244 : vector<2x16xf32>
    %cst_87 = arith.constant 5.000000e-01 : f32
    %246 = vector.broadcast %cst_87 : f32 to vector<2x16xf32>
    %247 = arith.mulf %246, %245 : vector<2x16xf32>
    %248 = vector.extract_strided_slice %231 {offsets = [0, 32], sizes = [2, 16], strides = [1, 1]} : vector<2x64xf32> to vector<2x16xf32>
    %249 = math.tanh %248 : vector<2x16xf32>
    %250 = vector.extract_strided_slice %231 {offsets = [0, 48], sizes = [2, 16], strides = [1, 1]} : vector<2x64xf32> to vector<2x16xf32>
    %cst_88 = arith.constant 5.000000e-01 : f32
    %251 = vector.broadcast %cst_88 : f32 to vector<2x16xf32>
    %252 = arith.mulf %251, %250 : vector<2x16xf32>
    %253 = math.tanh %252 : vector<2x16xf32>
    %cst_89 = arith.constant 1.000000e+00 : f32
    %254 = vector.broadcast %cst_89 : f32 to vector<2x16xf32>
    %255 = arith.addf %253, %254 : vector<2x16xf32>
    %cst_90 = arith.constant 5.000000e-01 : f32
    %256 = vector.broadcast %cst_90 : f32 to vector<2x16xf32>
    %257 = arith.mulf %256, %255 : vector<2x16xf32>
    %258 = arith.mulf %247, %225 : vector<2x16xf32>
    %259 = arith.mulf %239, %249 : vector<2x16xf32>
    %260 = arith.addf %258, %259 : vector<2x16xf32>
    %261 = math.tanh %260 : vector<2x16xf32>
    %262 = arith.mulf %257, %261 : vector<2x16xf32>
    %c12 = arith.constant 12 : index
    %c0_91 = arith.constant 0 : index
    %263 = vector.load %arg14[%c12, %c0_91] : memref<16x16xf32, #tpu.memory_space<vmem>>, vector<2x16xf32>
    tpu.vector_store %arg14[%c12, %c0_91], %262 {strides = array<i32>} : memref<16x16xf32, #tpu.memory_space<vmem>>, vector<2x16xf32>,
    %264 = vector.extract_strided_slice %13 {offsets = [14, 0], sizes = [2, 64], strides = [1, 1]} : vector<16x64xf32> to vector<2x64xf32>
    %cst_92 = arith.constant dense<0.000000e+00> : vector<2x64xf32>
    %265 = tpu.matmul %262, %15, %cst_92 {dimension_numbers = #tpu.dot_dimension_numbers<[1], [0], [0], [1], [0, 0, 1, 1], [], []>} : vector<2x16xf32>, vector<16x64xf32>, vector<2x64xf32> -> vector<2x64xf32>
    %266 = arith.addf %264, %265 : vector<2x64xf32>
    %267 = vector.extract_strided_slice %266 {offsets = [0, 0], sizes = [2, 16], strides = [1, 1]} : vector<2x64xf32> to vector<2x16xf32>
    %cst_93 = arith.constant 5.000000e-01 : f32
    %268 = vector.broadcast %cst_93 : f32 to vector<2x16xf32>
    %269 = arith.mulf %268, %267 : vector<2x16xf32>
    %270 = math.tanh %269 : vector<2x16xf32>
    %cst_94 = arith.constant 1.000000e+00 : f32
    %271 = vector.broadcast %cst_94 : f32 to vector<2x16xf32>
    %272 = arith.addf %270, %271 : vector<2x16xf32>
    %cst_95 = arith.constant 5.000000e-01 : f32
    %273 = vector.broadcast %cst_95 : f32 to vector<2x16xf32>
    %274 = arith.mulf %273, %272 : vector<2x16xf32>
    %275 = vector.extract_strided_slice %266 {offsets = [0, 16], sizes = [2, 16], strides = [1, 1]} : vector<2x64xf32> to vector<2x16xf32>
    %cst_96 = arith.constant 5.000000e-01 : f32
    %276 = vector.broadcast %cst_96 : f32 to vector<2x16xf32>
    %277 = arith.mulf %276, %275 : vector<2x16xf32>
    %278 = math.tanh %277 : vector<2x16xf32>
    %cst_97 = arith.constant 1.000000e+00 : f32
    %279 = vector.broadcast %cst_97 : f32 to vector<2x16xf32>
    %280 = arith.addf %278, %279 : vector<2x16xf32>
    %cst_98 = arith.constant 5.000000e-01 : f32
    %281 = vector.broadcast %cst_98 : f32 to vector<2x16xf32>
    %282 = arith.mulf %281, %280 : vector<2x16xf32>
    %283 = vector.extract_strided_slice %266 {offsets = [0, 32], sizes = [2, 16], strides = [1, 1]} : vector<2x64xf32> to vector<2x16xf32>
    %284 = math.tanh %283 : vector<2x16xf32>
    %285 = vector.extract_strided_slice %266 {offsets = [0, 48], sizes = [2, 16], strides = [1, 1]} : vector<2x64xf32> to vector<2x16xf32>
    %cst_99 = arith.constant 5.000000e-01 : f32
    %286 = vector.broadcast %cst_99 : f32 to vector<2x16xf32>
    %287 = arith.mulf %286, %285 : vector<2x16xf32>
    %288 = math.tanh %287 : vector<2x16xf32>
    %cst_100 = arith.constant 1.000000e+00 : f32
    %289 = vector.broadcast %cst_100 : f32 to vector<2x16xf32>
    %290 = arith.addf %288, %289 : vector<2x16xf32>
    %cst_101 = arith.constant 5.000000e-01 : f32
    %291 = vector.broadcast %cst_101 : f32 to vector<2x16xf32>
    %292 = arith.mulf %291, %290 : vector<2x16xf32>
    %293 = arith.mulf %282, %260 : vector<2x16xf32>
    %294 = arith.mulf %274, %284 : vector<2x16xf32>
    %295 = arith.addf %293, %294 : vector<2x16xf32>
    %296 = math.tanh %295 : vector<2x16xf32>
    %297 = arith.mulf %292, %296 : vector<2x16xf32>
    %c14 = arith.constant 14 : index
    %c0_102 = arith.constant 0 : index
    %298 = vector.load %arg14[%c14, %c0_102] : memref<16x16xf32, #tpu.memory_space<vmem>>, vector<2x16xf32>
    tpu.vector_store %arg14[%c14, %c0_102], %297 {strides = array<i32>} : memref<16x16xf32, #tpu.memory_space<vmem>>, vector<2x16xf32>,
    %cst_103 = arith.constant 0.000000e+00 : f32
    %299 = vector.broadcast %cst_103 : f32 to vector<2x16xf32>
    %cst_104 = arith.constant 0.000000e+00 : f32
    %300 = vector.broadcast %cst_104 : f32 to vector<2x16xf32>
    %301 = vector.extract_strided_slice %14 {offsets = [14, 0], sizes = [2, 64], strides = [1, 1]} : vector<16x64xf32> to vector<2x64xf32>
    %cst_105 = arith.constant dense<0.000000e+00> : vector<2x64xf32>
    %302 = tpu.matmul %299, %16, %cst_105 {dimension_numbers = #tpu.dot_dimension_numbers<[1], [0], [0], [1], [0, 0, 1, 1], [], []>} : vector<2x16xf32>, vector<16x64xf32>, vector<2x64xf32> -> vector<2x64xf32>
    %303 = arith.addf %301, %302 : vector<2x64xf32>
    %304 = vector.extract_strided_slice %303 {offsets = [0, 0], sizes = [2, 16], strides = [1, 1]} : vector<2x64xf32> to vector<2x16xf32>
    %cst_106 = arith.constant 5.000000e-01 : f32
    %305 = vector.broadcast %cst_106 : f32 to vector<2x16xf32>
    %306 = arith.mulf %305, %304 : vector<2x16xf32>
    %307 = math.tanh %306 : vector<2x16xf32>
    %cst_107 = arith.constant 1.000000e+00 : f32
    %308 = vector.broadcast %cst_107 : f32 to vector<2x16xf32>
    %309 = arith.addf %307, %308 : vector<2x16xf32>
    %cst_108 = arith.constant 5.000000e-01 : f32
    %310 = vector.broadcast %cst_108 : f32 to vector<2x16xf32>
    %311 = arith.mulf %310, %309 : vector<2x16xf32>
    %312 = vector.extract_strided_slice %303 {offsets = [0, 16], sizes = [2, 16], strides = [1, 1]} : vector<2x64xf32> to vector<2x16xf32>
    %cst_109 = arith.constant 5.000000e-01 : f32
    %313 = vector.broadcast %cst_109 : f32 to vector<2x16xf32>
    %314 = arith.mulf %313, %312 : vector<2x16xf32>
    %315 = math.tanh %314 : vector<2x16xf32>
    %cst_110 = arith.constant 1.000000e+00 : f32
    %316 = vector.broadcast %cst_110 : f32 to vector<2x16xf32>
    %317 = arith.addf %315, %316 : vector<2x16xf32>
    %cst_111 = arith.constant 5.000000e-01 : f32
    %318 = vector.broadcast %cst_111 : f32 to vector<2x16xf32>
    %319 = arith.mulf %318, %317 : vector<2x16xf32>
    %320 = vector.extract_strided_slice %303 {offsets = [0, 32], sizes = [2, 16], strides = [1, 1]} : vector<2x64xf32> to vector<2x16xf32>
    %321 = math.tanh %320 : vector<2x16xf32>
    %322 = vector.extract_strided_slice %303 {offsets = [0, 48], sizes = [2, 16], strides = [1, 1]} : vector<2x64xf32> to vector<2x16xf32>
    %cst_112 = arith.constant 5.000000e-01 : f32
    %323 = vector.broadcast %cst_112 : f32 to vector<2x16xf32>
    %324 = arith.mulf %323, %322 : vector<2x16xf32>
    %325 = math.tanh %324 : vector<2x16xf32>
    %cst_113 = arith.constant 1.000000e+00 : f32
    %326 = vector.broadcast %cst_113 : f32 to vector<2x16xf32>
    %327 = arith.addf %325, %326 : vector<2x16xf32>
    %cst_114 = arith.constant 5.000000e-01 : f32
    %328 = vector.broadcast %cst_114 : f32 to vector<2x16xf32>
    %329 = arith.mulf %328, %327 : vector<2x16xf32>
    %330 = arith.mulf %319, %300 : vector<2x16xf32>
    %331 = arith.mulf %311, %321 : vector<2x16xf32>
    %332 = arith.addf %330, %331 : vector<2x16xf32>
    %333 = math.tanh %332 : vector<2x16xf32>
    %334 = arith.mulf %329, %333 : vector<2x16xf32>
    %c14_115 = arith.constant 14 : index
    %c0_116 = arith.constant 0 : index
    %335 = vector.load %arg15[%c14_115, %c0_116] : memref<16x16xf32, #tpu.memory_space<vmem>>, vector<2x16xf32>
    tpu.vector_store %arg15[%c14_115, %c0_116], %334 {strides = array<i32>} : memref<16x16xf32, #tpu.memory_space<vmem>>, vector<2x16xf32>,
    %336 = vector.extract_strided_slice %14 {offsets = [12, 0], sizes = [2, 64], strides = [1, 1]} : vector<16x64xf32> to vector<2x64xf32>
    %cst_117 = arith.constant dense<0.000000e+00> : vector<2x64xf32>
    %337 = tpu.matmul %334, %16, %cst_117 {dimension_numbers = #tpu.dot_dimension_numbers<[1], [0], [0], [1], [0, 0, 1, 1], [], []>} : vector<2x16xf32>, vector<16x64xf32>, vector<2x64xf32> -> vector<2x64xf32>
    %338 = arith.addf %336, %337 : vector<2x64xf32>
    %339 = vector.extract_strided_slice %338 {offsets = [0, 0], sizes = [2, 16], strides = [1, 1]} : vector<2x64xf32> to vector<2x16xf32>
    %cst_118 = arith.constant 5.000000e-01 : f32
    %340 = vector.broadcast %cst_118 : f32 to vector<2x16xf32>
    %341 = arith.mulf %340, %339 : vector<2x16xf32>
    %342 = math.tanh %341 : vector<2x16xf32>
    %cst_119 = arith.constant 1.000000e+00 : f32
    %343 = vector.broadcast %cst_119 : f32 to vector<2x16xf32>
    %344 = arith.addf %342, %343 : vector<2x16xf32>
    %cst_120 = arith.constant 5.000000e-01 : f32
    %345 = vector.broadcast %cst_120 : f32 to vector<2x16xf32>
    %346 = arith.mulf %345, %344 : vector<2x16xf32>
    %347 = vector.extract_strided_slice %338 {offsets = [0, 16], sizes = [2, 16], strides = [1, 1]} : vector<2x64xf32> to vector<2x16xf32>
    %cst_121 = arith.constant 5.000000e-01 : f32
    %348 = vector.broadcast %cst_121 : f32 to vector<2x16xf32>
    %349 = arith.mulf %348, %347 : vector<2x16xf32>
    %350 = math.tanh %349 : vector<2x16xf32>
    %cst_122 = arith.constant 1.000000e+00 : f32
    %351 = vector.broadcast %cst_122 : f32 to vector<2x16xf32>
    %352 = arith.addf %350, %351 : vector<2x16xf32>
    %cst_123 = arith.constant 5.000000e-01 : f32
    %353 = vector.broadcast %cst_123 : f32 to vector<2x16xf32>
    %354 = arith.mulf %353, %352 : vector<2x16xf32>
    %355 = vector.extract_strided_slice %338 {offsets = [0, 32], sizes = [2, 16], strides = [1, 1]} : vector<2x64xf32> to vector<2x16xf32>
    %356 = math.tanh %355 : vector<2x16xf32>
    %357 = vector.extract_strided_slice %338 {offsets = [0, 48], sizes = [2, 16], strides = [1, 1]} : vector<2x64xf32> to vector<2x16xf32>
    %cst_124 = arith.constant 5.000000e-01 : f32
    %358 = vector.broadcast %cst_124 : f32 to vector<2x16xf32>
    %359 = arith.mulf %358, %357 : vector<2x16xf32>
    %360 = math.tanh %359 : vector<2x16xf32>
    %cst_125 = arith.constant 1.000000e+00 : f32
    %361 = vector.broadcast %cst_125 : f32 to vector<2x16xf32>
    %362 = arith.addf %360, %361 : vector<2x16xf32>
    %cst_126 = arith.constant 5.000000e-01 : f32
    %363 = vector.broadcast %cst_126 : f32 to vector<2x16xf32>
    %364 = arith.mulf %363, %362 : vector<2x16xf32>
    %365 = arith.mulf %354, %332 : vector<2x16xf32>
    %366 = arith.mulf %346, %356 : vector<2x16xf32>
    %367 = arith.addf %365, %366 : vector<2x16xf32>
    %368 = math.tanh %367 : vector<2x16xf32>
    %369 = arith.mulf %364, %368 : vector<2x16xf32>
    %c12_127 = arith.constant 12 : index
    %c0_128 = arith.constant 0 : index
    %370 = vector.load %arg15[%c12_127, %c0_128] : memref<16x16xf32, #tpu.memory_space<vmem>>, vector<2x16xf32>
    tpu.vector_store %arg15[%c12_127, %c0_128], %369 {strides = array<i32>} : memref<16x16xf32, #tpu.memory_space<vmem>>, vector<2x16xf32>,
    %371 = vector.extract_strided_slice %14 {offsets = [10, 0], sizes = [2, 64], strides = [1, 1]} : vector<16x64xf32> to vector<2x64xf32>
    %cst_129 = arith.constant dense<0.000000e+00> : vector<2x64xf32>
    %372 = tpu.matmul %369, %16, %cst_129 {dimension_numbers = #tpu.dot_dimension_numbers<[1], [0], [0], [1], [0, 0, 1, 1], [], []>} : vector<2x16xf32>, vector<16x64xf32>, vector<2x64xf32> -> vector<2x64xf32>
    %373 = arith.addf %371, %372 : vector<2x64xf32>
    %374 = vector.extract_strided_slice %373 {offsets = [0, 0], sizes = [2, 16], strides = [1, 1]} : vector<2x64xf32> to vector<2x16xf32>
    %cst_130 = arith.constant 5.000000e-01 : f32
    %375 = vector.broadcast %cst_130 : f32 to vector<2x16xf32>
    %376 = arith.mulf %375, %374 : vector<2x16xf32>
    %377 = math.tanh %376 : vector<2x16xf32>
    %cst_131 = arith.constant 1.000000e+00 : f32
    %378 = vector.broadcast %cst_131 : f32 to vector<2x16xf32>
    %379 = arith.addf %377, %378 : vector<2x16xf32>
    %cst_132 = arith.constant 5.000000e-01 : f32
    %380 = vector.broadcast %cst_132 : f32 to vector<2x16xf32>
    %381 = arith.mulf %380, %379 : vector<2x16xf32>
    %382 = vector.extract_strided_slice %373 {offsets = [0, 16], sizes = [2, 16], strides = [1, 1]} : vector<2x64xf32> to vector<2x16xf32>
    %cst_133 = arith.constant 5.000000e-01 : f32
    %383 = vector.broadcast %cst_133 : f32 to vector<2x16xf32>
    %384 = arith.mulf %383, %382 : vector<2x16xf32>
    %385 = math.tanh %384 : vector<2x16xf32>
    %cst_134 = arith.constant 1.000000e+00 : f32
    %386 = vector.broadcast %cst_134 : f32 to vector<2x16xf32>
    %387 = arith.addf %385, %386 : vector<2x16xf32>
    %cst_135 = arith.constant 5.000000e-01 : f32
    %388 = vector.broadcast %cst_135 : f32 to vector<2x16xf32>
    %389 = arith.mulf %388, %387 : vector<2x16xf32>
    %390 = vector.extract_strided_slice %373 {offsets = [0, 32], sizes = [2, 16], strides = [1, 1]} : vector<2x64xf32> to vector<2x16xf32>
    %391 = math.tanh %390 : vector<2x16xf32>
    %392 = vector.extract_strided_slice %373 {offsets = [0, 48], sizes = [2, 16], strides = [1, 1]} : vector<2x64xf32> to vector<2x16xf32>
    %cst_136 = arith.constant 5.000000e-01 : f32
    %393 = vector.broadcast %cst_136 : f32 to vector<2x16xf32>
    %394 = arith.mulf %393, %392 : vector<2x16xf32>
    %395 = math.tanh %394 : vector<2x16xf32>
    %cst_137 = arith.constant 1.000000e+00 : f32
    %396 = vector.broadcast %cst_137 : f32 to vector<2x16xf32>
    %397 = arith.addf %395, %396 : vector<2x16xf32>
    %cst_138 = arith.constant 5.000000e-01 : f32
    %398 = vector.broadcast %cst_138 : f32 to vector<2x16xf32>
    %399 = arith.mulf %398, %397 : vector<2x16xf32>
    %400 = arith.mulf %389, %367 : vector<2x16xf32>
    %401 = arith.mulf %381, %391 : vector<2x16xf32>
    %402 = arith.addf %400, %401 : vector<2x16xf32>
    %403 = math.tanh %402 : vector<2x16xf32>
    %404 = arith.mulf %399, %403 : vector<2x16xf32>
    %c10_139 = arith.constant 10 : index
    %c0_140 = arith.constant 0 : index
    %405 = vector.load %arg15[%c10_139, %c0_140] : memref<16x16xf32, #tpu.memory_space<vmem>>, vector<2x16xf32>
    tpu.vector_store %arg15[%c10_139, %c0_140], %404 {strides = array<i32>} : memref<16x16xf32, #tpu.memory_space<vmem>>, vector<2x16xf32>,
    %406 = vector.extract_strided_slice %14 {offsets = [8, 0], sizes = [2, 64], strides = [1, 1]} : vector<16x64xf32> to vector<2x64xf32>
    %cst_141 = arith.constant dense<0.000000e+00> : vector<2x64xf32>
    %407 = tpu.matmul %404, %16, %cst_141 {dimension_numbers = #tpu.dot_dimension_numbers<[1], [0], [0], [1], [0, 0, 1, 1], [], []>} : vector<2x16xf32>, vector<16x64xf32>, vector<2x64xf32> -> vector<2x64xf32>
    %408 = arith.addf %406, %407 : vector<2x64xf32>
    %409 = vector.extract_strided_slice %408 {offsets = [0, 0], sizes = [2, 16], strides = [1, 1]} : vector<2x64xf32> to vector<2x16xf32>
    %cst_142 = arith.constant 5.000000e-01 : f32
    %410 = vector.broadcast %cst_142 : f32 to vector<2x16xf32>
    %411 = arith.mulf %410, %409 : vector<2x16xf32>
    %412 = math.tanh %411 : vector<2x16xf32>
    %cst_143 = arith.constant 1.000000e+00 : f32
    %413 = vector.broadcast %cst_143 : f32 to vector<2x16xf32>
    %414 = arith.addf %412, %413 : vector<2x16xf32>
    %cst_144 = arith.constant 5.000000e-01 : f32
    %415 = vector.broadcast %cst_144 : f32 to vector<2x16xf32>
    %416 = arith.mulf %415, %414 : vector<2x16xf32>
    %417 = vector.extract_strided_slice %408 {offsets = [0, 16], sizes = [2, 16], strides = [1, 1]} : vector<2x64xf32> to vector<2x16xf32>
    %cst_145 = arith.constant 5.000000e-01 : f32
    %418 = vector.broadcast %cst_145 : f32 to vector<2x16xf32>
    %419 = arith.mulf %418, %417 : vector<2x16xf32>
    %420 = math.tanh %419 : vector<2x16xf32>
    %cst_146 = arith.constant 1.000000e+00 : f32
    %421 = vector.broadcast %cst_146 : f32 to vector<2x16xf32>
    %422 = arith.addf %420, %421 : vector<2x16xf32>
    %cst_147 = arith.constant 5.000000e-01 : f32
    %423 = vector.broadcast %cst_147 : f32 to vector<2x16xf32>
    %424 = arith.mulf %423, %422 : vector<2x16xf32>
    %425 = vector.extract_strided_slice %408 {offsets = [0, 32], sizes = [2, 16], strides = [1, 1]} : vector<2x64xf32> to vector<2x16xf32>
    %426 = math.tanh %425 : vector<2x16xf32>
    %427 = vector.extract_strided_slice %408 {offsets = [0, 48], sizes = [2, 16], strides = [1, 1]} : vector<2x64xf32> to vector<2x16xf32>
    %cst_148 = arith.constant 5.000000e-01 : f32
    %428 = vector.broadcast %cst_148 : f32 to vector<2x16xf32>
    %429 = arith.mulf %428, %427 : vector<2x16xf32>
    %430 = math.tanh %429 : vector<2x16xf32>
    %cst_149 = arith.constant 1.000000e+00 : f32
    %431 = vector.broadcast %cst_149 : f32 to vector<2x16xf32>
    %432 = arith.addf %430, %431 : vector<2x16xf32>
    %cst_150 = arith.constant 5.000000e-01 : f32
    %433 = vector.broadcast %cst_150 : f32 to vector<2x16xf32>
    %434 = arith.mulf %433, %432 : vector<2x16xf32>
    %435 = arith.mulf %424, %402 : vector<2x16xf32>
    %436 = arith.mulf %416, %426 : vector<2x16xf32>
    %437 = arith.addf %435, %436 : vector<2x16xf32>
    %438 = math.tanh %437 : vector<2x16xf32>
    %439 = arith.mulf %434, %438 : vector<2x16xf32>
    %c8_151 = arith.constant 8 : index
    %c0_152 = arith.constant 0 : index
    %440 = vector.load %arg15[%c8_151, %c0_152] : memref<16x16xf32, #tpu.memory_space<vmem>>, vector<2x16xf32>
    tpu.vector_store %arg15[%c8_151, %c0_152], %439 {strides = array<i32>} : memref<16x16xf32, #tpu.memory_space<vmem>>, vector<2x16xf32>,
    %441 = vector.extract_strided_slice %14 {offsets = [6, 0], sizes = [2, 64], strides = [1, 1]} : vector<16x64xf32> to vector<2x64xf32>
    %cst_153 = arith.constant dense<0.000000e+00> : vector<2x64xf32>
    %442 = tpu.matmul %439, %16, %cst_153 {dimension_numbers = #tpu.dot_dimension_numbers<[1], [0], [0], [1], [0, 0, 1, 1], [], []>} : vector<2x16xf32>, vector<16x64xf32>, vector<2x64xf32> -> vector<2x64xf32>
    %443 = arith.addf %441, %442 : vector<2x64xf32>
    %444 = vector.extract_strided_slice %443 {offsets = [0, 0], sizes = [2, 16], strides = [1, 1]} : vector<2x64xf32> to vector<2x16xf32>
    %cst_154 = arith.constant 5.000000e-01 : f32
    %445 = vector.broadcast %cst_154 : f32 to vector<2x16xf32>
    %446 = arith.mulf %445, %444 : vector<2x16xf32>
    %447 = math.tanh %446 : vector<2x16xf32>
    %cst_155 = arith.constant 1.000000e+00 : f32
    %448 = vector.broadcast %cst_155 : f32 to vector<2x16xf32>
    %449 = arith.addf %447, %448 : vector<2x16xf32>
    %cst_156 = arith.constant 5.000000e-01 : f32
    %450 = vector.broadcast %cst_156 : f32 to vector<2x16xf32>
    %451 = arith.mulf %450, %449 : vector<2x16xf32>
    %452 = vector.extract_strided_slice %443 {offsets = [0, 16], sizes = [2, 16], strides = [1, 1]} : vector<2x64xf32> to vector<2x16xf32>
    %cst_157 = arith.constant 5.000000e-01 : f32
    %453 = vector.broadcast %cst_157 : f32 to vector<2x16xf32>
    %454 = arith.mulf %453, %452 : vector<2x16xf32>
    %455 = math.tanh %454 : vector<2x16xf32>
    %cst_158 = arith.constant 1.000000e+00 : f32
    %456 = vector.broadcast %cst_158 : f32 to vector<2x16xf32>
    %457 = arith.addf %455, %456 : vector<2x16xf32>
    %cst_159 = arith.constant 5.000000e-01 : f32
    %458 = vector.broadcast %cst_159 : f32 to vector<2x16xf32>
    %459 = arith.mulf %458, %457 : vector<2x16xf32>
    %460 = vector.extract_strided_slice %443 {offsets = [0, 32], sizes = [2, 16], strides = [1, 1]} : vector<2x64xf32> to vector<2x16xf32>
    %461 = math.tanh %460 : vector<2x16xf32>
    %462 = vector.extract_strided_slice %443 {offsets = [0, 48], sizes = [2, 16], strides = [1, 1]} : vector<2x64xf32> to vector<2x16xf32>
    %cst_160 = arith.constant 5.000000e-01 : f32
    %463 = vector.broadcast %cst_160 : f32 to vector<2x16xf32>
    %464 = arith.mulf %463, %462 : vector<2x16xf32>
    %465 = math.tanh %464 : vector<2x16xf32>
    %cst_161 = arith.constant 1.000000e+00 : f32
    %466 = vector.broadcast %cst_161 : f32 to vector<2x16xf32>
    %467 = arith.addf %465, %466 : vector<2x16xf32>
    %cst_162 = arith.constant 5.000000e-01 : f32
    %468 = vector.broadcast %cst_162 : f32 to vector<2x16xf32>
    %469 = arith.mulf %468, %467 : vector<2x16xf32>
    %470 = arith.mulf %459, %437 : vector<2x16xf32>
    %471 = arith.mulf %451, %461 : vector<2x16xf32>
    %472 = arith.addf %470, %471 : vector<2x16xf32>
    %473 = math.tanh %472 : vector<2x16xf32>
    %474 = arith.mulf %469, %473 : vector<2x16xf32>
    %c6_163 = arith.constant 6 : index
    %c0_164 = arith.constant 0 : index
    %475 = vector.load %arg15[%c6_163, %c0_164] : memref<16x16xf32, #tpu.memory_space<vmem>>, vector<2x16xf32>
    tpu.vector_store %arg15[%c6_163, %c0_164], %474 {strides = array<i32>} : memref<16x16xf32, #tpu.memory_space<vmem>>, vector<2x16xf32>,
    %476 = vector.extract_strided_slice %14 {offsets = [4, 0], sizes = [2, 64], strides = [1, 1]} : vector<16x64xf32> to vector<2x64xf32>
    %cst_165 = arith.constant dense<0.000000e+00> : vector<2x64xf32>
    %477 = tpu.matmul %474, %16, %cst_165 {dimension_numbers = #tpu.dot_dimension_numbers<[1], [0], [0], [1], [0, 0, 1, 1], [], []>} : vector<2x16xf32>, vector<16x64xf32>, vector<2x64xf32> -> vector<2x64xf32>
    %478 = arith.addf %476, %477 : vector<2x64xf32>
    %479 = vector.extract_strided_slice %478 {offsets = [0, 0], sizes = [2, 16], strides = [1, 1]} : vector<2x64xf32> to vector<2x16xf32>
    %cst_166 = arith.constant 5.000000e-01 : f32
    %480 = vector.broadcast %cst_166 : f32 to vector<2x16xf32>
    %481 = arith.mulf %480, %479 : vector<2x16xf32>
    %482 = math.tanh %481 : vector<2x16xf32>
    %cst_167 = arith.constant 1.000000e+00 : f32
    %483 = vector.broadcast %cst_167 : f32 to vector<2x16xf32>
    %484 = arith.addf %482, %483 : vector<2x16xf32>
    %cst_168 = arith.constant 5.000000e-01 : f32
    %485 = vector.broadcast %cst_168 : f32 to vector<2x16xf32>
    %486 = arith.mulf %485, %484 : vector<2x16xf32>
    %487 = vector.extract_strided_slice %478 {offsets = [0, 16], sizes = [2, 16], strides = [1, 1]} : vector<2x64xf32> to vector<2x16xf32>
    %cst_169 = arith.constant 5.000000e-01 : f32
    %488 = vector.broadcast %cst_169 : f32 to vector<2x16xf32>
    %489 = arith.mulf %488, %487 : vector<2x16xf32>
    %490 = math.tanh %489 : vector<2x16xf32>
    %cst_170 = arith.constant 1.000000e+00 : f32
    %491 = vector.broadcast %cst_170 : f32 to vector<2x16xf32>
    %492 = arith.addf %490, %491 : vector<2x16xf32>
    %cst_171 = arith.constant 5.000000e-01 : f32
    %493 = vector.broadcast %cst_171 : f32 to vector<2x16xf32>
    %494 = arith.mulf %493, %492 : vector<2x16xf32>
    %495 = vector.extract_strided_slice %478 {offsets = [0, 32], sizes = [2, 16], strides = [1, 1]} : vector<2x64xf32> to vector<2x16xf32>
    %496 = math.tanh %495 : vector<2x16xf32>
    %497 = vector.extract_strided_slice %478 {offsets = [0, 48], sizes = [2, 16], strides = [1, 1]} : vector<2x64xf32> to vector<2x16xf32>
    %cst_172 = arith.constant 5.000000e-01 : f32
    %498 = vector.broadcast %cst_172 : f32 to vector<2x16xf32>
    %499 = arith.mulf %498, %497 : vector<2x16xf32>
    %500 = math.tanh %499 : vector<2x16xf32>
    %cst_173 = arith.constant 1.000000e+00 : f32
    %501 = vector.broadcast %cst_173 : f32 to vector<2x16xf32>
    %502 = arith.addf %500, %501 : vector<2x16xf32>
    %cst_174 = arith.constant 5.000000e-01 : f32
    %503 = vector.broadcast %cst_174 : f32 to vector<2x16xf32>
    %504 = arith.mulf %503, %502 : vector<2x16xf32>
    %505 = arith.mulf %494, %472 : vector<2x16xf32>
    %506 = arith.mulf %486, %496 : vector<2x16xf32>
    %507 = arith.addf %505, %506 : vector<2x16xf32>
    %508 = math.tanh %507 : vector<2x16xf32>
    %509 = arith.mulf %504, %508 : vector<2x16xf32>
    %c4_175 = arith.constant 4 : index
    %c0_176 = arith.constant 0 : index
    %510 = vector.load %arg15[%c4_175, %c0_176] : memref<16x16xf32, #tpu.memory_space<vmem>>, vector<2x16xf32>
    tpu.vector_store %arg15[%c4_175, %c0_176], %509 {strides = array<i32>} : memref<16x16xf32, #tpu.memory_space<vmem>>, vector<2x16xf32>,
    %511 = vector.extract_strided_slice %14 {offsets = [2, 0], sizes = [2, 64], strides = [1, 1]} : vector<16x64xf32> to vector<2x64xf32>
    %cst_177 = arith.constant dense<0.000000e+00> : vector<2x64xf32>
    %512 = tpu.matmul %509, %16, %cst_177 {dimension_numbers = #tpu.dot_dimension_numbers<[1], [0], [0], [1], [0, 0, 1, 1], [], []>} : vector<2x16xf32>, vector<16x64xf32>, vector<2x64xf32> -> vector<2x64xf32>
    %513 = arith.addf %511, %512 : vector<2x64xf32>
    %514 = vector.extract_strided_slice %513 {offsets = [0, 0], sizes = [2, 16], strides = [1, 1]} : vector<2x64xf32> to vector<2x16xf32>
    %cst_178 = arith.constant 5.000000e-01 : f32
    %515 = vector.broadcast %cst_178 : f32 to vector<2x16xf32>
    %516 = arith.mulf %515, %514 : vector<2x16xf32>
    %517 = math.tanh %516 : vector<2x16xf32>
    %cst_179 = arith.constant 1.000000e+00 : f32
    %518 = vector.broadcast %cst_179 : f32 to vector<2x16xf32>
    %519 = arith.addf %517, %518 : vector<2x16xf32>
    %cst_180 = arith.constant 5.000000e-01 : f32
    %520 = vector.broadcast %cst_180 : f32 to vector<2x16xf32>
    %521 = arith.mulf %520, %519 : vector<2x16xf32>
    %522 = vector.extract_strided_slice %513 {offsets = [0, 16], sizes = [2, 16], strides = [1, 1]} : vector<2x64xf32> to vector<2x16xf32>
    %cst_181 = arith.constant 5.000000e-01 : f32
    %523 = vector.broadcast %cst_181 : f32 to vector<2x16xf32>
    %524 = arith.mulf %523, %522 : vector<2x16xf32>
    %525 = math.tanh %524 : vector<2x16xf32>
    %cst_182 = arith.constant 1.000000e+00 : f32
    %526 = vector.broadcast %cst_182 : f32 to vector<2x16xf32>
    %527 = arith.addf %525, %526 : vector<2x16xf32>
    %cst_183 = arith.constant 5.000000e-01 : f32
    %528 = vector.broadcast %cst_183 : f32 to vector<2x16xf32>
    %529 = arith.mulf %528, %527 : vector<2x16xf32>
    %530 = vector.extract_strided_slice %513 {offsets = [0, 32], sizes = [2, 16], strides = [1, 1]} : vector<2x64xf32> to vector<2x16xf32>
    %531 = math.tanh %530 : vector<2x16xf32>
    %532 = vector.extract_strided_slice %513 {offsets = [0, 48], sizes = [2, 16], strides = [1, 1]} : vector<2x64xf32> to vector<2x16xf32>
    %cst_184 = arith.constant 5.000000e-01 : f32
    %533 = vector.broadcast %cst_184 : f32 to vector<2x16xf32>
    %534 = arith.mulf %533, %532 : vector<2x16xf32>
    %535 = math.tanh %534 : vector<2x16xf32>
    %cst_185 = arith.constant 1.000000e+00 : f32
    %536 = vector.broadcast %cst_185 : f32 to vector<2x16xf32>
    %537 = arith.addf %535, %536 : vector<2x16xf32>
    %cst_186 = arith.constant 5.000000e-01 : f32
    %538 = vector.broadcast %cst_186 : f32 to vector<2x16xf32>
    %539 = arith.mulf %538, %537 : vector<2x16xf32>
    %540 = arith.mulf %529, %507 : vector<2x16xf32>
    %541 = arith.mulf %521, %531 : vector<2x16xf32>
    %542 = arith.addf %540, %541 : vector<2x16xf32>
    %543 = math.tanh %542 : vector<2x16xf32>
    %544 = arith.mulf %539, %543 : vector<2x16xf32>
    %c2_187 = arith.constant 2 : index
    %c0_188 = arith.constant 0 : index
    %545 = vector.load %arg15[%c2_187, %c0_188] : memref<16x16xf32, #tpu.memory_space<vmem>>, vector<2x16xf32>
    tpu.vector_store %arg15[%c2_187, %c0_188], %544 {strides = array<i32>} : memref<16x16xf32, #tpu.memory_space<vmem>>, vector<2x16xf32>,
    %546 = vector.extract_strided_slice %14 {offsets = [0, 0], sizes = [2, 64], strides = [1, 1]} : vector<16x64xf32> to vector<2x64xf32>
    %cst_189 = arith.constant dense<0.000000e+00> : vector<2x64xf32>
    %547 = tpu.matmul %544, %16, %cst_189 {dimension_numbers = #tpu.dot_dimension_numbers<[1], [0], [0], [1], [0, 0, 1, 1], [], []>} : vector<2x16xf32>, vector<16x64xf32>, vector<2x64xf32> -> vector<2x64xf32>
    %548 = arith.addf %546, %547 : vector<2x64xf32>
    %549 = vector.extract_strided_slice %548 {offsets = [0, 0], sizes = [2, 16], strides = [1, 1]} : vector<2x64xf32> to vector<2x16xf32>
    %cst_190 = arith.constant 5.000000e-01 : f32
    %550 = vector.broadcast %cst_190 : f32 to vector<2x16xf32>
    %551 = arith.mulf %550, %549 : vector<2x16xf32>
    %552 = math.tanh %551 : vector<2x16xf32>
    %cst_191 = arith.constant 1.000000e+00 : f32
    %553 = vector.broadcast %cst_191 : f32 to vector<2x16xf32>
    %554 = arith.addf %552, %553 : vector<2x16xf32>
    %cst_192 = arith.constant 5.000000e-01 : f32
    %555 = vector.broadcast %cst_192 : f32 to vector<2x16xf32>
    %556 = arith.mulf %555, %554 : vector<2x16xf32>
    %557 = vector.extract_strided_slice %548 {offsets = [0, 16], sizes = [2, 16], strides = [1, 1]} : vector<2x64xf32> to vector<2x16xf32>
    %cst_193 = arith.constant 5.000000e-01 : f32
    %558 = vector.broadcast %cst_193 : f32 to vector<2x16xf32>
    %559 = arith.mulf %558, %557 : vector<2x16xf32>
    %560 = math.tanh %559 : vector<2x16xf32>
    %cst_194 = arith.constant 1.000000e+00 : f32
    %561 = vector.broadcast %cst_194 : f32 to vector<2x16xf32>
    %562 = arith.addf %560, %561 : vector<2x16xf32>
    %cst_195 = arith.constant 5.000000e-01 : f32
    %563 = vector.broadcast %cst_195 : f32 to vector<2x16xf32>
    %564 = arith.mulf %563, %562 : vector<2x16xf32>
    %565 = vector.extract_strided_slice %548 {offsets = [0, 32], sizes = [2, 16], strides = [1, 1]} : vector<2x64xf32> to vector<2x16xf32>
    %566 = math.tanh %565 : vector<2x16xf32>
    %567 = vector.extract_strided_slice %548 {offsets = [0, 48], sizes = [2, 16], strides = [1, 1]} : vector<2x64xf32> to vector<2x16xf32>
    %cst_196 = arith.constant 5.000000e-01 : f32
    %568 = vector.broadcast %cst_196 : f32 to vector<2x16xf32>
    %569 = arith.mulf %568, %567 : vector<2x16xf32>
    %570 = math.tanh %569 : vector<2x16xf32>
    %cst_197 = arith.constant 1.000000e+00 : f32
    %571 = vector.broadcast %cst_197 : f32 to vector<2x16xf32>
    %572 = arith.addf %570, %571 : vector<2x16xf32>
    %cst_198 = arith.constant 5.000000e-01 : f32
    %573 = vector.broadcast %cst_198 : f32 to vector<2x16xf32>
    %574 = arith.mulf %573, %572 : vector<2x16xf32>
    %575 = arith.mulf %564, %542 : vector<2x16xf32>
    %576 = arith.mulf %556, %566 : vector<2x16xf32>
    %577 = arith.addf %575, %576 : vector<2x16xf32>
    %578 = math.tanh %577 : vector<2x16xf32>
    %579 = arith.mulf %574, %578 : vector<2x16xf32>
    %c0_199 = arith.constant 0 : index
    %c0_200 = arith.constant 0 : index
    %580 = vector.load %arg15[%c0_199, %c0_200] : memref<16x16xf32, #tpu.memory_space<vmem>>, vector<2x16xf32>
    tpu.vector_store %arg15[%c0_199, %c0_200], %579 {strides = array<i32>} : memref<16x16xf32, #tpu.memory_space<vmem>>, vector<2x16xf32>,
    %c0_201 = arith.constant 0 : index
    %c0_202 = arith.constant 0 : index
    %581 = vector.load %arg14[%c0_201, %c0_202] : memref<16x16xf32, #tpu.memory_space<vmem>>, vector<16x16xf32>
    %c0_203 = arith.constant 0 : index
    %c0_204 = arith.constant 0 : index
    %582 = vector.load %arg6[%c0_203, %c0_204] : memref<16x5xf32, #tpu.memory_space<vmem>>, vector<16x5xf32>
    %cst_205 = arith.constant dense<0.000000e+00> : vector<16x5xf32>
    %583 = tpu.matmul %581, %582, %cst_205 {dimension_numbers = #tpu.dot_dimension_numbers<[1], [0], [0], [1], [0, 0, 1, 1], [], []>} : vector<16x16xf32>, vector<16x5xf32>, vector<16x5xf32> -> vector<16x5xf32>
    %c0_206 = arith.constant 0 : index
    %c0_207 = arith.constant 0 : index
    %584 = vector.load %arg15[%c0_206, %c0_207] : memref<16x16xf32, #tpu.memory_space<vmem>>, vector<16x16xf32>
    %c0_208 = arith.constant 0 : index
    %c0_209 = arith.constant 0 : index
    %585 = vector.load %arg7[%c0_208, %c0_209] : memref<16x5xf32, #tpu.memory_space<vmem>>, vector<16x5xf32>
    %cst_210 = arith.constant dense<0.000000e+00> : vector<16x5xf32>
    %586 = tpu.matmul %584, %585, %cst_210 {dimension_numbers = #tpu.dot_dimension_numbers<[1], [0], [0], [1], [0, 0, 1, 1], [], []>} : vector<16x16xf32>, vector<16x5xf32>, vector<16x5xf32> -> vector<16x5xf32>
    %587 = arith.addf %583, %586 : vector<16x5xf32>
    %c0_211 = arith.constant 0 : index
    %c0_212 = arith.constant 0 : index
    %588 = vector.load %arg8[%c0_211, %c0_212] : memref<1x5xf32, #tpu.memory_space<vmem>>, vector<1x5xf32>
    %589 = vector.broadcast %588 : vector<1x5xf32> to vector<16x5xf32>
    %590 = arith.addf %587, %589 : vector<16x5xf32>
    %c0_213 = arith.constant 0 : index
    %c0_214 = arith.constant 0 : index
    %591 = vector.load %arg12[%c0_213, %c0_214] : memref<16x5xf32, #tpu.memory_space<vmem>>, vector<16x5xf32>
    tpu.vector_store %arg12[%c0_213, %c0_214], %590 {strides = array<i32>} : memref<16x5xf32, #tpu.memory_space<vmem>>, vector<16x5xf32>,
    %c0_215 = arith.constant 0 : index
    %c0_216 = arith.constant 0 : index
    %592 = vector.load %arg9[%c0_215, %c0_216] : memref<5x5xf32, #tpu.memory_space<vmem>>, vector<5x5xf32>
    %593 = vector.shape_cast %592 : vector<5x5xf32> to vector<1x5x5xf32>
    %c0_217 = arith.constant 0 : index
    %c0_218 = arith.constant 0 : index
    %594 = vector.load %arg10[%c0_217, %c0_218] : memref<1x5xf32, #tpu.memory_space<vmem>>, vector<1x5xf32>
    %595 = vector.extract_strided_slice %590 {offsets = [0, 0], sizes = [2, 5], strides = [1, 1]} : vector<16x5xf32> to vector<2x5xf32>
    %596 = vector.broadcast %594 : vector<1x5xf32> to vector<2x5xf32>
    %597 = arith.addf %596, %595 : vector<2x5xf32>
    %598 = vector.extract_strided_slice %590 {offsets = [2, 0], sizes = [2, 5], strides = [1, 1]} : vector<16x5xf32> to vector<2x5xf32>
    %599 = vector.shape_cast %597 : vector<2x5xf32> to vector<2x1x5xf32>
    %600 = vector.broadcast %599 : vector<2x1x5xf32> to vector<2x5x5xf32>
    %601 = vector.broadcast %593 : vector<1x5x5xf32> to vector<2x5x5xf32>
    %602 = arith.addf %600, %601 : vector<2x5x5xf32>
    %603 = vector.shape_cast %598 : vector<2x5xf32> to vector<2x5x1xf32>
    %604 = vector.broadcast %603 : vector<2x5x1xf32> to vector<2x5x5xf32>
    %605 = arith.addf %602, %604 : vector<2x5x5xf32>
    %cst_219 = arith.constant dense<0xFF800000> : vector<2x5xf32>
    %606 = vector.multi_reduction <maximumf>, %605, %cst_219 [2] : vector<2x5x5xf32> to vector<2x5xf32>
    %607 = vector.shape_cast %606 : vector<2x5xf32> to vector<2x5x1xf32>
    %608 = tpu.iota {dimensions = array<i32: 2>} : vector<2x5x5xi32>
    %609 = vector.broadcast %607 : vector<2x5x1xf32> to vector<2x5x5xf32>
    %610 = arith.cmpf oeq, %605, %609 : vector<2x5x5xf32>
    %c5_i32 = arith.constant 5 : i32
    %611 = vector.broadcast %c5_i32 : i32 to vector<2x5x5xi32>
    %612 = arith.select %610, %608, %611 : vector<2x5x5xi1>, vector<2x5x5xi32>
    %cst_220 = arith.constant dense<2147483647> : vector<2x5xi32>
    %613 = vector.multi_reduction <minsi>, %612, %cst_220 [2] : vector<2x5x5xi32> to vector<2x5xi32>
    %cst_221 = arith.constant dense<0xFF800000> : vector<2x5xf32>
    %614 = vector.multi_reduction <maximumf>, %605, %cst_221 [2] : vector<2x5x5xf32> to vector<2x5xf32>
    %615 = vector.extract_strided_slice %590 {offsets = [4, 0], sizes = [2, 5], strides = [1, 1]} : vector<16x5xf32> to vector<2x5xf32>
    %616 = vector.shape_cast %614 : vector<2x5xf32> to vector<2x1x5xf32>
    %617 = vector.broadcast %616 : vector<2x1x5xf32> to vector<2x5x5xf32>
    %618 = vector.broadcast %593 : vector<1x5x5xf32> to vector<2x5x5xf32>
    %619 = arith.addf %617, %618 : vector<2x5x5xf32>
    %620 = vector.shape_cast %615 : vector<2x5xf32> to vector<2x5x1xf32>
    %621 = vector.broadcast %620 : vector<2x5x1xf32> to vector<2x5x5xf32>
    %622 = arith.addf %619, %621 : vector<2x5x5xf32>
    %cst_222 = arith.constant dense<0xFF800000> : vector<2x5xf32>
    %623 = vector.multi_reduction <maximumf>, %622, %cst_222 [2] : vector<2x5x5xf32> to vector<2x5xf32>
    %624 = vector.shape_cast %623 : vector<2x5xf32> to vector<2x5x1xf32>
    %625 = tpu.iota {dimensions = array<i32: 2>} : vector<2x5x5xi32>
    %626 = vector.broadcast %624 : vector<2x5x1xf32> to vector<2x5x5xf32>
    %627 = arith.cmpf oeq, %622, %626 : vector<2x5x5xf32>
    %c5_i32_223 = arith.constant 5 : i32
    %628 = vector.broadcast %c5_i32_223 : i32 to vector<2x5x5xi32>
    %629 = arith.select %627, %625, %628 : vector<2x5x5xi1>, vector<2x5x5xi32>
    %cst_224 = arith.constant dense<2147483647> : vector<2x5xi32>
    %630 = vector.multi_reduction <minsi>, %629, %cst_224 [2] : vector<2x5x5xi32> to vector<2x5xi32>
    %cst_225 = arith.constant dense<0xFF800000> : vector<2x5xf32>
    %631 = vector.multi_reduction <maximumf>, %622, %cst_225 [2] : vector<2x5x5xf32> to vector<2x5xf32>
    %632 = vector.extract_strided_slice %590 {offsets = [6, 0], sizes = [2, 5], strides = [1, 1]} : vector<16x5xf32> to vector<2x5xf32>
    %633 = vector.shape_cast %631 : vector<2x5xf32> to vector<2x1x5xf32>
    %634 = vector.broadcast %633 : vector<2x1x5xf32> to vector<2x5x5xf32>
    %635 = vector.broadcast %593 : vector<1x5x5xf32> to vector<2x5x5xf32>
    %636 = arith.addf %634, %635 : vector<2x5x5xf32>
    %637 = vector.shape_cast %632 : vector<2x5xf32> to vector<2x5x1xf32>
    %638 = vector.broadcast %637 : vector<2x5x1xf32> to vector<2x5x5xf32>
    %639 = arith.addf %636, %638 : vector<2x5x5xf32>
    %cst_226 = arith.constant dense<0xFF800000> : vector<2x5xf32>
    %640 = vector.multi_reduction <maximumf>, %639, %cst_226 [2] : vector<2x5x5xf32> to vector<2x5xf32>
    %641 = vector.shape_cast %640 : vector<2x5xf32> to vector<2x5x1xf32>
    %642 = tpu.iota {dimensions = array<i32: 2>} : vector<2x5x5xi32>
    %643 = vector.broadcast %641 : vector<2x5x1xf32> to vector<2x5x5xf32>
    %644 = arith.cmpf oeq, %639, %643 : vector<2x5x5xf32>
    %c5_i32_227 = arith.constant 5 : i32
    %645 = vector.broadcast %c5_i32_227 : i32 to vector<2x5x5xi32>
    %646 = arith.select %644, %642, %645 : vector<2x5x5xi1>, vector<2x5x5xi32>
    %cst_228 = arith.constant dense<2147483647> : vector<2x5xi32>
    %647 = vector.multi_reduction <minsi>, %646, %cst_228 [2] : vector<2x5x5xi32> to vector<2x5xi32>
    %cst_229 = arith.constant dense<0xFF800000> : vector<2x5xf32>
    %648 = vector.multi_reduction <maximumf>, %639, %cst_229 [2] : vector<2x5x5xf32> to vector<2x5xf32>
    %649 = vector.extract_strided_slice %590 {offsets = [8, 0], sizes = [2, 5], strides = [1, 1]} : vector<16x5xf32> to vector<2x5xf32>
    %650 = vector.shape_cast %648 : vector<2x5xf32> to vector<2x1x5xf32>
    %651 = vector.broadcast %650 : vector<2x1x5xf32> to vector<2x5x5xf32>
    %652 = vector.broadcast %593 : vector<1x5x5xf32> to vector<2x5x5xf32>
    %653 = arith.addf %651, %652 : vector<2x5x5xf32>
    %654 = vector.shape_cast %649 : vector<2x5xf32> to vector<2x5x1xf32>
    %655 = vector.broadcast %654 : vector<2x5x1xf32> to vector<2x5x5xf32>
    %656 = arith.addf %653, %655 : vector<2x5x5xf32>
    %cst_230 = arith.constant dense<0xFF800000> : vector<2x5xf32>
    %657 = vector.multi_reduction <maximumf>, %656, %cst_230 [2] : vector<2x5x5xf32> to vector<2x5xf32>
    %658 = vector.shape_cast %657 : vector<2x5xf32> to vector<2x5x1xf32>
    %659 = tpu.iota {dimensions = array<i32: 2>} : vector<2x5x5xi32>
    %660 = vector.broadcast %658 : vector<2x5x1xf32> to vector<2x5x5xf32>
    %661 = arith.cmpf oeq, %656, %660 : vector<2x5x5xf32>
    %c5_i32_231 = arith.constant 5 : i32
    %662 = vector.broadcast %c5_i32_231 : i32 to vector<2x5x5xi32>
    %663 = arith.select %661, %659, %662 : vector<2x5x5xi1>, vector<2x5x5xi32>
    %cst_232 = arith.constant dense<2147483647> : vector<2x5xi32>
    %664 = vector.multi_reduction <minsi>, %663, %cst_232 [2] : vector<2x5x5xi32> to vector<2x5xi32>
    %cst_233 = arith.constant dense<0xFF800000> : vector<2x5xf32>
    %665 = vector.multi_reduction <maximumf>, %656, %cst_233 [2] : vector<2x5x5xf32> to vector<2x5xf32>
    %666 = vector.extract_strided_slice %590 {offsets = [10, 0], sizes = [2, 5], strides = [1, 1]} : vector<16x5xf32> to vector<2x5xf32>
    %667 = vector.shape_cast %665 : vector<2x5xf32> to vector<2x1x5xf32>
    %668 = vector.broadcast %667 : vector<2x1x5xf32> to vector<2x5x5xf32>
    %669 = vector.broadcast %593 : vector<1x5x5xf32> to vector<2x5x5xf32>
    %670 = arith.addf %668, %669 : vector<2x5x5xf32>
    %671 = vector.shape_cast %666 : vector<2x5xf32> to vector<2x5x1xf32>
    %672 = vector.broadcast %671 : vector<2x5x1xf32> to vector<2x5x5xf32>
    %673 = arith.addf %670, %672 : vector<2x5x5xf32>
    %cst_234 = arith.constant dense<0xFF800000> : vector<2x5xf32>
    %674 = vector.multi_reduction <maximumf>, %673, %cst_234 [2] : vector<2x5x5xf32> to vector<2x5xf32>
    %675 = vector.shape_cast %674 : vector<2x5xf32> to vector<2x5x1xf32>
    %676 = tpu.iota {dimensions = array<i32: 2>} : vector<2x5x5xi32>
    %677 = vector.broadcast %675 : vector<2x5x1xf32> to vector<2x5x5xf32>
    %678 = arith.cmpf oeq, %673, %677 : vector<2x5x5xf32>
    %c5_i32_235 = arith.constant 5 : i32
    %679 = vector.broadcast %c5_i32_235 : i32 to vector<2x5x5xi32>
    %680 = arith.select %678, %676, %679 : vector<2x5x5xi1>, vector<2x5x5xi32>
    %cst_236 = arith.constant dense<2147483647> : vector<2x5xi32>
    %681 = vector.multi_reduction <minsi>, %680, %cst_236 [2] : vector<2x5x5xi32> to vector<2x5xi32>
    %cst_237 = arith.constant dense<0xFF800000> : vector<2x5xf32>
    %682 = vector.multi_reduction <maximumf>, %673, %cst_237 [2] : vector<2x5x5xf32> to vector<2x5xf32>
    %683 = vector.extract_strided_slice %590 {offsets = [12, 0], sizes = [2, 5], strides = [1, 1]} : vector<16x5xf32> to vector<2x5xf32>
    %684 = vector.shape_cast %682 : vector<2x5xf32> to vector<2x1x5xf32>
    %685 = vector.broadcast %684 : vector<2x1x5xf32> to vector<2x5x5xf32>
    %686 = vector.broadcast %593 : vector<1x5x5xf32> to vector<2x5x5xf32>
    %687 = arith.addf %685, %686 : vector<2x5x5xf32>
    %688 = vector.shape_cast %683 : vector<2x5xf32> to vector<2x5x1xf32>
    %689 = vector.broadcast %688 : vector<2x5x1xf32> to vector<2x5x5xf32>
    %690 = arith.addf %687, %689 : vector<2x5x5xf32>
    %cst_238 = arith.constant dense<0xFF800000> : vector<2x5xf32>
    %691 = vector.multi_reduction <maximumf>, %690, %cst_238 [2] : vector<2x5x5xf32> to vector<2x5xf32>
    %692 = vector.shape_cast %691 : vector<2x5xf32> to vector<2x5x1xf32>
    %693 = tpu.iota {dimensions = array<i32: 2>} : vector<2x5x5xi32>
    %694 = vector.broadcast %692 : vector<2x5x1xf32> to vector<2x5x5xf32>
    %695 = arith.cmpf oeq, %690, %694 : vector<2x5x5xf32>
    %c5_i32_239 = arith.constant 5 : i32
    %696 = vector.broadcast %c5_i32_239 : i32 to vector<2x5x5xi32>
    %697 = arith.select %695, %693, %696 : vector<2x5x5xi1>, vector<2x5x5xi32>
    %cst_240 = arith.constant dense<2147483647> : vector<2x5xi32>
    %698 = vector.multi_reduction <minsi>, %697, %cst_240 [2] : vector<2x5x5xi32> to vector<2x5xi32>
    %cst_241 = arith.constant dense<0xFF800000> : vector<2x5xf32>
    %699 = vector.multi_reduction <maximumf>, %690, %cst_241 [2] : vector<2x5x5xf32> to vector<2x5xf32>
    %700 = vector.extract_strided_slice %590 {offsets = [14, 0], sizes = [2, 5], strides = [1, 1]} : vector<16x5xf32> to vector<2x5xf32>
    %701 = vector.shape_cast %699 : vector<2x5xf32> to vector<2x1x5xf32>
    %702 = vector.broadcast %701 : vector<2x1x5xf32> to vector<2x5x5xf32>
    %703 = vector.broadcast %593 : vector<1x5x5xf32> to vector<2x5x5xf32>
    %704 = arith.addf %702, %703 : vector<2x5x5xf32>
    %705 = vector.shape_cast %700 : vector<2x5xf32> to vector<2x5x1xf32>
    %706 = vector.broadcast %705 : vector<2x5x1xf32> to vector<2x5x5xf32>
    %707 = arith.addf %704, %706 : vector<2x5x5xf32>
    %cst_242 = arith.constant dense<0xFF800000> : vector<2x5xf32>
    %708 = vector.multi_reduction <maximumf>, %707, %cst_242 [2] : vector<2x5x5xf32> to vector<2x5xf32>
    %709 = vector.shape_cast %708 : vector<2x5xf32> to vector<2x5x1xf32>
    %710 = tpu.iota {dimensions = array<i32: 2>} : vector<2x5x5xi32>
    %711 = vector.broadcast %709 : vector<2x5x1xf32> to vector<2x5x5xf32>
    %712 = arith.cmpf oeq, %707, %711 : vector<2x5x5xf32>
    %c5_i32_243 = arith.constant 5 : i32
    %713 = vector.broadcast %c5_i32_243 : i32 to vector<2x5x5xi32>
    %714 = arith.select %712, %710, %713 : vector<2x5x5xi1>, vector<2x5x5xi32>
    %cst_244 = arith.constant dense<2147483647> : vector<2x5xi32>
    %715 = vector.multi_reduction <minsi>, %714, %cst_244 [2] : vector<2x5x5xi32> to vector<2x5xi32>
    %cst_245 = arith.constant dense<0xFF800000> : vector<2x5xf32>
    %716 = vector.multi_reduction <maximumf>, %707, %cst_245 [2] : vector<2x5x5xf32> to vector<2x5xf32>
    %c0_246 = arith.constant 0 : index
    %c0_247 = arith.constant 0 : index
    %717 = vector.load %arg11[%c0_246, %c0_247] : memref<1x5xf32, #tpu.memory_space<vmem>>, vector<1x5xf32>
    %718 = vector.broadcast %717 : vector<1x5xf32> to vector<2x5xf32>
    %719 = arith.addf %716, %718 : vector<2x5xf32>
    %cst_248 = arith.constant dense<0xFF800000> : vector<2xf32>
    %720 = vector.multi_reduction <maximumf>, %719, %cst_248 [1] : vector<2x5xf32> to vector<2xf32>
    %721 = vector.shape_cast %720 : vector<2xf32> to vector<2x1xf32>
    %722 = tpu.iota {dimensions = array<i32: 1>} : vector<2x5xi32>
    %723 = vector.broadcast %721 : vector<2x1xf32> to vector<2x5xf32>
    %724 = arith.cmpf oeq, %719, %723 : vector<2x5xf32>
    %c5_i32_249 = arith.constant 5 : i32
    %725 = vector.broadcast %c5_i32_249 : i32 to vector<2x5xi32>
    %726 = arith.select %724, %722, %725 : vector<2x5xi1>, vector<2x5xi32>
    %cst_250 = arith.constant dense<2147483647> : vector<2xi32>
    %727 = vector.multi_reduction <minsi>, %726, %cst_250 [1] : vector<2x5xi32> to vector<2xi32>
    %728 = vector.shape_cast %727 : vector<2xi32> to vector<2x1xi32>
    %729 = tpu.iota {dimensions = array<i32: 1>} : vector<2x8xi32>
    %c7_i32 = arith.constant 7 : i32
    %730 = vector.broadcast %c7_i32 : i32 to vector<2x8xi32>
    %731 = arith.cmpi eq, %729, %730 : vector<2x8xi32>
    %c0_i32 = arith.constant 0 : i32
    %732 = vector.shape_cast %728 : vector<2x1xi32> to vector<2x1xi32>
    %733 = vector.broadcast %732 : vector<2x1xi32> to vector<2x8xi32>
    %734 = vector.broadcast %c0_i32 : i32 to vector<2x8xi32>
    %735 = arith.select %731, %733, %734 : vector<2x8xi1>, vector<2x8xi32>
    %736 = tpu.iota {dimensions = array<i32: 1>} : vector<2x5xi32>
    %737 = vector.broadcast %728 : vector<2x1xi32> to vector<2x5xi32>
    %738 = arith.cmpi eq, %736, %737 : vector<2x5xi32>
    %c0_i32_251 = arith.constant 0 : i32
    %739 = vector.broadcast %c0_i32_251 : i32 to vector<2x5xi32>
    %740 = arith.select %738, %715, %739 : vector<2x5xi1>, vector<2x5xi32>
    %cst_252 = arith.constant dense<0> : vector<2xi32>
    %741 = vector.multi_reduction <add>, %740, %cst_252 [1] : vector<2x5xi32> to vector<2xi32>
    %742 = vector.shape_cast %741 : vector<2xi32> to vector<2x1xi32>
    %c6_i32 = arith.constant 6 : i32
    %743 = vector.broadcast %c6_i32 : i32 to vector<2x8xi32>
    %744 = arith.cmpi eq, %729, %743 : vector<2x8xi32>
    %745 = vector.shape_cast %742 : vector<2x1xi32> to vector<2x1xi32>
    %746 = vector.broadcast %745 : vector<2x1xi32> to vector<2x8xi32>
    %747 = arith.select %744, %746, %735 : vector<2x8xi1>, vector<2x8xi32>
    %748 = vector.broadcast %742 : vector<2x1xi32> to vector<2x5xi32>
    %749 = arith.cmpi eq, %736, %748 : vector<2x5xi32>
    %c0_i32_253 = arith.constant 0 : i32
    %750 = vector.broadcast %c0_i32_253 : i32 to vector<2x5xi32>
    %751 = arith.select %749, %698, %750 : vector<2x5xi1>, vector<2x5xi32>
    %cst_254 = arith.constant dense<0> : vector<2xi32>
    %752 = vector.multi_reduction <add>, %751, %cst_254 [1] : vector<2x5xi32> to vector<2xi32>
    %753 = vector.shape_cast %752 : vector<2xi32> to vector<2x1xi32>
    %c5_i32_255 = arith.constant 5 : i32
    %754 = vector.broadcast %c5_i32_255 : i32 to vector<2x8xi32>
    %755 = arith.cmpi eq, %729, %754 : vector<2x8xi32>
    %756 = vector.shape_cast %753 : vector<2x1xi32> to vector<2x1xi32>
    %757 = vector.broadcast %756 : vector<2x1xi32> to vector<2x8xi32>
    %758 = arith.select %755, %757, %747 : vector<2x8xi1>, vector<2x8xi32>
    %759 = vector.broadcast %753 : vector<2x1xi32> to vector<2x5xi32>
    %760 = arith.cmpi eq, %736, %759 : vector<2x5xi32>
    %c0_i32_256 = arith.constant 0 : i32
    %761 = vector.broadcast %c0_i32_256 : i32 to vector<2x5xi32>
    %762 = arith.select %760, %681, %761 : vector<2x5xi1>, vector<2x5xi32>
    %cst_257 = arith.constant dense<0> : vector<2xi32>
    %763 = vector.multi_reduction <add>, %762, %cst_257 [1] : vector<2x5xi32> to vector<2xi32>
    %764 = vector.shape_cast %763 : vector<2xi32> to vector<2x1xi32>
    %c4_i32 = arith.constant 4 : i32
    %765 = vector.broadcast %c4_i32 : i32 to vector<2x8xi32>
    %766 = arith.cmpi eq, %729, %765 : vector<2x8xi32>
    %767 = vector.shape_cast %764 : vector<2x1xi32> to vector<2x1xi32>
    %768 = vector.broadcast %767 : vector<2x1xi32> to vector<2x8xi32>
    %769 = arith.select %766, %768, %758 : vector<2x8xi1>, vector<2x8xi32>
    %770 = vector.broadcast %764 : vector<2x1xi32> to vector<2x5xi32>
    %771 = arith.cmpi eq, %736, %770 : vector<2x5xi32>
    %c0_i32_258 = arith.constant 0 : i32
    %772 = vector.broadcast %c0_i32_258 : i32 to vector<2x5xi32>
    %773 = arith.select %771, %664, %772 : vector<2x5xi1>, vector<2x5xi32>
    %cst_259 = arith.constant dense<0> : vector<2xi32>
    %774 = vector.multi_reduction <add>, %773, %cst_259 [1] : vector<2x5xi32> to vector<2xi32>
    %775 = vector.shape_cast %774 : vector<2xi32> to vector<2x1xi32>
    %c3_i32 = arith.constant 3 : i32
    %776 = vector.broadcast %c3_i32 : i32 to vector<2x8xi32>
    %777 = arith.cmpi eq, %729, %776 : vector<2x8xi32>
    %778 = vector.shape_cast %775 : vector<2x1xi32> to vector<2x1xi32>
    %779 = vector.broadcast %778 : vector<2x1xi32> to vector<2x8xi32>
    %780 = arith.select %777, %779, %769 : vector<2x8xi1>, vector<2x8xi32>
    %781 = vector.broadcast %775 : vector<2x1xi32> to vector<2x5xi32>
    %782 = arith.cmpi eq, %736, %781 : vector<2x5xi32>
    %c0_i32_260 = arith.constant 0 : i32
    %783 = vector.broadcast %c0_i32_260 : i32 to vector<2x5xi32>
    %784 = arith.select %782, %647, %783 : vector<2x5xi1>, vector<2x5xi32>
    %cst_261 = arith.constant dense<0> : vector<2xi32>
    %785 = vector.multi_reduction <add>, %784, %cst_261 [1] : vector<2x5xi32> to vector<2xi32>
    %786 = vector.shape_cast %785 : vector<2xi32> to vector<2x1xi32>
    %c2_i32 = arith.constant 2 : i32
    %787 = vector.broadcast %c2_i32 : i32 to vector<2x8xi32>
    %788 = arith.cmpi eq, %729, %787 : vector<2x8xi32>
    %789 = vector.shape_cast %786 : vector<2x1xi32> to vector<2x1xi32>
    %790 = vector.broadcast %789 : vector<2x1xi32> to vector<2x8xi32>
    %791 = arith.select %788, %790, %780 : vector<2x8xi1>, vector<2x8xi32>
    %792 = vector.broadcast %786 : vector<2x1xi32> to vector<2x5xi32>
    %793 = arith.cmpi eq, %736, %792 : vector<2x5xi32>
    %c0_i32_262 = arith.constant 0 : i32
    %794 = vector.broadcast %c0_i32_262 : i32 to vector<2x5xi32>
    %795 = arith.select %793, %630, %794 : vector<2x5xi1>, vector<2x5xi32>
    %cst_263 = arith.constant dense<0> : vector<2xi32>
    %796 = vector.multi_reduction <add>, %795, %cst_263 [1] : vector<2x5xi32> to vector<2xi32>
    %797 = vector.shape_cast %796 : vector<2xi32> to vector<2x1xi32>
    %c1_i32 = arith.constant 1 : i32
    %798 = vector.broadcast %c1_i32 : i32 to vector<2x8xi32>
    %799 = arith.cmpi eq, %729, %798 : vector<2x8xi32>
    %800 = vector.shape_cast %797 : vector<2x1xi32> to vector<2x1xi32>
    %801 = vector.broadcast %800 : vector<2x1xi32> to vector<2x8xi32>
    %802 = arith.select %799, %801, %791 : vector<2x8xi1>, vector<2x8xi32>
    %803 = vector.broadcast %797 : vector<2x1xi32> to vector<2x5xi32>
    %804 = arith.cmpi eq, %736, %803 : vector<2x5xi32>
    %c0_i32_264 = arith.constant 0 : i32
    %805 = vector.broadcast %c0_i32_264 : i32 to vector<2x5xi32>
    %806 = arith.select %804, %613, %805 : vector<2x5xi1>, vector<2x5xi32>
    %cst_265 = arith.constant dense<0> : vector<2xi32>
    %807 = vector.multi_reduction <add>, %806, %cst_265 [1] : vector<2x5xi32> to vector<2xi32>
    %808 = vector.shape_cast %807 : vector<2xi32> to vector<2x1xi32>
    %c0_i32_266 = arith.constant 0 : i32
    %809 = vector.broadcast %c0_i32_266 : i32 to vector<2x8xi32>
    %810 = arith.cmpi eq, %729, %809 : vector<2x8xi32>
    %811 = vector.shape_cast %808 : vector<2x1xi32> to vector<2x1xi32>
    %812 = vector.broadcast %811 : vector<2x1xi32> to vector<2x8xi32>
    %813 = arith.select %810, %812, %802 : vector<2x8xi1>, vector<2x8xi32>
    %c0_267 = arith.constant 0 : index
    %c0_268 = arith.constant 0 : index
    %814 = vector.load %arg13[%c0_267, %c0_268] : memref<2x8xi32, #tpu.memory_space<vmem>>, vector<2x8xi32>
    tpu.vector_store %arg13[%c0_267, %c0_268], %813 {strides = array<i32>} : memref<2x8xi32, #tpu.memory_space<vmem>>, vector<2x8xi32>,
    return
  }
}

</mosaic_0001>

<llo_original>
// kernel: tpu_custom_call.1
$region0: #{tpu_custom_call.1}
  #allocation0 [shape = 'u32[]', space=smem, size = 0x4, offset = 0x4, fixed_abs, tag = 'smem constant byte address 0x4 - core index']
  #allocation1 [shape = 'u32[144,128]{1,0:T(1,128)}', space=vmem, size = 0x12000, scoped, tag = 'internal scratch']
  #allocation2 [shape = 'f32[16,16]{1,0:T(8,128)}', space=vmem, size = 0x2000, scoped, tag = 'scratch operand']
  #allocation3 [shape = 'f32[16,16]{1,0:T(8,128)}', space=vmem, size = 0x2000, scoped, tag = 'scratch operand']
  %s0 = inlined_call_operand.vmem [shape: s32[16,1], index: 0, kind: input, shape index: {}]
  %s1 = inlined_call_operand.vmem [shape: f32[50,32], index: 1, kind: input, shape index: {}]
  %s2 = inlined_call_operand.vmem [shape: f32[32,128], index: 2, kind: input, shape index: {}]
  %s3 = inlined_call_operand.vmem [shape: f32[1,128], index: 3, kind: input, shape index: {}]
  %s4 = inlined_call_operand.vmem [shape: f32[16,64], index: 4, kind: input, shape index: {}]
  %s5 = inlined_call_operand.vmem [shape: f32[16,64], index: 5, kind: input, shape index: {}]
  %s6 = inlined_call_operand.vmem [shape: f32[16,5], index: 6, kind: input, shape index: {}]
  %s7 = inlined_call_operand.vmem [shape: f32[16,5], index: 7, kind: input, shape index: {}]
  %s8 = inlined_call_operand.vmem [shape: f32[1,5], index: 8, kind: input, shape index: {}]
  %s9 = inlined_call_operand.vmem [shape: f32[5,5], index: 9, kind: input, shape index: {}]
  %s10 = inlined_call_operand.vmem [shape: f32[1,5], index: 10, kind: input, shape index: {}]
  %s11 = inlined_call_operand.vmem [shape: f32[1,5], index: 11, kind: input, shape index: {}]
  %s12 = inlined_call_operand.vmem [shape: f32[16,5], index: 12, kind: output, shape index: {0}]
  %s13 = inlined_call_operand.hbm [shape: s32[2,8], index: 13, kind: output, shape index: {1}]
  %14 = xla_tuple %s12, %s13
  %s15 = sld [smem:[#allocation0]]
  $region66: #{tpu_custom_call.1} parent=0
    _
  %s17 = ssub.s32 1, %s15
  %s18 = scalar_select 0, %s17, %s15
  $region1: #{tpu_custom_call.1} parent=0
    #allocation4 [shape = 'u8[1024]{0}', space=vmem, size = 0x400, scoped, tag = 'output window, operand 1, single buffered']
    #allocation5 [shape = 's32[1]{0}', space=sflag, size = 0x4, scoped, tag = 'scoped memory for tpu_custom_call.1']
    %19 = vsyncpa [#allocation5], 0
    // Predicated region
    $region2: #{tpu_custom_call.1} parent=1 // pred_check
      _
    $region3: #{tpu_custom_call.1} parent=1 // pred_check_branch
      %21 = sbr.rel (0) target = $region5
    $region4: #{tpu_custom_call.1} parent=1 // pred_region
      _
    $region5: #{tpu_custom_call.1} parent=1 // pred_fallthru
      _
    // Predicated region
    $region6: #{tpu_custom_call.1} parent=1 // pred_check
      _
    $region7: #{tpu_custom_call.1} parent=1 // pred_check_branch
      %23 = sbr.rel (0) target = $region9
    $region8: #{tpu_custom_call.1} parent=1 // pred_region
      _
    $region9: #{tpu_custom_call.1} parent=1 // pred_fallthru
      _
    // Predicated region
    $region10: #{tpu_custom_call.1} parent=1 // pred_check
      _
    $region11: #{tpu_custom_call.1} parent=1 // pred_check_branch
      %25 = sbr.rel (0) target = $region13
    $region12: #{tpu_custom_call.1} parent=1 // pred_region
      _
    $region13: #{tpu_custom_call.1} parent=1 // pred_fallthru
      _
    // Predicated region
    $region14: #{tpu_custom_call.1} parent=1 // pred_check
      _
    $region15: #{tpu_custom_call.1} parent=1 // pred_check_branch
      %27 = sbr.rel (0) target = $region17
    $region16: #{tpu_custom_call.1} parent=1 // pred_region
      _
    $region17: #{tpu_custom_call.1} parent=1 // pred_fallthru
      _
    // Predicated region
    $region18: #{tpu_custom_call.1} parent=1 // pred_check
      _
    $region19: #{tpu_custom_call.1} parent=1 // pred_check_branch
      %29 = sbr.rel (0) target = $region21
    $region20: #{tpu_custom_call.1} parent=1 // pred_region
      _
    $region21: #{tpu_custom_call.1} parent=1 // pred_fallthru
      _
    // Predicated region
    $region22: #{tpu_custom_call.1} parent=1 // pred_check
      _
    $region23: #{tpu_custom_call.1} parent=1 // pred_check_branch
      %31 = sbr.rel (0) target = $region25
    $region24: #{tpu_custom_call.1} parent=1 // pred_region
      _
    $region25: #{tpu_custom_call.1} parent=1 // pred_fallthru
      _
    // Predicated region
    $region26: #{tpu_custom_call.1} parent=1 // pred_check
      _
    $region27: #{tpu_custom_call.1} parent=1 // pred_check_branch
      %33 = sbr.rel (0) target = $region29
    $region28: #{tpu_custom_call.1} parent=1 // pred_region
      _
    $region29: #{tpu_custom_call.1} parent=1 // pred_fallthru
      _
    // Predicated region
    $region30: #{tpu_custom_call.1} parent=1 // pred_check
      _
    $region31: #{tpu_custom_call.1} parent=1 // pred_check_branch
      %35 = sbr.rel (0) target = $region33
    $region32: #{tpu_custom_call.1} parent=1 // pred_region
      _
    $region33: #{tpu_custom_call.1} parent=1 // pred_fallthru
      _
    // Predicated region
    $region34: #{tpu_custom_call.1} parent=1 // pred_check
      _
    $region35: #{tpu_custom_call.1} parent=1 // pred_check_branch
      %37 = sbr.rel (0) target = $region37
    $region36: #{tpu_custom_call.1} parent=1 // pred_region
      _
    $region37: #{tpu_custom_call.1} parent=1 // pred_fallthru
      _
    // Predicated region
    $region38: #{tpu_custom_call.1} parent=1 // pred_check
      _
    $region39: #{tpu_custom_call.1} parent=1 // pred_check_branch
      %39 = sbr.rel (0) target = $region41
    $region40: #{tpu_custom_call.1} parent=1 // pred_region
      _
    $region41: #{tpu_custom_call.1} parent=1 // pred_fallthru
      _
    // Predicated region
    $region42: #{tpu_custom_call.1} parent=1 // pred_check
      _
    $region43: #{tpu_custom_call.1} parent=1 // pred_check_branch
      %41 = sbr.rel (0) target = $region45
    $region44: #{tpu_custom_call.1} parent=1 // pred_region
      _
    $region45: #{tpu_custom_call.1} parent=1 // pred_fallthru
      _
    // Predicated region
    $region46: #{tpu_custom_call.1} parent=1 // pred_check
      _
    $region47: #{tpu_custom_call.1} parent=1 // pred_check_branch
      %43 = sbr.rel (0) target = $region49
    $region48: #{tpu_custom_call.1} parent=1 // pred_region
      _
    $region49: #{tpu_custom_call.1} parent=1 // pred_fallthru
      _
    %v44 = vld [vmem:[%s0] sm:$0xff]
    %v45 = vld [vmem:[%s0 + $0x8] sm:$0xff]
    %v46 = vlaneseq
    %v47 = vand.u32 %v46, 127
    %48 = vset.pattern.permute.xlu0 0
    %49 = vperm.xlu0 %48, %v44
    %v50 = vpop.permute.xlu0 %49
    %51 = vset.pattern.permute.xlu0 0
    %52 = vperm.xlu0 %51, %v45
    %v53 = vpop.permute.xlu0 %52
    %vm54 = vcmp.eq.s32.totalorder %v47, %v50
    %vm55 = vcmp.eq.s32.totalorder %v47, %v53
    %v56 = vsel %vm54, 1, 0
    %v57 = vsel %vm55, 1, 0
    %v58 = vcvt.s32.f32 %v56
    %v59 = vcvt.s32.f32 %v57
    %v60 = vld [vmem:[%s1] sm:$0xff]
    %v61 = vld [vmem:[%s1 + $0x8] sm:$0xff]
    %v62 = vld [vmem:[%s1 + $0x10] sm:$0xff]
    %v63 = vld [vmem:[%s1 + $0x18] sm:$0xff]
    %v64 = vld [vmem:[%s1 + $0x20] sm:$0xff]
    %v65 = vld [vmem:[%s1 + $0x28] sm:$0xff]
    %v66 = vld [vmem:[%s1 + $0x30] sm:$0x3]
    %vm67 = vcmask 408576
    %v69 = vsel %vm67, %v58, 0
    %v72 = vsel %vm67, %v59, 0
    %vm74 = vcmask 1041408
    %v76 = vsel %vm74, %v66, 0
    %78 = vmatprep.subr.mxu0 0.0
    %79 = vmatpush1.msra.mxu0 %v60
    %80 = vmatprep.subr.mxu0 0.0
    %81 = vmatpush1.msra.mxu0 %v61
    %82 = vmatprep.subr.mxu0 0.0
    %83 = vmatpush1.msra.mxu0 %v62
    %84 = vmatprep.subr.mxu0 0.0
    %85 = vmatpush1.msra.mxu0 %v63
    %86 = vmatprep.subr.mxu0 0.0
    %87 = vmatpush1.msra.mxu0 %v64
    %88 = vmatprep.subr.mxu0 0.0
    %89 = vmatpush1.msra.mxu0 %v65
    %90 = vmatprep.subr.mxu0 0.0
    %91 = vmatpush1.msra.mxu0 %v76
    %92 = vmatprep.subr.mxu0 0.0
    %93 = vmatpush1.msra.mxu0 0.0
    %94 = vmatprep.subr.mxu0 0.0
    %95 = vmatpush1.msra.mxu0 0.0
    %96 = vmatprep.subr.mxu0 0.0
    %97 = vmatpush1.msra.mxu0 0.0
    %98 = vmatprep.subr.mxu0 0.0
    %99 = vmatpush1.msra.mxu0 0.0
    %100 = vmatprep.subr.mxu0 0.0
    %101 = vmatpush1.msra.mxu0 0.0
    %102 = vmatprep.subr.mxu0 0.0
    %103 = vmatpush1.msra.mxu0 0.0
    %104 = vmatprep.subr.mxu0 0.0
    %105 = vmatpush1.msra.mxu0 0.0
    %106 = vmatprep.subr.mxu0 0.0
    %107 = vmatpush1.msra.mxu0 0.0
    %108 = vmatprep.subr.mxu0 0.0
    %109 = vmatpush1.msra.mxu0 0.0
    %110 = vmatprep.subr.mxu0 0.0
    %111 = vmatpush1.msra.mxu0 0.0
    %112 = vmatprep.subr.mxu0 0.0
    %113 = vmatpush1.msra.mxu0 0.0
    %114 = vmatprep.subr.mxu0 0.0
    %115 = vmatpush1.msra.mxu0 0.0
    %116 = vmatprep.subr.mxu0 0.0
    %117 = vmatpush1.msra.mxu0 0.0
    %118 = vmatprep.subr.mxu0 0.0
    %119 = vmatpush1.msra.mxu0 0.0
    %120 = vmatprep.subr.mxu0 0.0
    %121 = vmatpush1.msra.mxu0 0.0
    %122 = vmatprep.subr.mxu0 0.0
    %123 = vmatpush1.msra.mxu0 0.0
    %124 = vmatprep.subr.mxu0 0.0
    %125 = vmatpush1.msra.mxu0 0.0
    %126 = vmatprep.subr.mxu0 0.0
    %127 = vmatpush1.msra.mxu0 0.0
    %128 = vmatprep.subr.mxu0 0.0
    %129 = vmatpush1.msra.mxu0 0.0
    %130 = vmatprep.subr.mxu0 0.0
    %131 = vmatpush1.msra.mxu0 0.0
    %132 = vmatprep.subr.mxu0 0.0
    %133 = vmatpush1.msra.mxu0 0.0
    %134 = vmatprep.subr.mxu0 0.0
    %135 = vmatpush1.msra.mxu0 0.0
    %136 = vmatprep.subr.mxu0 0.0
    %137 = vmatpush1.msra.mxu0 0.0
    %138 = vmatprep.subr.mxu0 0.0
    %139 = vmatpush1.msra.mxu0 0.0
    %140 = vmatprep.subr.mxu0 0.0
    %141 = vmatpush1.msra.mxu0 0.0
    %142 = vmatprep.mubr.f32.mxu0 0.0
    %143 = vmatmul.mubr.f32.gmra.mrb[0].mxu0 %v69
    %v144 = vpop.f32.mrb[0].mxu0
    %v145 = vadd.f32 0.0, %v144
    %v146 = vpop.f32.mrb[0].mxu0
    %147 = vmatprep.mubr.f32.mxu0 0.0
    %148 = vmatmul.mubr.f32.gmra.mrb[0].mxu0 %v72
    %v149 = vpop.f32.mrb[0].mxu0
    %v150 = vadd.f32 0.0, %v149
    %v151 = vpop.f32.mrb[0].mxu0
    %152 = vdwg.mxu0
    %v153 = vld [vmem:[%s2] sm:$0xff]
    %v154 = vld [vmem:[%s2 + $0x8] sm:$0xff]
    %v155 = vld [vmem:[%s2 + $0x10] sm:$0xff]
    %v156 = vld [vmem:[%s2 + $0x18] sm:$0xff]
    %v157 = vld [vmem:[%s3] sm:$0x1]
    %v159 = vlaneseq
    %v160 = vshrl.u32 %v159, 7
    %v161 = vsub.s32 0, %v160
    %v162 = vrot.slane %v157, %v161
    %vm164 = vcmask 261120
    %v166 = vsel %vm164, %v145, 0
    %v169 = vsel %vm164, %v150, 0
    %171 = vmatprep.subr.mxu0 0.0
    %172 = vmatpush1.msra.mxu0 %v153
    %173 = vmatprep.subr.mxu0 0.0
    %174 = vmatpush1.msra.mxu0 %v154
    %175 = vmatprep.subr.mxu0 0.0
    %176 = vmatpush1.msra.mxu0 %v155
    %177 = vmatprep.subr.mxu0 0.0
    %178 = vmatpush1.msra.mxu0 %v156
    %179 = vmatprep.subr.mxu0 0.0
    %180 = vmatpush1.msra.mxu0 0.0
    %181 = vmatprep.subr.mxu0 0.0
    %182 = vmatpush1.msra.mxu0 0.0
    %183 = vmatprep.subr.mxu0 0.0
    %184 = vmatpush1.msra.mxu0 0.0
    %185 = vmatprep.subr.mxu0 0.0
    %186 = vmatpush1.msra.mxu0 0.0
    %187 = vmatprep.subr.mxu0 0.0
    %188 = vmatpush1.msra.mxu0 0.0
    %189 = vmatprep.subr.mxu0 0.0
    %190 = vmatpush1.msra.mxu0 0.0
    %191 = vmatprep.subr.mxu0 0.0
    %192 = vmatpush1.msra.mxu0 0.0
    %193 = vmatprep.subr.mxu0 0.0
    %194 = vmatpush1.msra.mxu0 0.0
    %195 = vmatprep.subr.mxu0 0.0
    %196 = vmatpush1.msra.mxu0 0.0
    %197 = vmatprep.subr.mxu0 0.0
    %198 = vmatpush1.msra.mxu0 0.0
    %199 = vmatprep.subr.mxu0 0.0
    %200 = vmatpush1.msra.mxu0 0.0
    %201 = vmatprep.subr.mxu0 0.0
    %202 = vmatpush1.msra.mxu0 0.0
    %203 = vmatprep.subr.mxu0 0.0
    %204 = vmatpush1.msra.mxu0 0.0
    %205 = vmatprep.subr.mxu0 0.0
    %206 = vmatpush1.msra.mxu0 0.0
    %207 = vmatprep.subr.mxu0 0.0
    %208 = vmatpush1.msra.mxu0 0.0
    %209 = vmatprep.subr.mxu0 0.0
    %210 = vmatpush1.msra.mxu0 0.0
    %211 = vmatprep.subr.mxu0 0.0
    %212 = vmatpush1.msra.mxu0 0.0
    %213 = vmatprep.subr.mxu0 0.0
    %214 = vmatpush1.msra.mxu0 0.0
    %215 = vmatprep.subr.mxu0 0.0
    %216 = vmatpush1.msra.mxu0 0.0
    %217 = vmatprep.subr.mxu0 0.0
    %218 = vmatpush1.msra.mxu0 0.0
    %219 = vmatprep.subr.mxu0 0.0
    %220 = vmatpush1.msra.mxu0 0.0
    %221 = vmatprep.subr.mxu0 0.0
    %222 = vmatpush1.msra.mxu0 0.0
    %223 = vmatprep.subr.mxu0 0.0
    %224 = vmatpush1.msra.mxu0 0.0
    %225 = vmatprep.subr.mxu0 0.0
    %226 = vmatpush1.msra.mxu0 0.0
    %227 = vmatprep.subr.mxu0 0.0
    %228 = vmatpush1.msra.mxu0 0.0
    %229 = vmatprep.subr.mxu0 0.0
    %230 = vmatpush1.msra.mxu0 0.0
    %231 = vmatprep.subr.mxu0 0.0
    %232 = vmatpush1.msra.mxu0 0.0
    %233 = vmatprep.subr.mxu0 0.0
    %234 = vmatpush1.msra.mxu0 0.0
    %235 = vmatprep.mubr.f32.mxu0 0.0
    %236 = vmatmul.mubr.f32.gmra.mrb[0].mxu0 %v166
    %v237 = vpop.f32.mrb[0].mxu0
    %v238 = vadd.f32 %v162, %v237
    %v239 = vpop.f32.mrb[0].mxu0
    %240 = vmatprep.mubr.f32.mxu0 0.0
    %241 = vmatmul.mubr.f32.gmra.mrb[0].mxu0 %v169
    %v242 = vpop.f32.mrb[0].mxu0
    %v243 = vadd.f32 %v162, %v242
    %v244 = vpop.f32.mrb[0].mxu0
    %245 = vdwg.mxu0
    %v246 = vld [vmem:[%s4] sm:$0xff]
    %v247 = vld [vmem:[%s4 + $0x8] sm:$0xff]
    %v248 = vld [vmem:[%s5] sm:$0xff]
    %v249 = vld [vmem:[%s5 + $0x8] sm:$0xff]
    %vm250 = vcmask 130048
    %v252 = vsel %vm250, 0.0, 0
    %254 = vmatprep.subr.mxu0 0.0
    %255 = vmatpush1.msra.mxu0 %v246
    %256 = vmatprep.subr.mxu0 0.0
    %257 = vmatpush1.msra.mxu0 %v247
    %258 = vmatprep.subr.mxu0 0.0
    %259 = vmatpush1.msra.mxu0 0.0
    %260 = vmatprep.subr.mxu0 0.0
    %261 = vmatpush1.msra.mxu0 0.0
    %262 = vmatprep.subr.mxu0 0.0
    %263 = vmatpush1.msra.mxu0 0.0
    %264 = vmatprep.subr.mxu0 0.0
    %265 = vmatpush1.msra.mxu0 0.0
    %266 = vmatprep.subr.mxu0 0.0
    %267 = vmatpush1.msra.mxu0 0.0
    %268 = vmatprep.subr.mxu0 0.0
    %269 = vmatpush1.msra.mxu0 0.0
    %270 = vmatprep.subr.mxu0 0.0
    %271 = vmatpush1.msra.mxu0 0.0
    %272 = vmatprep.subr.mxu0 0.0
    %273 = vmatpush1.msra.mxu0 0.0
    %274 = vmatprep.subr.mxu0 0.0
    %275 = vmatpush1.msra.mxu0 0.0
    %276 = vmatprep.subr.mxu0 0.0
    %277 = vmatpush1.msra.mxu0 0.0
    %278 = vmatprep.subr.mxu0 0.0
    %279 = vmatpush1.msra.mxu0 0.0
    %280 = vmatprep.subr.mxu0 0.0
    %281 = vmatpush1.msra.mxu0 0.0
    %282 = vmatprep.subr.mxu0 0.0
    %283 = vmatpush1.msra.mxu0 0.0
    %284 = vmatprep.subr.mxu0 0.0
    %285 = vmatpush1.msra.mxu0 0.0
    %286 = vmatprep.subr.mxu0 0.0
    %287 = vmatpush1.msra.mxu0 0.0
    %288 = vmatprep.subr.mxu0 0.0
    %289 = vmatpush1.msra.mxu0 0.0
    %290 = vmatprep.subr.mxu0 0.0
    %291 = vmatpush1.msra.mxu0 0.0
    %292 = vmatprep.subr.mxu0 0.0
    %293 = vmatpush1.msra.mxu0 0.0
    %294 = vmatprep.subr.mxu0 0.0
    %295 = vmatpush1.msra.mxu0 0.0
    %296 = vmatprep.subr.mxu0 0.0
    %297 = vmatpush1.msra.mxu0 0.0
    %298 = vmatprep.subr.mxu0 0.0
    %299 = vmatpush1.msra.mxu0 0.0
    %300 = vmatprep.subr.mxu0 0.0
    %301 = vmatpush1.msra.mxu0 0.0
    %302 = vmatprep.subr.mxu0 0.0
    %303 = vmatpush1.msra.mxu0 0.0
    %304 = vmatprep.subr.mxu0 0.0
    %305 = vmatpush1.msra.mxu0 0.0
    %306 = vmatprep.subr.mxu0 0.0
    %307 = vmatpush1.msra.mxu0 0.0
    %308 = vmatprep.subr.mxu0 0.0
    %309 = vmatpush1.msra.mxu0 0.0
    %310 = vmatprep.subr.mxu0 0.0
    %311 = vmatpush1.msra.mxu0 0.0
    %312 = vmatprep.subr.mxu0 0.0
    %313 = vmatpush1.msra.mxu0 0.0
    %314 = vmatprep.subr.mxu0 0.0
    %315 = vmatpush1.msra.mxu0 0.0
    %316 = vmatprep.subr.mxu0 0.0
    %317 = vmatpush1.msra.mxu0 0.0
    %318 = vmatprep.mubr.f32.mxu0 0.0
    %319 = vmatmul.mubr.f32.gmra.mrb[0].mxu0 %v252
    %v320 = vpop.f32.mrb[0].mxu0
    %v321 = vadd.f32 0.0, %v320
    %v322 = vpop.f32.mrb[0].mxu0
    %323 = vdwg.mxu0
    %v324 = vadd.f32 %v238, %v321
    %v325 = vmul.f32 %v324, 0.5
    %v326 = vtanh.pop %v325
    %v327 = vadd.f32 %v326, 1.0
    %v328 = vmul.f32 %v327, 0.5
    %v329 = vtanh.pop %v324
    %v330 = vmul.f32 %v328, 0.0
    %332 = vrot.lane.b32.xlu0 %v329, 96
    %v333 = vpop.permute.xlu0 %332
    %v335 = vmul.f32 %v328, %v333
    %337 = vrot.lane.b32.xlu0 %v335, 16
    %v338 = vpop.permute.xlu0 %337
    %v340 = vadd.f32 %v330, %v338
    %v341 = vtanh.pop %v340
    %343 = vrot.lane.b32.xlu0 %v341, 32
    %v344 = vpop.permute.xlu0 %343
    %v346 = vmul.f32 %v328, %v344
    %348 = vrot.lane.b32.xlu0 %v346, 80
    %v349 = vpop.permute.xlu0 %348
    %vm351 = vcmask 123904
    %352 = vst.msk [vmem:[#allocation2] sm:$0x3] %vm351, %v349
    %v353 = vsel %vm250, %v349, 0
    %355 = vmatprep.subr.mxu0 0.0
    %356 = vmatpush1.msra.mxu0 %v246
    %357 = vmatprep.subr.mxu0 0.0
    %358 = vmatpush1.msra.mxu0 %v247
    %359 = vmatprep.subr.mxu0 0.0
    %360 = vmatpush1.msra.mxu0 0.0
    %361 = vmatprep.subr.mxu0 0.0
    %362 = vmatpush1.msra.mxu0 0.0
    %363 = vmatprep.subr.mxu0 0.0
    %364 = vmatpush1.msra.mxu0 0.0
    %365 = vmatprep.subr.mxu0 0.0
    %366 = vmatpush1.msra.mxu0 0.0
    %367 = vmatprep.subr.mxu0 0.0
    %368 = vmatpush1.msra.mxu0 0.0
    %369 = vmatprep.subr.mxu0 0.0
    %370 = vmatpush1.msra.mxu0 0.0
    %371 = vmatprep.subr.mxu0 0.0
    %372 = vmatpush1.msra.mxu0 0.0
    %373 = vmatprep.subr.mxu0 0.0
    %374 = vmatpush1.msra.mxu0 0.0
    %375 = vmatprep.subr.mxu0 0.0
    %376 = vmatpush1.msra.mxu0 0.0
    %377 = vmatprep.subr.mxu0 0.0
    %378 = vmatpush1.msra.mxu0 0.0
    %379 = vmatprep.subr.mxu0 0.0
    %380 = vmatpush1.msra.mxu0 0.0
    %381 = vmatprep.subr.mxu0 0.0
    %382 = vmatpush1.msra.mxu0 0.0
    %383 = vmatprep.subr.mxu0 0.0
    %384 = vmatpush1.msra.mxu0 0.0
    %385 = vmatprep.subr.mxu0 0.0
    %386 = vmatpush1.msra.mxu0 0.0
    %387 = vmatprep.subr.mxu0 0.0
    %388 = vmatpush1.msra.mxu0 0.0
    %389 = vmatprep.subr.mxu0 0.0
    %390 = vmatpush1.msra.mxu0 0.0
    %391 = vmatprep.subr.mxu0 0.0
    %392 = vmatpush1.msra.mxu0 0.0
    %393 = vmatprep.subr.mxu0 0.0
    %394 = vmatpush1.msra.mxu0 0.0
    %395 = vmatprep.subr.mxu0 0.0
    %396 = vmatpush1.msra.mxu0 0.0
    %397 = vmatprep.subr.mxu0 0.0
    %398 = vmatpush1.msra.mxu0 0.0
    %399 = vmatprep.subr.mxu0 0.0
    %400 = vmatpush1.msra.mxu0 0.0
    %401 = vmatprep.subr.mxu0 0.0
    %402 = vmatpush1.msra.mxu0 0.0
    %403 = vmatprep.subr.mxu0 0.0
    %404 = vmatpush1.msra.mxu0 0.0
    %405 = vmatprep.subr.mxu0 0.0
    %406 = vmatpush1.msra.mxu0 0.0
    %407 = vmatprep.subr.mxu0 0.0
    %408 = vmatpush1.msra.mxu0 0.0
    %409 = vmatprep.subr.mxu0 0.0
    %410 = vmatpush1.msra.mxu0 0.0
    %411 = vmatprep.subr.mxu0 0.0
    %412 = vmatpush1.msra.mxu0 0.0
    %413 = vmatprep.subr.mxu0 0.0
    %414 = vmatpush1.msra.mxu0 0.0
    %415 = vmatprep.subr.mxu0 0.0
    %416 = vmatpush1.msra.mxu0 0.0
    %417 = vmatprep.subr.mxu0 0.0
    %418 = vmatpush1.msra.mxu0 0.0
    %419 = vmatprep.mubr.f32.mxu0 0.0
    %420 = vmatmul.mubr.f32.gmra.mrb[0].mxu0 %v353
    %v421 = vpop.f32.mrb[0].mxu0
    %v422 = vadd.f32 0.0, %v421
    %v423 = vpop.f32.mrb[0].mxu0
    %424 = vdwg.mxu0
    %v426 = vrot.slane %v422, 6
    %v428 = vadd.f32 %v238, %v426
    %v429 = vmul.f32 %v428, 0.5
    %v430 = vtanh.pop %v429
    %v431 = vadd.f32 %v430, 1.0
    %v432 = vmul.f32 %v431, 0.5
    %v433 = vtanh.pop %v428
    %v435 = vrot.slane %v340, 6
    %v437 = vmul.f32 %v432, %v435
    %439 = vrot.lane.b32.xlu0 %v433, 96
    %v440 = vpop.permute.xlu0 %439
    %v442 = vmul.f32 %v432, %v440
    %444 = vrot.lane.b32.xlu0 %v442, 16
    %v445 = vpop.permute.xlu0 %444
    %v447 = vadd.f32 %v437, %v445
    %v448 = vtanh.pop %v447
    %450 = vrot.lane.b32.xlu0 %v448, 32
    %v451 = vpop.permute.xlu0 %450
    %v453 = vmul.f32 %v432, %v451
    %455 = vrot.lane.b32.xlu0 %v453, 80
    %v456 = vpop.permute.xlu0 %455
    %vm458 = vcmask 125954
    %459 = vst.msk [vmem:[#allocation2] sm:$0xc] %vm458, %v456
    %v460 = vrot.slane %v453, 2
    %461 = vrot.lane.b32.xlu0 %v460, 80
    %v462 = vpop.permute.xlu0 %461
    %v463 = vsel %vm250, %v462, 0
    %465 = vmatprep.subr.mxu0 0.0
    %466 = vmatpush1.msra.mxu0 %v246
    %467 = vmatprep.subr.mxu0 0.0
    %468 = vmatpush1.msra.mxu0 %v247
    %469 = vmatprep.subr.mxu0 0.0
    %470 = vmatpush1.msra.mxu0 0.0
    %471 = vmatprep.subr.mxu0 0.0
    %472 = vmatpush1.msra.mxu0 0.0
    %473 = vmatprep.subr.mxu0 0.0
    %474 = vmatpush1.msra.mxu0 0.0
    %475 = vmatprep.subr.mxu0 0.0
    %476 = vmatpush1.msra.mxu0 0.0
    %477 = vmatprep.subr.mxu0 0.0
    %478 = vmatpush1.msra.mxu0 0.0
    %479 = vmatprep.subr.mxu0 0.0
    %480 = vmatpush1.msra.mxu0 0.0
    %481 = vmatprep.subr.mxu0 0.0
    %482 = vmatpush1.msra.mxu0 0.0
    %483 = vmatprep.subr.mxu0 0.0
    %484 = vmatpush1.msra.mxu0 0.0
    %485 = vmatprep.subr.mxu0 0.0
    %486 = vmatpush1.msra.mxu0 0.0
    %487 = vmatprep.subr.mxu0 0.0
    %488 = vmatpush1.msra.mxu0 0.0
    %489 = vmatprep.subr.mxu0 0.0
    %490 = vmatpush1.msra.mxu0 0.0
    %491 = vmatprep.subr.mxu0 0.0
    %492 = vmatpush1.msra.mxu0 0.0
    %493 = vmatprep.subr.mxu0 0.0
    %494 = vmatpush1.msra.mxu0 0.0
    %495 = vmatprep.subr.mxu0 0.0
    %496 = vmatpush1.msra.mxu0 0.0
    %497 = vmatprep.subr.mxu0 0.0
    %498 = vmatpush1.msra.mxu0 0.0
    %499 = vmatprep.subr.mxu0 0.0
    %500 = vmatpush1.msra.mxu0 0.0
    %501 = vmatprep.subr.mxu0 0.0
    %502 = vmatpush1.msra.mxu0 0.0
    %503 = vmatprep.subr.mxu0 0.0
    %504 = vmatpush1.msra.mxu0 0.0
    %505 = vmatprep.subr.mxu0 0.0
    %506 = vmatpush1.msra.mxu0 0.0
    %507 = vmatprep.subr.mxu0 0.0
    %508 = vmatpush1.msra.mxu0 0.0
    %509 = vmatprep.subr.mxu0 0.0
    %510 = vmatpush1.msra.mxu0 0.0
    %511 = vmatprep.subr.mxu0 0.0
    %512 = vmatpush1.msra.mxu0 0.0
    %513 = vmatprep.subr.mxu0 0.0
    %514 = vmatpush1.msra.mxu0 0.0
    %515 = vmatprep.subr.mxu0 0.0
    %516 = vmatpush1.msra.mxu0 0.0
    %517 = vmatprep.subr.mxu0 0.0
    %518 = vmatpush1.msra.mxu0 0.0
    %519 = vmatprep.subr.mxu0 0.0
    %520 = vmatpush1.msra.mxu0 0.0
    %521 = vmatprep.subr.mxu0 0.0
    %522 = vmatpush1.msra.mxu0 0.0
    %523 = vmatprep.subr.mxu0 0.0
    %524 = vmatpush1.msra.mxu0 0.0
    %525 = vmatprep.subr.mxu0 0.0
    %526 = vmatpush1.msra.mxu0 0.0
    %527 = vmatprep.subr.mxu0 0.0
    %528 = vmatpush1.msra.mxu0 0.0
    %529 = vmatprep.mubr.f32.mxu0 0.0
    %530 = vmatmul.mubr.f32.gmra.mrb[0].mxu0 %v463
    %v531 = vpop.f32.mrb[0].mxu0
    %v532 = vadd.f32 0.0, %v531
    %v533 = vpop.f32.mrb[0].mxu0
    %534 = vdwg.mxu0
    %v536 = vrot.slane %v532, 4
    %v538 = vadd.f32 %v238, %v536
    %v539 = vmul.f32 %v538, 0.5
    %v540 = vtanh.pop %v539
    %v541 = vadd.f32 %v540, 1.0
    %v542 = vmul.f32 %v541, 0.5
    %v543 = vtanh.pop %v538
    %v545 = vrot.slane %v447, 6
    %v547 = vmul.f32 %v542, %v545
    %549 = vrot.lane.b32.xlu0 %v543, 96
    %v550 = vpop.permute.xlu0 %549
    %v552 = vmul.f32 %v542, %v550
    %554 = vrot.lane.b32.xlu0 %v552, 16
    %v555 = vpop.permute.xlu0 %554
    %v557 = vadd.f32 %v547, %v555
    %v558 = vtanh.pop %v557
    %560 = vrot.lane.b32.xlu0 %v558, 32
    %v561 = vpop.permute.xlu0 %560
    %v563 = vmul.f32 %v542, %v561
    %565 = vrot.lane.b32.xlu0 %v563, 80
    %v566 = vpop.permute.xlu0 %565
    %vm568 = vcmask 128004
    %569 = vst.msk [vmem:[#allocation2] sm:$0x30] %vm568, %v566
    %v570 = vrot.slane %v563, 4
    %571 = vrot.lane.b32.xlu0 %v570, 80
    %v572 = vpop.permute.xlu0 %571
    %v573 = vsel %vm250, %v572, 0
    %575 = vmatprep.subr.mxu0 0.0
    %576 = vmatpush1.msra.mxu0 %v246
    %577 = vmatprep.subr.mxu0 0.0
    %578 = vmatpush1.msra.mxu0 %v247
    %579 = vmatprep.subr.mxu0 0.0
    %580 = vmatpush1.msra.mxu0 0.0
    %581 = vmatprep.subr.mxu0 0.0
    %582 = vmatpush1.msra.mxu0 0.0
    %583 = vmatprep.subr.mxu0 0.0
    %584 = vmatpush1.msra.mxu0 0.0
    %585 = vmatprep.subr.mxu0 0.0
    %586 = vmatpush1.msra.mxu0 0.0
    %587 = vmatprep.subr.mxu0 0.0
    %588 = vmatpush1.msra.mxu0 0.0
    %589 = vmatprep.subr.mxu0 0.0
    %590 = vmatpush1.msra.mxu0 0.0
    %591 = vmatprep.subr.mxu0 0.0
    %592 = vmatpush1.msra.mxu0 0.0
    %593 = vmatprep.subr.mxu0 0.0
    %594 = vmatpush1.msra.mxu0 0.0
    %595 = vmatprep.subr.mxu0 0.0
    %596 = vmatpush1.msra.mxu0 0.0
    %597 = vmatprep.subr.mxu0 0.0
    %598 = vmatpush1.msra.mxu0 0.0
    %599 = vmatprep.subr.mxu0 0.0
    %600 = vmatpush1.msra.mxu0 0.0
    %601 = vmatprep.subr.mxu0 0.0
    %602 = vmatpush1.msra.mxu0 0.0
    %603 = vmatprep.subr.mxu0 0.0
    %604 = vmatpush1.msra.mxu0 0.0
    %605 = vmatprep.subr.mxu0 0.0
    %606 = vmatpush1.msra.mxu0 0.0
    %607 = vmatprep.subr.mxu0 0.0
    %608 = vmatpush1.msra.mxu0 0.0
    %609 = vmatprep.subr.mxu0 0.0
    %610 = vmatpush1.msra.mxu0 0.0
    %611 = vmatprep.subr.mxu0 0.0
    %612 = vmatpush1.msra.mxu0 0.0
    %613 = vmatprep.subr.mxu0 0.0
    %614 = vmatpush1.msra.mxu0 0.0
    %615 = vmatprep.subr.mxu0 0.0
    %616 = vmatpush1.msra.mxu0 0.0
    %617 = vmatprep.subr.mxu0 0.0
    %618 = vmatpush1.msra.mxu0 0.0
    %619 = vmatprep.subr.mxu0 0.0
    %620 = vmatpush1.msra.mxu0 0.0
    %621 = vmatprep.subr.mxu0 0.0
    %622 = vmatpush1.msra.mxu0 0.0
    %623 = vmatprep.subr.mxu0 0.0
    %624 = vmatpush1.msra.mxu0 0.0
    %625 = vmatprep.subr.mxu0 0.0
    %626 = vmatpush1.msra.mxu0 0.0
    %627 = vmatprep.subr.mxu0 0.0
    %628 = vmatpush1.msra.mxu0 0.0
    %629 = vmatprep.subr.mxu0 0.0
    %630 = vmatpush1.msra.mxu0 0.0
    %631 = vmatprep.subr.mxu0 0.0
    %632 = vmatpush1.msra.mxu0 0.0
    %633 = vmatprep.subr.mxu0 0.0
    %634 = vmatpush1.msra.mxu0 0.0
    %635 = vmatprep.subr.mxu0 0.0
    %636 = vmatpush1.msra.mxu0 0.0
    %637 = vmatprep.subr.mxu0 0.0
    %638 = vmatpush1.msra.mxu0 0.0
    %639 = vmatprep.mubr.f32.mxu0 0.0
    %640 = vmatmul.mubr.f32.gmra.mrb[0].mxu0 %v573
    %v641 = vpop.f32.mrb[0].mxu0
    %v642 = vadd.f32 0.0, %v641
    %v643 = vpop.f32.mrb[0].mxu0
    %644 = vdwg.mxu0
    %v646 = vrot.slane %v642, 2
    %v648 = vadd.f32 %v238, %v646
    %v649 = vmul.f32 %v648, 0.5
    %v650 = vtanh.pop %v649
    %v651 = vadd.f32 %v650, 1.0
    %v652 = vmul.f32 %v651, 0.5
    %v653 = vtanh.pop %v648
    %v655 = vrot.slane %v557, 6
    %v657 = vmul.f32 %v652, %v655
    %659 = vrot.lane.b32.xlu0 %v653, 96
    %v660 = vpop.permute.xlu0 %659
    %v662 = vmul.f32 %v652, %v660
    %664 = vrot.lane.b32.xlu0 %v662, 16
    %v665 = vpop.permute.xlu0 %664
    %v667 = vadd.f32 %v657, %v665
    %v668 = vtanh.pop %v667
    %670 = vrot.lane.b32.xlu0 %v668, 32
    %v671 = vpop.permute.xlu0 %670
    %v673 = vmul.f32 %v652, %v671
    %675 = vrot.lane.b32.xlu0 %v673, 80
    %v676 = vpop.permute.xlu0 %675
    %vm678 = vcmask 130054
    %679 = vst.msk [vmem:[#allocation2] sm:$0xc0] %vm678, %v676
    %v680 = vrot.slane %v673, 6
    %681 = vrot.lane.b32.xlu0 %v680, 80
    %v682 = vpop.permute.xlu0 %681
    %v683 = vsel %vm250, %v682, 0
    %685 = vmatprep.subr.mxu0 0.0
    %686 = vmatpush1.msra.mxu0 %v246
    %687 = vmatprep.subr.mxu0 0.0
    %688 = vmatpush1.msra.mxu0 %v247
    %689 = vmatprep.subr.mxu0 0.0
    %690 = vmatpush1.msra.mxu0 0.0
    %691 = vmatprep.subr.mxu0 0.0
    %692 = vmatpush1.msra.mxu0 0.0
    %693 = vmatprep.subr.mxu0 0.0
    %694 = vmatpush1.msra.mxu0 0.0
    %695 = vmatprep.subr.mxu0 0.0
    %696 = vmatpush1.msra.mxu0 0.0
    %697 = vmatprep.subr.mxu0 0.0
    %698 = vmatpush1.msra.mxu0 0.0
    %699 = vmatprep.subr.mxu0 0.0
    %700 = vmatpush1.msra.mxu0 0.0
    %701 = vmatprep.subr.mxu0 0.0
    %702 = vmatpush1.msra.mxu0 0.0
    %703 = vmatprep.subr.mxu0 0.0
    %704 = vmatpush1.msra.mxu0 0.0
    %705 = vmatprep.subr.mxu0 0.0
    %706 = vmatpush1.msra.mxu0 0.0
    %707 = vmatprep.subr.mxu0 0.0
    %708 = vmatpush1.msra.mxu0 0.0
    %709 = vmatprep.subr.mxu0 0.0
    %710 = vmatpush1.msra.mxu0 0.0
    %711 = vmatprep.subr.mxu0 0.0
    %712 = vmatpush1.msra.mxu0 0.0
    %713 = vmatprep.subr.mxu0 0.0
    %714 = vmatpush1.msra.mxu0 0.0
    %715 = vmatprep.subr.mxu0 0.0
    %716 = vmatpush1.msra.mxu0 0.0
    %717 = vmatprep.subr.mxu0 0.0
    %718 = vmatpush1.msra.mxu0 0.0
    %719 = vmatprep.subr.mxu0 0.0
    %720 = vmatpush1.msra.mxu0 0.0
    %721 = vmatprep.subr.mxu0 0.0
    %722 = vmatpush1.msra.mxu0 0.0
    %723 = vmatprep.subr.mxu0 0.0
    %724 = vmatpush1.msra.mxu0 0.0
    %725 = vmatprep.subr.mxu0 0.0
    %726 = vmatpush1.msra.mxu0 0.0
    %727 = vmatprep.subr.mxu0 0.0
    %728 = vmatpush1.msra.mxu0 0.0
    %729 = vmatprep.subr.mxu0 0.0
    %730 = vmatpush1.msra.mxu0 0.0
    %731 = vmatprep.subr.mxu0 0.0
    %732 = vmatpush1.msra.mxu0 0.0
    %733 = vmatprep.subr.mxu0 0.0
    %734 = vmatpush1.msra.mxu0 0.0
    %735 = vmatprep.subr.mxu0 0.0
    %736 = vmatpush1.msra.mxu0 0.0
    %737 = vmatprep.subr.mxu0 0.0
    %738 = vmatpush1.msra.mxu0 0.0
    %739 = vmatprep.subr.mxu0 0.0
    %740 = vmatpush1.msra.mxu0 0.0
    %741 = vmatprep.subr.mxu0 0.0
    %742 = vmatpush1.msra.mxu0 0.0
    %743 = vmatprep.subr.mxu0 0.0
    %744 = vmatpush1.msra.mxu0 0.0
    %745 = vmatprep.subr.mxu0 0.0
    %746 = vmatpush1.msra.mxu0 0.0
    %747 = vmatprep.subr.mxu0 0.0
    %748 = vmatpush1.msra.mxu0 0.0
    %749 = vmatprep.mubr.f32.mxu0 0.0
    %750 = vmatmul.mubr.f32.gmra.mrb[0].mxu0 %v683
    %v751 = vpop.f32.mrb[0].mxu0
    %v752 = vadd.f32 0.0, %v751
    %v753 = vpop.f32.mrb[0].mxu0
    %754 = vdwg.mxu0
    %v755 = vadd.f32 %v243, %v752
    %v756 = vmul.f32 %v755, 0.5
    %v757 = vtanh.pop %v756
    %v758 = vadd.f32 %v757, 1.0
    %v759 = vmul.f32 %v758, 0.5
    %v760 = vtanh.pop %v755
    %v762 = vrot.slane %v667, 6
    %v764 = vmul.f32 %v759, %v762
    %766 = vrot.lane.b32.xlu0 %v760, 96
    %v767 = vpop.permute.xlu0 %766
    %v769 = vmul.f32 %v759, %v767
    %771 = vrot.lane.b32.xlu0 %v769, 16
    %v772 = vpop.permute.xlu0 %771
    %v774 = vadd.f32 %v764, %v772
    %v775 = vtanh.pop %v774
    %777 = vrot.lane.b32.xlu0 %v775, 32
    %v778 = vpop.permute.xlu0 %777
    %v780 = vmul.f32 %v759, %v778
    %782 = vrot.lane.b32.xlu0 %v780, 80
    %v783 = vpop.permute.xlu0 %782
    %785 = vst.msk [vmem:[#allocation2 + $0x8] sm:$0x3] %vm351, %v783
    %v786 = vsel %vm250, %v783, 0
    %788 = vmatprep.subr.mxu0 0.0
    %789 = vmatpush1.msra.mxu0 %v246
    %790 = vmatprep.subr.mxu0 0.0
    %791 = vmatpush1.msra.mxu0 %v247
    %792 = vmatprep.subr.mxu0 0.0
    %793 = vmatpush1.msra.mxu0 0.0
    %794 = vmatprep.subr.mxu0 0.0
    %795 = vmatpush1.msra.mxu0 0.0
    %796 = vmatprep.subr.mxu0 0.0
    %797 = vmatpush1.msra.mxu0 0.0
    %798 = vmatprep.subr.mxu0 0.0
    %799 = vmatpush1.msra.mxu0 0.0
    %800 = vmatprep.subr.mxu0 0.0
    %801 = vmatpush1.msra.mxu0 0.0
    %802 = vmatprep.subr.mxu0 0.0
    %803 = vmatpush1.msra.mxu0 0.0
    %804 = vmatprep.subr.mxu0 0.0
    %805 = vmatpush1.msra.mxu0 0.0
    %806 = vmatprep.subr.mxu0 0.0
    %807 = vmatpush1.msra.mxu0 0.0
    %808 = vmatprep.subr.mxu0 0.0
    %809 = vmatpush1.msra.mxu0 0.0
    %810 = vmatprep.subr.mxu0 0.0
    %811 = vmatpush1.msra.mxu0 0.0
    %812 = vmatprep.subr.mxu0 0.0
    %813 = vmatpush1.msra.mxu0 0.0
    %814 = vmatprep.subr.mxu0 0.0
    %815 = vmatpush1.msra.mxu0 0.0
    %816 = vmatprep.subr.mxu0 0.0
    %817 = vmatpush1.msra.mxu0 0.0
    %818 = vmatprep.subr.mxu0 0.0
    %819 = vmatpush1.msra.mxu0 0.0
    %820 = vmatprep.subr.mxu0 0.0
    %821 = vmatpush1.msra.mxu0 0.0
    %822 = vmatprep.subr.mxu0 0.0
    %823 = vmatpush1.msra.mxu0 0.0
    %824 = vmatprep.subr.mxu0 0.0
    %825 = vmatpush1.msra.mxu0 0.0
    %826 = vmatprep.subr.mxu0 0.0
    %827 = vmatpush1.msra.mxu0 0.0
    %828 = vmatprep.subr.mxu0 0.0
    %829 = vmatpush1.msra.mxu0 0.0
    %830 = vmatprep.subr.mxu0 0.0
    %831 = vmatpush1.msra.mxu0 0.0
    %832 = vmatprep.subr.mxu0 0.0
    %833 = vmatpush1.msra.mxu0 0.0
    %834 = vmatprep.subr.mxu0 0.0
    %835 = vmatpush1.msra.mxu0 0.0
    %836 = vmatprep.subr.mxu0 0.0
    %837 = vmatpush1.msra.mxu0 0.0
    %838 = vmatprep.subr.mxu0 0.0
    %839 = vmatpush1.msra.mxu0 0.0
    %840 = vmatprep.subr.mxu0 0.0
    %841 = vmatpush1.msra.mxu0 0.0
    %842 = vmatprep.subr.mxu0 0.0
    %843 = vmatpush1.msra.mxu0 0.0
    %844 = vmatprep.subr.mxu0 0.0
    %845 = vmatpush1.msra.mxu0 0.0
    %846 = vmatprep.subr.mxu0 0.0
    %847 = vmatpush1.msra.mxu0 0.0
    %848 = vmatprep.subr.mxu0 0.0
    %849 = vmatpush1.msra.mxu0 0.0
    %850 = vmatprep.subr.mxu0 0.0
    %851 = vmatpush1.msra.mxu0 0.0
    %852 = vmatprep.mubr.f32.mxu0 0.0
    %853 = vmatmul.mubr.f32.gmra.mrb[0].mxu0 %v786
    %v854 = vpop.f32.mrb[0].mxu0
    %v855 = vadd.f32 0.0, %v854
    %v856 = vpop.f32.mrb[0].mxu0
    %857 = vdwg.mxu0
    %v859 = vrot.slane %v855, 6
    %v861 = vadd.f32 %v243, %v859
    %v862 = vmul.f32 %v861, 0.5
    %v863 = vtanh.pop %v862
    %v864 = vadd.f32 %v863, 1.0
    %v865 = vmul.f32 %v864, 0.5
    %v866 = vtanh.pop %v861
    %v868 = vrot.slane %v774, 6
    %v870 = vmul.f32 %v865, %v868
    %872 = vrot.lane.b32.xlu0 %v866, 96
    %v873 = vpop.permute.xlu0 %872
    %v875 = vmul.f32 %v865, %v873
    %877 = vrot.lane.b32.xlu0 %v875, 16
    %v878 = vpop.permute.xlu0 %877
    %v880 = vadd.f32 %v870, %v878
    %v881 = vtanh.pop %v880
    %883 = vrot.lane.b32.xlu0 %v881, 32
    %v884 = vpop.permute.xlu0 %883
    %v886 = vmul.f32 %v865, %v884
    %888 = vrot.lane.b32.xlu0 %v886, 80
    %v889 = vpop.permute.xlu0 %888
    %891 = vst.msk [vmem:[#allocation2 + $0x8] sm:$0xc] %vm458, %v889
    %v892 = vrot.slane %v886, 2
    %893 = vrot.lane.b32.xlu0 %v892, 80
    %v894 = vpop.permute.xlu0 %893
    %v895 = vsel %vm250, %v894, 0
    %897 = vmatprep.subr.mxu0 0.0
    %898 = vmatpush1.msra.mxu0 %v246
    %899 = vmatprep.subr.mxu0 0.0
    %900 = vmatpush1.msra.mxu0 %v247
    %901 = vmatprep.subr.mxu0 0.0
    %902 = vmatpush1.msra.mxu0 0.0
    %903 = vmatprep.subr.mxu0 0.0
    %904 = vmatpush1.msra.mxu0 0.0
    %905 = vmatprep.subr.mxu0 0.0
    %906 = vmatpush1.msra.mxu0 0.0
    %907 = vmatprep.subr.mxu0 0.0
    %908 = vmatpush1.msra.mxu0 0.0
    %909 = vmatprep.subr.mxu0 0.0
    %910 = vmatpush1.msra.mxu0 0.0
    %911 = vmatprep.subr.mxu0 0.0
    %912 = vmatpush1.msra.mxu0 0.0
    %913 = vmatprep.subr.mxu0 0.0
    %914 = vmatpush1.msra.mxu0 0.0
    %915 = vmatprep.subr.mxu0 0.0
    %916 = vmatpush1.msra.mxu0 0.0
    %917 = vmatprep.subr.mxu0 0.0
    %918 = vmatpush1.msra.mxu0 0.0
    %919 = vmatprep.subr.mxu0 0.0
    %920 = vmatpush1.msra.mxu0 0.0
    %921 = vmatprep.subr.mxu0 0.0
    %922 = vmatpush1.msra.mxu0 0.0
    %923 = vmatprep.subr.mxu0 0.0
    %924 = vmatpush1.msra.mxu0 0.0
    %925 = vmatprep.subr.mxu0 0.0
    %926 = vmatpush1.msra.mxu0 0.0
    %927 = vmatprep.subr.mxu0 0.0
    %928 = vmatpush1.msra.mxu0 0.0
    %929 = vmatprep.subr.mxu0 0.0
    %930 = vmatpush1.msra.mxu0 0.0
    %931 = vmatprep.subr.mxu0 0.0
    %932 = vmatpush1.msra.mxu0 0.0
    %933 = vmatprep.subr.mxu0 0.0
    %934 = vmatpush1.msra.mxu0 0.0
    %935 = vmatprep.subr.mxu0 0.0
    %936 = vmatpush1.msra.mxu0 0.0
    %937 = vmatprep.subr.mxu0 0.0
    %938 = vmatpush1.msra.mxu0 0.0
    %939 = vmatprep.subr.mxu0 0.0
    %940 = vmatpush1.msra.mxu0 0.0
    %941 = vmatprep.subr.mxu0 0.0
    %942 = vmatpush1.msra.mxu0 0.0
    %943 = vmatprep.subr.mxu0 0.0
    %944 = vmatpush1.msra.mxu0 0.0
    %945 = vmatprep.subr.mxu0 0.0
    %946 = vmatpush1.msra.mxu0 0.0
    %947 = vmatprep.subr.mxu0 0.0
    %948 = vmatpush1.msra.mxu0 0.0
    %949 = vmatprep.subr.mxu0 0.0
    %950 = vmatpush1.msra.mxu0 0.0
    %951 = vmatprep.subr.mxu0 0.0
    %952 = vmatpush1.msra.mxu0 0.0
    %953 = vmatprep.subr.mxu0 0.0
    %954 = vmatpush1.msra.mxu0 0.0
    %955 = vmatprep.subr.mxu0 0.0
    %956 = vmatpush1.msra.mxu0 0.0
    %957 = vmatprep.subr.mxu0 0.0
    %958 = vmatpush1.msra.mxu0 0.0
    %959 = vmatprep.subr.mxu0 0.0
    %960 = vmatpush1.msra.mxu0 0.0
    %961 = vmatprep.mubr.f32.mxu0 0.0
    %962 = vmatmul.mubr.f32.gmra.mrb[0].mxu0 %v895
    %v963 = vpop.f32.mrb[0].mxu0
    %v964 = vadd.f32 0.0, %v963
    %v965 = vpop.f32.mrb[0].mxu0
    %966 = vdwg.mxu0
    %v968 = vrot.slane %v964, 4
    %v970 = vadd.f32 %v243, %v968
    %v971 = vmul.f32 %v970, 0.5
    %v972 = vtanh.pop %v971
    %v973 = vadd.f32 %v972, 1.0
    %v974 = vmul.f32 %v973, 0.5
    %v975 = vtanh.pop %v970
    %v977 = vrot.slane %v880, 6
    %v979 = vmul.f32 %v974, %v977
    %981 = vrot.lane.b32.xlu0 %v975, 96
    %v982 = vpop.permute.xlu0 %981
    %v984 = vmul.f32 %v974, %v982
    %986 = vrot.lane.b32.xlu0 %v984, 16
    %v987 = vpop.permute.xlu0 %986
    %v989 = vadd.f32 %v979, %v987
    %v990 = vtanh.pop %v989
    %992 = vrot.lane.b32.xlu0 %v990, 32
    %v993 = vpop.permute.xlu0 %992
    %v995 = vmul.f32 %v974, %v993
    %997 = vrot.lane.b32.xlu0 %v995, 80
    %v998 = vpop.permute.xlu0 %997
    %1000 = vst.msk [vmem:[#allocation2 + $0x8] sm:$0x30] %vm568, %v998
    %v1001 = vrot.slane %v995, 4
    %1002 = vrot.lane.b32.xlu0 %v1001, 80
    %v1003 = vpop.permute.xlu0 %1002
    %v1004 = vsel %vm250, %v1003, 0
    %1006 = vmatprep.subr.mxu0 0.0
    %1007 = vmatpush1.msra.mxu0 %v246
    %1008 = vmatprep.subr.mxu0 0.0
    %1009 = vmatpush1.msra.mxu0 %v247
    %1010 = vmatprep.subr.mxu0 0.0
    %1011 = vmatpush1.msra.mxu0 0.0
    %1012 = vmatprep.subr.mxu0 0.0
    %1013 = vmatpush1.msra.mxu0 0.0
    %1014 = vmatprep.subr.mxu0 0.0
    %1015 = vmatpush1.msra.mxu0 0.0
    %1016 = vmatprep.subr.mxu0 0.0
    %1017 = vmatpush1.msra.mxu0 0.0
    %1018 = vmatprep.subr.mxu0 0.0
    %1019 = vmatpush1.msra.mxu0 0.0
    %1020 = vmatprep.subr.mxu0 0.0
    %1021 = vmatpush1.msra.mxu0 0.0
    %1022 = vmatprep.subr.mxu0 0.0
    %1023 = vmatpush1.msra.mxu0 0.0
    %1024 = vmatprep.subr.mxu0 0.0
    %1025 = vmatpush1.msra.mxu0 0.0
    %1026 = vmatprep.subr.mxu0 0.0
    %1027 = vmatpush1.msra.mxu0 0.0
    %1028 = vmatprep.subr.mxu0 0.0
    %1029 = vmatpush1.msra.mxu0 0.0
    %1030 = vmatprep.subr.mxu0 0.0
    %1031 = vmatpush1.msra.mxu0 0.0
    %1032 = vmatprep.subr.mxu0 0.0
    %1033 = vmatpush1.msra.mxu0 0.0
    %1034 = vmatprep.subr.mxu0 0.0
    %1035 = vmatpush1.msra.mxu0 0.0
    %1036 = vmatprep.subr.mxu0 0.0
    %1037 = vmatpush1.msra.mxu0 0.0
    %1038 = vmatprep.subr.mxu0 0.0
    %1039 = vmatpush1.msra.mxu0 0.0
    %1040 = vmatprep.subr.mxu0 0.0
    %1041 = vmatpush1.msra.mxu0 0.0
    %1042 = vmatprep.subr.mxu0 0.0
    %1043 = vmatpush1.msra.mxu0 0.0
    %1044 = vmatprep.subr.mxu0 0.0
    %1045 = vmatpush1.msra.mxu0 0.0
    %1046 = vmatprep.subr.mxu0 0.0
    %1047 = vmatpush1.msra.mxu0 0.0
    %1048 = vmatprep.subr.mxu0 0.0
    %1049 = vmatpush1.msra.mxu0 0.0
    %1050 = vmatprep.subr.mxu0 0.0
    %1051 = vmatpush1.msra.mxu0 0.0
    %1052 = vmatprep.subr.mxu0 0.0
    %1053 = vmatpush1.msra.mxu0 0.0
    %1054 = vmatprep.subr.mxu0 0.0
    %1055 = vmatpush1.msra.mxu0 0.0
    %1056 = vmatprep.subr.mxu0 0.0
    %1057 = vmatpush1.msra.mxu0 0.0
    %1058 = vmatprep.subr.mxu0 0.0
    %1059 = vmatpush1.msra.mxu0 0.0
    %1060 = vmatprep.subr.mxu0 0.0
    %1061 = vmatpush1.msra.mxu0 0.0
    %1062 = vmatprep.subr.mxu0 0.0
    %1063 = vmatpush1.msra.mxu0 0.0
    %1064 = vmatprep.subr.mxu0 0.0
    %1065 = vmatpush1.msra.mxu0 0.0
    %1066 = vmatprep.subr.mxu0 0.0
    %1067 = vmatpush1.msra.mxu0 0.0
    %1068 = vmatprep.subr.mxu0 0.0
    %1069 = vmatpush1.msra.mxu0 0.0
    %1070 = vmatprep.mubr.f32.mxu0 0.0
    %1071 = vmatmul.mubr.f32.gmra.mrb[0].mxu0 %v1004
    %v1072 = vpop.f32.mrb[0].mxu0
    %v1073 = vadd.f32 0.0, %v1072
    %v1074 = vpop.f32.mrb[0].mxu0
    %1075 = vdwg.mxu0
    %v1077 = vrot.slane %v1073, 2
    %v1079 = vadd.f32 %v243, %v1077
    %v1080 = vmul.f32 %v1079, 0.5
    %v1081 = vtanh.pop %v1080
    %v1082 = vadd.f32 %v1081, 1.0
    %v1083 = vmul.f32 %v1082, 0.5
    %v1084 = vtanh.pop %v1079
    %v1086 = vrot.slane %v989, 6
    %v1088 = vmul.f32 %v1083, %v1086
    %1090 = vrot.lane.b32.xlu0 %v1084, 96
    %v1091 = vpop.permute.xlu0 %1090
    %v1093 = vmul.f32 %v1083, %v1091
    %1095 = vrot.lane.b32.xlu0 %v1093, 16
    %v1096 = vpop.permute.xlu0 %1095
    %v1098 = vadd.f32 %v1088, %v1096
    %v1099 = vtanh.pop %v1098
    %1101 = vrot.lane.b32.xlu0 %v1099, 32
    %v1102 = vpop.permute.xlu0 %1101
    %v1104 = vmul.f32 %v1083, %v1102
    %1106 = vrot.lane.b32.xlu0 %v1104, 80
    %v1107 = vpop.permute.xlu0 %1106
    %1109 = vst.msk [vmem:[#allocation2 + $0x8] sm:$0xc0] %vm678, %v1107
    %1110 = vmatprep.subr.mxu0 0.0
    %1111 = vmatpush1.msra.mxu0 %v248
    %1112 = vmatprep.subr.mxu0 0.0
    %1113 = vmatpush1.msra.mxu0 %v249
    %1114 = vmatprep.subr.mxu0 0.0
    %1115 = vmatpush1.msra.mxu0 0.0
    %1116 = vmatprep.subr.mxu0 0.0
    %1117 = vmatpush1.msra.mxu0 0.0
    %1118 = vmatprep.subr.mxu0 0.0
    %1119 = vmatpush1.msra.mxu0 0.0
    %1120 = vmatprep.subr.mxu0 0.0
    %1121 = vmatpush1.msra.mxu0 0.0
    %1122 = vmatprep.subr.mxu0 0.0
    %1123 = vmatpush1.msra.mxu0 0.0
    %1124 = vmatprep.subr.mxu0 0.0
    %1125 = vmatpush1.msra.mxu0 0.0
    %1126 = vmatprep.subr.mxu0 0.0
    %1127 = vmatpush1.msra.mxu0 0.0
    %1128 = vmatprep.subr.mxu0 0.0
    %1129 = vmatpush1.msra.mxu0 0.0
    %1130 = vmatprep.subr.mxu0 0.0
    %1131 = vmatpush1.msra.mxu0 0.0
    %1132 = vmatprep.subr.mxu0 0.0
    %1133 = vmatpush1.msra.mxu0 0.0
    %1134 = vmatprep.subr.mxu0 0.0
    %1135 = vmatpush1.msra.mxu0 0.0
    %1136 = vmatprep.subr.mxu0 0.0
    %1137 = vmatpush1.msra.mxu0 0.0
    %1138 = vmatprep.subr.mxu0 0.0
    %1139 = vmatpush1.msra.mxu0 0.0
    %1140 = vmatprep.subr.mxu0 0.0
    %1141 = vmatpush1.msra.mxu0 0.0
    %1142 = vmatprep.subr.mxu0 0.0
    %1143 = vmatpush1.msra.mxu0 0.0
    %1144 = vmatprep.subr.mxu0 0.0
    %1145 = vmatpush1.msra.mxu0 0.0
    %1146 = vmatprep.subr.mxu0 0.0
    %1147 = vmatpush1.msra.mxu0 0.0
    %1148 = vmatprep.subr.mxu0 0.0
    %1149 = vmatpush1.msra.mxu0 0.0
    %1150 = vmatprep.subr.mxu0 0.0
    %1151 = vmatpush1.msra.mxu0 0.0
    %1152 = vmatprep.subr.mxu0 0.0
    %1153 = vmatpush1.msra.mxu0 0.0
    %1154 = vmatprep.subr.mxu0 0.0
    %1155 = vmatpush1.msra.mxu0 0.0
    %1156 = vmatprep.subr.mxu0 0.0
    %1157 = vmatpush1.msra.mxu0 0.0
    %1158 = vmatprep.subr.mxu0 0.0
    %1159 = vmatpush1.msra.mxu0 0.0
    %1160 = vmatprep.subr.mxu0 0.0
    %1161 = vmatpush1.msra.mxu0 0.0
    %1162 = vmatprep.subr.mxu0 0.0
    %1163 = vmatpush1.msra.mxu0 0.0
    %1164 = vmatprep.subr.mxu0 0.0
    %1165 = vmatpush1.msra.mxu0 0.0
    %1166 = vmatprep.subr.mxu0 0.0
    %1167 = vmatpush1.msra.mxu0 0.0
    %1168 = vmatprep.subr.mxu0 0.0
    %1169 = vmatpush1.msra.mxu0 0.0
    %1170 = vmatprep.subr.mxu0 0.0
    %1171 = vmatpush1.msra.mxu0 0.0
    %1172 = vmatprep.subr.mxu0 0.0
    %1173 = vmatpush1.msra.mxu0 0.0
    %1174 = vmatprep.mubr.f32.mxu0 0.0
    %1175 = vmatmul.mubr.f32.gmra.mrb[0].mxu0 %v252
    %v1176 = vpop.f32.mrb[0].mxu0
    %v1177 = vadd.f32 0.0, %v1176
    %v1178 = vpop.f32.mrb[0].mxu0
    %1179 = vdwg.mxu0
    %v1181 = vrot.slane %v1177, 2
    %1182 = vrot.lane.b32.xlu0 %v1181, 64
    %v1183 = vpop.permute.xlu0 %1182
    %v1185 = vadd.f32 %v243, %v1183
    %v1186 = vmul.f32 %v1185, 0.5
    %v1187 = vtanh.pop %v1186
    %v1188 = vadd.f32 %v1187, 1.0
    %v1189 = vmul.f32 %v1188, 0.5
    %v1190 = vtanh.pop %v1185
    %v1191 = vmul.f32 %v1189, 0.0
    %1193 = vrot.lane.b32.xlu0 %v1190, 96
    %v1194 = vpop.permute.xlu0 %1193
    %v1196 = vmul.f32 %v1189, %v1194
    %1198 = vrot.lane.b32.xlu0 %v1196, 16
    %v1199 = vpop.permute.xlu0 %1198
    %v1201 = vadd.f32 %v1191, %v1199
    %v1202 = vtanh.pop %v1201
    %1204 = vrot.lane.b32.xlu0 %v1202, 32
    %v1205 = vpop.permute.xlu0 %1204
    %v1207 = vmul.f32 %v1189, %v1205
    %1209 = vrot.lane.b32.xlu0 %v1207, 16
    %v1210 = vpop.permute.xlu0 %1209
    %1212 = vst.msk [vmem:[#allocation3 + $0x8] sm:$0xc0] %vm678, %v1210
    %v1213 = vrot.slane %v1207, 6
    %1214 = vrot.lane.b32.xlu0 %v1213, 16
    %v1215 = vpop.permute.xlu0 %1214
    %v1216 = vsel %vm250, %v1215, 0
    %1218 = vmatprep.subr.mxu0 0.0
    %1219 = vmatpush1.msra.mxu0 %v248
    %1220 = vmatprep.subr.mxu0 0.0
    %1221 = vmatpush1.msra.mxu0 %v249
    %1222 = vmatprep.subr.mxu0 0.0
    %1223 = vmatpush1.msra.mxu0 0.0
    %1224 = vmatprep.subr.mxu0 0.0
    %1225 = vmatpush1.msra.mxu0 0.0
    %1226 = vmatprep.subr.mxu0 0.0
    %1227 = vmatpush1.msra.mxu0 0.0
    %1228 = vmatprep.subr.mxu0 0.0
    %1229 = vmatpush1.msra.mxu0 0.0
    %1230 = vmatprep.subr.mxu0 0.0
    %1231 = vmatpush1.msra.mxu0 0.0
    %1232 = vmatprep.subr.mxu0 0.0
    %1233 = vmatpush1.msra.mxu0 0.0
    %1234 = vmatprep.subr.mxu0 0.0
    %1235 = vmatpush1.msra.mxu0 0.0
    %1236 = vmatprep.subr.mxu0 0.0
    %1237 = vmatpush1.msra.mxu0 0.0
    %1238 = vmatprep.subr.mxu0 0.0
    %1239 = vmatpush1.msra.mxu0 0.0
    %1240 = vmatprep.subr.mxu0 0.0
    %1241 = vmatpush1.msra.mxu0 0.0
    %1242 = vmatprep.subr.mxu0 0.0
    %1243 = vmatpush1.msra.mxu0 0.0
    %1244 = vmatprep.subr.mxu0 0.0
    %1245 = vmatpush1.msra.mxu0 0.0
    %1246 = vmatprep.subr.mxu0 0.0
    %1247 = vmatpush1.msra.mxu0 0.0
    %1248 = vmatprep.subr.mxu0 0.0
    %1249 = vmatpush1.msra.mxu0 0.0
    %1250 = vmatprep.subr.mxu0 0.0
    %1251 = vmatpush1.msra.mxu0 0.0
    %1252 = vmatprep.subr.mxu0 0.0
    %1253 = vmatpush1.msra.mxu0 0.0
    %1254 = vmatprep.subr.mxu0 0.0
    %1255 = vmatpush1.msra.mxu0 0.0
    %1256 = vmatprep.subr.mxu0 0.0
    %1257 = vmatpush1.msra.mxu0 0.0
    %1258 = vmatprep.subr.mxu0 0.0
    %1259 = vmatpush1.msra.mxu0 0.0
    %1260 = vmatprep.subr.mxu0 0.0
    %1261 = vmatpush1.msra.mxu0 0.0
    %1262 = vmatprep.subr.mxu0 0.0
    %1263 = vmatpush1.msra.mxu0 0.0
    %1264 = vmatprep.subr.mxu0 0.0
    %1265 = vmatpush1.msra.mxu0 0.0
    %1266 = vmatprep.subr.mxu0 0.0
    %1267 = vmatpush1.msra.mxu0 0.0
    %1268 = vmatprep.subr.mxu0 0.0
    %1269 = vmatpush1.msra.mxu0 0.0
    %1270 = vmatprep.subr.mxu0 0.0
    %1271 = vmatpush1.msra.mxu0 0.0
    %1272 = vmatprep.subr.mxu0 0.0
    %1273 = vmatpush1.msra.mxu0 0.0
    %1274 = vmatprep.subr.mxu0 0.0
    %1275 = vmatpush1.msra.mxu0 0.0
    %1276 = vmatprep.subr.mxu0 0.0
    %1277 = vmatpush1.msra.mxu0 0.0
    %1278 = vmatprep.subr.mxu0 0.0
    %1279 = vmatpush1.msra.mxu0 0.0
    %1280 = vmatprep.subr.mxu0 0.0
    %1281 = vmatpush1.msra.mxu0 0.0
    %1282 = vmatprep.mubr.f32.mxu0 0.0
    %1283 = vmatmul.mubr.f32.gmra.mrb[0].mxu0 %v1216
    %v1284 = vpop.f32.mrb[0].mxu0
    %v1285 = vadd.f32 0.0, %v1284
    %v1286 = vpop.f32.mrb[0].mxu0
    %1287 = vdwg.mxu0
    %v1289 = vrot.slane %v1285, 4
    %1290 = vrot.lane.b32.xlu0 %v1289, 64
    %v1291 = vpop.permute.xlu0 %1290
    %v1293 = vadd.f32 %v243, %v1291
    %v1294 = vmul.f32 %v1293, 0.5
    %v1295 = vtanh.pop %v1294
    %v1296 = vadd.f32 %v1295, 1.0
    %v1297 = vmul.f32 %v1296, 0.5
    %v1298 = vtanh.pop %v1293
    %v1300 = vrot.slane %v1201, 2
    %v1302 = vmul.f32 %v1297, %v1300
    %1304 = vrot.lane.b32.xlu0 %v1298, 96
    %v1305 = vpop.permute.xlu0 %1304
    %v1307 = vmul.f32 %v1297, %v1305
    %1309 = vrot.lane.b32.xlu0 %v1307, 16
    %v1310 = vpop.permute.xlu0 %1309
    %v1312 = vadd.f32 %v1302, %v1310
    %v1313 = vtanh.pop %v1312
    %1315 = vrot.lane.b32.xlu0 %v1313, 32
    %v1316 = vpop.permute.xlu0 %1315
    %v1318 = vmul.f32 %v1297, %v1316
    %1320 = vrot.lane.b32.xlu0 %v1318, 16
    %v1321 = vpop.permute.xlu0 %1320
    %1323 = vst.msk [vmem:[#allocation3 + $0x8] sm:$0x30] %vm568, %v1321
    %v1324 = vrot.slane %v1318, 4
    %1325 = vrot.lane.b32.xlu0 %v1324, 16
    %v1326 = vpop.permute.xlu0 %1325
    %v1327 = vsel %vm250, %v1326, 0
    %1329 = vmatprep.subr.mxu0 0.0
    %1330 = vmatpush1.msra.mxu0 %v248
    %1331 = vmatprep.subr.mxu0 0.0
    %1332 = vmatpush1.msra.mxu0 %v249
    %1333 = vmatprep.subr.mxu0 0.0
    %1334 = vmatpush1.msra.mxu0 0.0
    %1335 = vmatprep.subr.mxu0 0.0
    %1336 = vmatpush1.msra.mxu0 0.0
    %1337 = vmatprep.subr.mxu0 0.0
    %1338 = vmatpush1.msra.mxu0 0.0
    %1339 = vmatprep.subr.mxu0 0.0
    %1340 = vmatpush1.msra.mxu0 0.0
    %1341 = vmatprep.subr.mxu0 0.0
    %1342 = vmatpush1.msra.mxu0 0.0
    %1343 = vmatprep.subr.mxu0 0.0
    %1344 = vmatpush1.msra.mxu0 0.0
    %1345 = vmatprep.subr.mxu0 0.0
    %1346 = vmatpush1.msra.mxu0 0.0
    %1347 = vmatprep.subr.mxu0 0.0
    %1348 = vmatpush1.msra.mxu0 0.0
    %1349 = vmatprep.subr.mxu0 0.0
    %1350 = vmatpush1.msra.mxu0 0.0
    %1351 = vmatprep.subr.mxu0 0.0
    %1352 = vmatpush1.msra.mxu0 0.0
    %1353 = vmatprep.subr.mxu0 0.0
    %1354 = vmatpush1.msra.mxu0 0.0
    %1355 = vmatprep.subr.mxu0 0.0
    %1356 = vmatpush1.msra.mxu0 0.0
    %1357 = vmatprep.subr.mxu0 0.0
    %1358 = vmatpush1.msra.mxu0 0.0
    %1359 = vmatprep.subr.mxu0 0.0
    %1360 = vmatpush1.msra.mxu0 0.0
    %1361 = vmatprep.subr.mxu0 0.0
    %1362 = vmatpush1.msra.mxu0 0.0
    %1363 = vmatprep.subr.mxu0 0.0
    %1364 = vmatpush1.msra.mxu0 0.0
    %1365 = vmatprep.subr.mxu0 0.0
    %1366 = vmatpush1.msra.mxu0 0.0
    %1367 = vmatprep.subr.mxu0 0.0
    %1368 = vmatpush1.msra.mxu0 0.0
    %1369 = vmatprep.subr.mxu0 0.0
    %1370 = vmatpush1.msra.mxu0 0.0
    %1371 = vmatprep.subr.mxu0 0.0
    %1372 = vmatpush1.msra.mxu0 0.0
    %1373 = vmatprep.subr.mxu0 0.0
    %1374 = vmatpush1.msra.mxu0 0.0
    %1375 = vmatprep.subr.mxu0 0.0
    %1376 = vmatpush1.msra.mxu0 0.0
    %1377 = vmatprep.subr.mxu0 0.0
    %1378 = vmatpush1.msra.mxu0 0.0
    %1379 = vmatprep.subr.mxu0 0.0
    %1380 = vmatpush1.msra.mxu0 0.0
    %1381 = vmatprep.subr.mxu0 0.0
    %1382 = vmatpush1.msra.mxu0 0.0
    %1383 = vmatprep.subr.mxu0 0.0
    %1384 = vmatpush1.msra.mxu0 0.0
    %1385 = vmatprep.subr.mxu0 0.0
    %1386 = vmatpush1.msra.mxu0 0.0
    %1387 = vmatprep.subr.mxu0 0.0
    %1388 = vmatpush1.msra.mxu0 0.0
    %1389 = vmatprep.subr.mxu0 0.0
    %1390 = vmatpush1.msra.mxu0 0.0
    %1391 = vmatprep.subr.mxu0 0.0
    %1392 = vmatpush1.msra.mxu0 0.0
    %1393 = vmatprep.mubr.f32.mxu0 0.0
    %1394 = vmatmul.mubr.f32.gmra.mrb[0].mxu0 %v1327
    %v1395 = vpop.f32.mrb[0].mxu0
    %v1396 = vadd.f32 0.0, %v1395
    %v1397 = vpop.f32.mrb[0].mxu0
    %1398 = vdwg.mxu0
    %v1400 = vrot.slane %v1396, 6
    %1401 = vrot.lane.b32.xlu0 %v1400, 64
    %v1402 = vpop.permute.xlu0 %1401
    %v1404 = vadd.f32 %v243, %v1402
    %v1405 = vmul.f32 %v1404, 0.5
    %v1406 = vtanh.pop %v1405
    %v1407 = vadd.f32 %v1406, 1.0
    %v1408 = vmul.f32 %v1407, 0.5
    %v1409 = vtanh.pop %v1404
    %v1411 = vrot.slane %v1312, 2
    %v1413 = vmul.f32 %v1408, %v1411
    %1415 = vrot.lane.b32.xlu0 %v1409, 96
    %v1416 = vpop.permute.xlu0 %1415
    %v1418 = vmul.f32 %v1408, %v1416
    %1420 = vrot.lane.b32.xlu0 %v1418, 16
    %v1421 = vpop.permute.xlu0 %1420
    %v1423 = vadd.f32 %v1413, %v1421
    %v1424 = vtanh.pop %v1423
    %1426 = vrot.lane.b32.xlu0 %v1424, 32
    %v1427 = vpop.permute.xlu0 %1426
    %v1429 = vmul.f32 %v1408, %v1427
    %1431 = vrot.lane.b32.xlu0 %v1429, 16
    %v1432 = vpop.permute.xlu0 %1431
    %1434 = vst.msk [vmem:[#allocation3 + $0x8] sm:$0xc] %vm458, %v1432
    %v1435 = vrot.slane %v1429, 2
    %1436 = vrot.lane.b32.xlu0 %v1435, 16
    %v1437 = vpop.permute.xlu0 %1436
    %v1438 = vsel %vm250, %v1437, 0
    %1440 = vmatprep.subr.mxu0 0.0
    %1441 = vmatpush1.msra.mxu0 %v248
    %1442 = vmatprep.subr.mxu0 0.0
    %1443 = vmatpush1.msra.mxu0 %v249
    %1444 = vmatprep.subr.mxu0 0.0
    %1445 = vmatpush1.msra.mxu0 0.0
    %1446 = vmatprep.subr.mxu0 0.0
    %1447 = vmatpush1.msra.mxu0 0.0
    %1448 = vmatprep.subr.mxu0 0.0
    %1449 = vmatpush1.msra.mxu0 0.0
    %1450 = vmatprep.subr.mxu0 0.0
    %1451 = vmatpush1.msra.mxu0 0.0
    %1452 = vmatprep.subr.mxu0 0.0
    %1453 = vmatpush1.msra.mxu0 0.0
    %1454 = vmatprep.subr.mxu0 0.0
    %1455 = vmatpush1.msra.mxu0 0.0
    %1456 = vmatprep.subr.mxu0 0.0
    %1457 = vmatpush1.msra.mxu0 0.0
    %1458 = vmatprep.subr.mxu0 0.0
    %1459 = vmatpush1.msra.mxu0 0.0
    %1460 = vmatprep.subr.mxu0 0.0
    %1461 = vmatpush1.msra.mxu0 0.0
    %1462 = vmatprep.subr.mxu0 0.0
    %1463 = vmatpush1.msra.mxu0 0.0
    %1464 = vmatprep.subr.mxu0 0.0
    %1465 = vmatpush1.msra.mxu0 0.0
    %1466 = vmatprep.subr.mxu0 0.0
    %1467 = vmatpush1.msra.mxu0 0.0
    %1468 = vmatprep.subr.mxu0 0.0
    %1469 = vmatpush1.msra.mxu0 0.0
    %1470 = vmatprep.subr.mxu0 0.0
    %1471 = vmatpush1.msra.mxu0 0.0
    %1472 = vmatprep.subr.mxu0 0.0
    %1473 = vmatpush1.msra.mxu0 0.0
    %1474 = vmatprep.subr.mxu0 0.0
    %1475 = vmatpush1.msra.mxu0 0.0
    %1476 = vmatprep.subr.mxu0 0.0
    %1477 = vmatpush1.msra.mxu0 0.0
    %1478 = vmatprep.subr.mxu0 0.0
    %1479 = vmatpush1.msra.mxu0 0.0
    %1480 = vmatprep.subr.mxu0 0.0
    %1481 = vmatpush1.msra.mxu0 0.0
    %1482 = vmatprep.subr.mxu0 0.0
    %1483 = vmatpush1.msra.mxu0 0.0
    %1484 = vmatprep.subr.mxu0 0.0
    %1485 = vmatpush1.msra.mxu0 0.0
    %1486 = vmatprep.subr.mxu0 0.0
    %1487 = vmatpush1.msra.mxu0 0.0
    %1488 = vmatprep.subr.mxu0 0.0
    %1489 = vmatpush1.msra.mxu0 0.0
    %1490 = vmatprep.subr.mxu0 0.0
    %1491 = vmatpush1.msra.mxu0 0.0
    %1492 = vmatprep.subr.mxu0 0.0
    %1493 = vmatpush1.msra.mxu0 0.0
    %1494 = vmatprep.subr.mxu0 0.0
    %1495 = vmatpush1.msra.mxu0 0.0
    %1496 = vmatprep.subr.mxu0 0.0
    %1497 = vmatpush1.msra.mxu0 0.0
    %1498 = vmatprep.subr.mxu0 0.0
    %1499 = vmatpush1.msra.mxu0 0.0
    %1500 = vmatprep.subr.mxu0 0.0
    %1501 = vmatpush1.msra.mxu0 0.0
    %1502 = vmatprep.subr.mxu0 0.0
    %1503 = vmatpush1.msra.mxu0 0.0
    %1504 = vmatprep.mubr.f32.mxu0 0.0
    %1505 = vmatmul.mubr.f32.gmra.mrb[0].mxu0 %v1438
    %v1506 = vpop.f32.mrb[0].mxu0
    %v1507 = vadd.f32 0.0, %v1506
    %v1508 = vpop.f32.mrb[0].mxu0
    %1509 = vdwg.mxu0
    %1511 = vrot.lane.b32.xlu0 %v1507, 64
    %v1512 = vpop.permute.xlu0 %1511
    %v1514 = vadd.f32 %v243, %v1512
    %v1515 = vmul.f32 %v1514, 0.5
    %v1516 = vtanh.pop %v1515
    %v1517 = vadd.f32 %v1516, 1.0
    %v1518 = vmul.f32 %v1517, 0.5
    %v1519 = vtanh.pop %v1514
    %v1521 = vrot.slane %v1423, 2
    %v1523 = vmul.f32 %v1518, %v1521
    %1525 = vrot.lane.b32.xlu0 %v1519, 96
    %v1526 = vpop.permute.xlu0 %1525
    %v1528 = vmul.f32 %v1518, %v1526
    %1530 = vrot.lane.b32.xlu0 %v1528, 16
    %v1531 = vpop.permute.xlu0 %1530
    %v1533 = vadd.f32 %v1523, %v1531
    %v1534 = vtanh.pop %v1533
    %1536 = vrot.lane.b32.xlu0 %v1534, 32
    %v1537 = vpop.permute.xlu0 %1536
    %v1539 = vmul.f32 %v1518, %v1537
    %1541 = vrot.lane.b32.xlu0 %v1539, 16
    %v1542 = vpop.permute.xlu0 %1541
    %1544 = vst.msk [vmem:[#allocation3 + $0x8] sm:$0x3] %vm351, %v1542
    %v1545 = vsel %vm250, %v1542, 0
    %1547 = vmatprep.subr.mxu0 0.0
    %1548 = vmatpush1.msra.mxu0 %v248
    %1549 = vmatprep.subr.mxu0 0.0
    %1550 = vmatpush1.msra.mxu0 %v249
    %1551 = vmatprep.subr.mxu0 0.0
    %1552 = vmatpush1.msra.mxu0 0.0
    %1553 = vmatprep.subr.mxu0 0.0
    %1554 = vmatpush1.msra.mxu0 0.0
    %1555 = vmatprep.subr.mxu0 0.0
    %1556 = vmatpush1.msra.mxu0 0.0
    %1557 = vmatprep.subr.mxu0 0.0
    %1558 = vmatpush1.msra.mxu0 0.0
    %1559 = vmatprep.subr.mxu0 0.0
    %1560 = vmatpush1.msra.mxu0 0.0
    %1561 = vmatprep.subr.mxu0 0.0
    %1562 = vmatpush1.msra.mxu0 0.0
    %1563 = vmatprep.subr.mxu0 0.0
    %1564 = vmatpush1.msra.mxu0 0.0
    %1565 = vmatprep.subr.mxu0 0.0
    %1566 = vmatpush1.msra.mxu0 0.0
    %1567 = vmatprep.subr.mxu0 0.0
    %1568 = vmatpush1.msra.mxu0 0.0
    %1569 = vmatprep.subr.mxu0 0.0
    %1570 = vmatpush1.msra.mxu0 0.0
    %1571 = vmatprep.subr.mxu0 0.0
    %1572 = vmatpush1.msra.mxu0 0.0
    %1573 = vmatprep.subr.mxu0 0.0
    %1574 = vmatpush1.msra.mxu0 0.0
    %1575 = vmatprep.subr.mxu0 0.0
    %1576 = vmatpush1.msra.mxu0 0.0
    %1577 = vmatprep.subr.mxu0 0.0
    %1578 = vmatpush1.msra.mxu0 0.0
    %1579 = vmatprep.subr.mxu0 0.0
    %1580 = vmatpush1.msra.mxu0 0.0
    %1581 = vmatprep.subr.mxu0 0.0
    %1582 = vmatpush1.msra.mxu0 0.0
    %1583 = vmatprep.subr.mxu0 0.0
    %1584 = vmatpush1.msra.mxu0 0.0
    %1585 = vmatprep.subr.mxu0 0.0
    %1586 = vmatpush1.msra.mxu0 0.0
    %1587 = vmatprep.subr.mxu0 0.0
    %1588 = vmatpush1.msra.mxu0 0.0
    %1589 = vmatprep.subr.mxu0 0.0
    %1590 = vmatpush1.msra.mxu0 0.0
    %1591 = vmatprep.subr.mxu0 0.0
    %1592 = vmatpush1.msra.mxu0 0.0
    %1593 = vmatprep.subr.mxu0 0.0
    %1594 = vmatpush1.msra.mxu0 0.0
    %1595 = vmatprep.subr.mxu0 0.0
    %1596 = vmatpush1.msra.mxu0 0.0
    %1597 = vmatprep.subr.mxu0 0.0
    %1598 = vmatpush1.msra.mxu0 0.0
    %1599 = vmatprep.subr.mxu0 0.0
    %1600 = vmatpush1.msra.mxu0 0.0
    %1601 = vmatprep.subr.mxu0 0.0
    %1602 = vmatpush1.msra.mxu0 0.0
    %1603 = vmatprep.subr.mxu0 0.0
    %1604 = vmatpush1.msra.mxu0 0.0
    %1605 = vmatprep.subr.mxu0 0.0
    %1606 = vmatpush1.msra.mxu0 0.0
    %1607 = vmatprep.subr.mxu0 0.0
    %1608 = vmatpush1.msra.mxu0 0.0
    %1609 = vmatprep.subr.mxu0 0.0
    %1610 = vmatpush1.msra.mxu0 0.0
    %1611 = vmatprep.mubr.f32.mxu0 0.0
    %1612 = vmatmul.mubr.f32.gmra.mrb[0].mxu0 %v1545
    %v1613 = vpop.f32.mrb[0].mxu0
    %v1614 = vadd.f32 0.0, %v1613
    %v1615 = vpop.f32.mrb[0].mxu0
    %1616 = vdwg.mxu0
    %v1618 = vrot.slane %v1614, 2
    %1619 = vrot.lane.b32.xlu0 %v1618, 64
    %v1620 = vpop.permute.xlu0 %1619
    %v1622 = vadd.f32 %v238, %v1620
    %v1623 = vmul.f32 %v1622, 0.5
    %v1624 = vtanh.pop %v1623
    %v1625 = vadd.f32 %v1624, 1.0
    %v1626 = vmul.f32 %v1625, 0.5
    %v1627 = vtanh.pop %v1622
    %v1629 = vrot.slane %v1533, 2
    %v1631 = vmul.f32 %v1626, %v1629
    %1633 = vrot.lane.b32.xlu0 %v1627, 96
    %v1634 = vpop.permute.xlu0 %1633
    %v1636 = vmul.f32 %v1626, %v1634
    %1638 = vrot.lane.b32.xlu0 %v1636, 16
    %v1639 = vpop.permute.xlu0 %1638
    %v1641 = vadd.f32 %v1631, %v1639
    %v1642 = vtanh.pop %v1641
    %1644 = vrot.lane.b32.xlu0 %v1642, 32
    %v1645 = vpop.permute.xlu0 %1644
    %v1647 = vmul.f32 %v1626, %v1645
    %1649 = vrot.lane.b32.xlu0 %v1647, 16
    %v1650 = vpop.permute.xlu0 %1649
    %1652 = vst.msk [vmem:[#allocation3] sm:$0xc0] %vm678, %v1650
    %v1653 = vrot.slane %v1647, 6
    %1654 = vrot.lane.b32.xlu0 %v1653, 16
    %v1655 = vpop.permute.xlu0 %1654
    %v1656 = vsel %vm250, %v1655, 0
    %1658 = vmatprep.subr.mxu0 0.0
    %1659 = vmatpush1.msra.mxu0 %v248
    %1660 = vmatprep.subr.mxu0 0.0
    %1661 = vmatpush1.msra.mxu0 %v249
    %1662 = vmatprep.subr.mxu0 0.0
    %1663 = vmatpush1.msra.mxu0 0.0
    %1664 = vmatprep.subr.mxu0 0.0
    %1665 = vmatpush1.msra.mxu0 0.0
    %1666 = vmatprep.subr.mxu0 0.0
    %1667 = vmatpush1.msra.mxu0 0.0
    %1668 = vmatprep.subr.mxu0 0.0
    %1669 = vmatpush1.msra.mxu0 0.0
    %1670 = vmatprep.subr.mxu0 0.0
    %1671 = vmatpush1.msra.mxu0 0.0
    %1672 = vmatprep.subr.mxu0 0.0
    %1673 = vmatpush1.msra.mxu0 0.0
    %1674 = vmatprep.subr.mxu0 0.0
    %1675 = vmatpush1.msra.mxu0 0.0
    %1676 = vmatprep.subr.mxu0 0.0
    %1677 = vmatpush1.msra.mxu0 0.0
    %1678 = vmatprep.subr.mxu0 0.0
    %1679 = vmatpush1.msra.mxu0 0.0
    %1680 = vmatprep.subr.mxu0 0.0
    %1681 = vmatpush1.msra.mxu0 0.0
    %1682 = vmatprep.subr.mxu0 0.0
    %1683 = vmatpush1.msra.mxu0 0.0
    %1684 = vmatprep.subr.mxu0 0.0
    %1685 = vmatpush1.msra.mxu0 0.0
    %1686 = vmatprep.subr.mxu0 0.0
    %1687 = vmatpush1.msra.mxu0 0.0
    %1688 = vmatprep.subr.mxu0 0.0
    %1689 = vmatpush1.msra.mxu0 0.0
    %1690 = vmatprep.subr.mxu0 0.0
    %1691 = vmatpush1.msra.mxu0 0.0
    %1692 = vmatprep.subr.mxu0 0.0
    %1693 = vmatpush1.msra.mxu0 0.0
    %1694 = vmatprep.subr.mxu0 0.0
    %1695 = vmatpush1.msra.mxu0 0.0
    %1696 = vmatprep.subr.mxu0 0.0
    %1697 = vmatpush1.msra.mxu0 0.0
    %1698 = vmatprep.subr.mxu0 0.0
    %1699 = vmatpush1.msra.mxu0 0.0
    %1700 = vmatprep.subr.mxu0 0.0
    %1701 = vmatpush1.msra.mxu0 0.0
    %1702 = vmatprep.subr.mxu0 0.0
    %1703 = vmatpush1.msra.mxu0 0.0
    %1704 = vmatprep.subr.mxu0 0.0
    %1705 = vmatpush1.msra.mxu0 0.0
    %1706 = vmatprep.subr.mxu0 0.0
    %1707 = vmatpush1.msra.mxu0 0.0
    %1708 = vmatprep.subr.mxu0 0.0
    %1709 = vmatpush1.msra.mxu0 0.0
    %1710 = vmatprep.subr.mxu0 0.0
    %1711 = vmatpush1.msra.mxu0 0.0
    %1712 = vmatprep.subr.mxu0 0.0
    %1713 = vmatpush1.msra.mxu0 0.0
    %1714 = vmatprep.subr.mxu0 0.0
    %1715 = vmatpush1.msra.mxu0 0.0
    %1716 = vmatprep.subr.mxu0 0.0
    %1717 = vmatpush1.msra.mxu0 0.0
    %1718 = vmatprep.subr.mxu0 0.0
    %1719 = vmatpush1.msra.mxu0 0.0
    %1720 = vmatprep.subr.mxu0 0.0
    %1721 = vmatpush1.msra.mxu0 0.0
    %1722 = vmatprep.mubr.f32.mxu0 0.0
    %1723 = vmatmul.mubr.f32.gmra.mrb[0].mxu0 %v1656
    %v1724 = vpop.f32.mrb[0].mxu0
    %v1725 = vadd.f32 0.0, %v1724
    %v1726 = vpop.f32.mrb[0].mxu0
    %1727 = vdwg.mxu0
    %v1729 = vrot.slane %v1725, 4
    %1730 = vrot.lane.b32.xlu0 %v1729, 64
    %v1731 = vpop.permute.xlu0 %1730
    %v1733 = vadd.f32 %v238, %v1731
    %v1734 = vmul.f32 %v1733, 0.5
    %v1735 = vtanh.pop %v1734
    %v1736 = vadd.f32 %v1735, 1.0
    %v1737 = vmul.f32 %v1736, 0.5
    %v1738 = vtanh.pop %v1733
    %v1740 = vrot.slane %v1641, 2
    %v1742 = vmul.f32 %v1737, %v1740
    %1744 = vrot.lane.b32.xlu0 %v1738, 96
    %v1745 = vpop.permute.xlu0 %1744
    %v1747 = vmul.f32 %v1737, %v1745
    %1749 = vrot.lane.b32.xlu0 %v1747, 16
    %v1750 = vpop.permute.xlu0 %1749
    %v1752 = vadd.f32 %v1742, %v1750
    %v1753 = vtanh.pop %v1752
    %1755 = vrot.lane.b32.xlu0 %v1753, 32
    %v1756 = vpop.permute.xlu0 %1755
    %v1758 = vmul.f32 %v1737, %v1756
    %1760 = vrot.lane.b32.xlu0 %v1758, 16
    %v1761 = vpop.permute.xlu0 %1760
    %1763 = vst.msk [vmem:[#allocation3] sm:$0x30] %vm568, %v1761
    %v1764 = vrot.slane %v1758, 4
    %1765 = vrot.lane.b32.xlu0 %v1764, 16
    %v1766 = vpop.permute.xlu0 %1765
    %v1767 = vsel %vm250, %v1766, 0
    %1769 = vmatprep.subr.mxu0 0.0
    %1770 = vmatpush1.msra.mxu0 %v248
    %1771 = vmatprep.subr.mxu0 0.0
    %1772 = vmatpush1.msra.mxu0 %v249
    %1773 = vmatprep.subr.mxu0 0.0
    %1774 = vmatpush1.msra.mxu0 0.0
    %1775 = vmatprep.subr.mxu0 0.0
    %1776 = vmatpush1.msra.mxu0 0.0
    %1777 = vmatprep.subr.mxu0 0.0
    %1778 = vmatpush1.msra.mxu0 0.0
    %1779 = vmatprep.subr.mxu0 0.0
    %1780 = vmatpush1.msra.mxu0 0.0
    %1781 = vmatprep.subr.mxu0 0.0
    %1782 = vmatpush1.msra.mxu0 0.0
    %1783 = vmatprep.subr.mxu0 0.0
    %1784 = vmatpush1.msra.mxu0 0.0
    %1785 = vmatprep.subr.mxu0 0.0
    %1786 = vmatpush1.msra.mxu0 0.0
    %1787 = vmatprep.subr.mxu0 0.0
    %1788 = vmatpush1.msra.mxu0 0.0
    %1789 = vmatprep.subr.mxu0 0.0
    %1790 = vmatpush1.msra.mxu0 0.0
    %1791 = vmatprep.subr.mxu0 0.0
    %1792 = vmatpush1.msra.mxu0 0.0
    %1793 = vmatprep.subr.mxu0 0.0
    %1794 = vmatpush1.msra.mxu0 0.0
    %1795 = vmatprep.subr.mxu0 0.0
    %1796 = vmatpush1.msra.mxu0 0.0
    %1797 = vmatprep.subr.mxu0 0.0
    %1798 = vmatpush1.msra.mxu0 0.0
    %1799 = vmatprep.subr.mxu0 0.0
    %1800 = vmatpush1.msra.mxu0 0.0
    %1801 = vmatprep.subr.mxu0 0.0
    %1802 = vmatpush1.msra.mxu0 0.0
    %1803 = vmatprep.subr.mxu0 0.0
    %1804 = vmatpush1.msra.mxu0 0.0
    %1805 = vmatprep.subr.mxu0 0.0
    %1806 = vmatpush1.msra.mxu0 0.0
    %1807 = vmatprep.subr.mxu0 0.0
    %1808 = vmatpush1.msra.mxu0 0.0
    %1809 = vmatprep.subr.mxu0 0.0
    %1810 = vmatpush1.msra.mxu0 0.0
    %1811 = vmatprep.subr.mxu0 0.0
    %1812 = vmatpush1.msra.mxu0 0.0
    %1813 = vmatprep.subr.mxu0 0.0
    %1814 = vmatpush1.msra.mxu0 0.0
    %1815 = vmatprep.subr.mxu0 0.0
    %1816 = vmatpush1.msra.mxu0 0.0
    %1817 = vmatprep.subr.mxu0 0.0
    %1818 = vmatpush1.msra.mxu0 0.0
    %1819 = vmatprep.subr.mxu0 0.0
    %1820 = vmatpush1.msra.mxu0 0.0
    %1821 = vmatprep.subr.mxu0 0.0
    %1822 = vmatpush1.msra.mxu0 0.0
    %1823 = vmatprep.subr.mxu0 0.0
    %1824 = vmatpush1.msra.mxu0 0.0
    %1825 = vmatprep.subr.mxu0 0.0
    %1826 = vmatpush1.msra.mxu0 0.0
    %1827 = vmatprep.subr.mxu0 0.0
    %1828 = vmatpush1.msra.mxu0 0.0
    %1829 = vmatprep.subr.mxu0 0.0
    %1830 = vmatpush1.msra.mxu0 0.0
    %1831 = vmatprep.subr.mxu0 0.0
    %1832 = vmatpush1.msra.mxu0 0.0
    %1833 = vmatprep.mubr.f32.mxu0 0.0
    %1834 = vmatmul.mubr.f32.gmra.mrb[0].mxu0 %v1767
    %v1835 = vpop.f32.mrb[0].mxu0
    %v1836 = vadd.f32 0.0, %v1835
    %v1837 = vpop.f32.mrb[0].mxu0
    %1838 = vdwg.mxu0
    %v1840 = vrot.slane %v1836, 6
    %1841 = vrot.lane.b32.xlu0 %v1840, 64
    %v1842 = vpop.permute.xlu0 %1841
    %v1844 = vadd.f32 %v238, %v1842
    %v1845 = vmul.f32 %v1844, 0.5
    %v1846 = vtanh.pop %v1845
    %v1847 = vadd.f32 %v1846, 1.0
    %v1848 = vmul.f32 %v1847, 0.5
    %v1849 = vtanh.pop %v1844
    %v1851 = vrot.slane %v1752, 2
    %v1853 = vmul.f32 %v1848, %v1851
    %1855 = vrot.lane.b32.xlu0 %v1849, 96
    %v1856 = vpop.permute.xlu0 %1855
    %v1858 = vmul.f32 %v1848, %v1856
    %1860 = vrot.lane.b32.xlu0 %v1858, 16
    %v1861 = vpop.permute.xlu0 %1860
    %v1863 = vadd.f32 %v1853, %v1861
    %v1864 = vtanh.pop %v1863
    %1866 = vrot.lane.b32.xlu0 %v1864, 32
    %v1867 = vpop.permute.xlu0 %1866
    %v1869 = vmul.f32 %v1848, %v1867
    %1871 = vrot.lane.b32.xlu0 %v1869, 16
    %v1872 = vpop.permute.xlu0 %1871
    %1874 = vst.msk [vmem:[#allocation3] sm:$0xc] %vm458, %v1872
    %v1875 = vrot.slane %v1869, 2
    %1876 = vrot.lane.b32.xlu0 %v1875, 16
    %v1877 = vpop.permute.xlu0 %1876
    %v1878 = vsel %vm250, %v1877, 0
    %1880 = vmatprep.subr.mxu0 0.0
    %1881 = vmatpush1.msra.mxu0 %v248
    %1882 = vmatprep.subr.mxu0 0.0
    %1883 = vmatpush1.msra.mxu0 %v249
    %1884 = vmatprep.subr.mxu0 0.0
    %1885 = vmatpush1.msra.mxu0 0.0
    %1886 = vmatprep.subr.mxu0 0.0
    %1887 = vmatpush1.msra.mxu0 0.0
    %1888 = vmatprep.subr.mxu0 0.0
    %1889 = vmatpush1.msra.mxu0 0.0
    %1890 = vmatprep.subr.mxu0 0.0
    %1891 = vmatpush1.msra.mxu0 0.0
    %1892 = vmatprep.subr.mxu0 0.0
    %1893 = vmatpush1.msra.mxu0 0.0
    %1894 = vmatprep.subr.mxu0 0.0
    %1895 = vmatpush1.msra.mxu0 0.0
    %1896 = vmatprep.subr.mxu0 0.0
    %1897 = vmatpush1.msra.mxu0 0.0
    %1898 = vmatprep.subr.mxu0 0.0
    %1899 = vmatpush1.msra.mxu0 0.0
    %1900 = vmatprep.subr.mxu0 0.0
    %1901 = vmatpush1.msra.mxu0 0.0
    %1902 = vmatprep.subr.mxu0 0.0
    %1903 = vmatpush1.msra.mxu0 0.0
    %1904 = vmatprep.subr.mxu0 0.0
    %1905 = vmatpush1.msra.mxu0 0.0
    %1906 = vmatprep.subr.mxu0 0.0
    %1907 = vmatpush1.msra.mxu0 0.0
    %1908 = vmatprep.subr.mxu0 0.0
    %1909 = vmatpush1.msra.mxu0 0.0
    %1910 = vmatprep.subr.mxu0 0.0
    %1911 = vmatpush1.msra.mxu0 0.0
    %1912 = vmatprep.subr.mxu0 0.0
    %1913 = vmatpush1.msra.mxu0 0.0
    %1914 = vmatprep.subr.mxu0 0.0
    %1915 = vmatpush1.msra.mxu0 0.0
    %1916 = vmatprep.subr.mxu0 0.0
    %1917 = vmatpush1.msra.mxu0 0.0
    %1918 = vmatprep.subr.mxu0 0.0
    %1919 = vmatpush1.msra.mxu0 0.0
    %1920 = vmatprep.subr.mxu0 0.0
    %1921 = vmatpush1.msra.mxu0 0.0
    %1922 = vmatprep.subr.mxu0 0.0
    %1923 = vmatpush1.msra.mxu0 0.0
    %1924 = vmatprep.subr.mxu0 0.0
    %1925 = vmatpush1.msra.mxu0 0.0
    %1926 = vmatprep.subr.mxu0 0.0
    %1927 = vmatpush1.msra.mxu0 0.0
    %1928 = vmatprep.subr.mxu0 0.0
    %1929 = vmatpush1.msra.mxu0 0.0
    %1930 = vmatprep.subr.mxu0 0.0
    %1931 = vmatpush1.msra.mxu0 0.0
    %1932 = vmatprep.subr.mxu0 0.0
    %1933 = vmatpush1.msra.mxu0 0.0
    %1934 = vmatprep.subr.mxu0 0.0
    %1935 = vmatpush1.msra.mxu0 0.0
    %1936 = vmatprep.subr.mxu0 0.0
    %1937 = vmatpush1.msra.mxu0 0.0
    %1938 = vmatprep.subr.mxu0 0.0
    %1939 = vmatpush1.msra.mxu0 0.0
    %1940 = vmatprep.subr.mxu0 0.0
    %1941 = vmatpush1.msra.mxu0 0.0
    %1942 = vmatprep.subr.mxu0 0.0
    %1943 = vmatpush1.msra.mxu0 0.0
    %1944 = vmatprep.mubr.f32.mxu0 0.0
    %1945 = vmatmul.mubr.f32.gmra.mrb[0].mxu0 %v1878
    %v1946 = vpop.f32.mrb[0].mxu0
    %v1947 = vadd.f32 0.0, %v1946
    %v1948 = vpop.f32.mrb[0].mxu0
    %1949 = vdwg.mxu0
    %1951 = vrot.lane.b32.xlu0 %v1947, 64
    %v1952 = vpop.permute.xlu0 %1951
    %v1954 = vadd.f32 %v238, %v1952
    %v1955 = vmul.f32 %v1954, 0.5
    %v1956 = vtanh.pop %v1955
    %v1957 = vadd.f32 %v1956, 1.0
    %v1958 = vmul.f32 %v1957, 0.5
    %v1959 = vtanh.pop %v1954
    %v1961 = vrot.slane %v1863, 2
    %v1963 = vmul.f32 %v1958, %v1961
    %1965 = vrot.lane.b32.xlu0 %v1959, 96
    %v1966 = vpop.permute.xlu0 %1965
    %v1968 = vmul.f32 %v1958, %v1966
    %1970 = vrot.lane.b32.xlu0 %v1968, 16
    %v1971 = vpop.permute.xlu0 %1970
    %v1973 = vadd.f32 %v1963, %v1971
    %v1974 = vtanh.pop %v1973
    %1976 = vrot.lane.b32.xlu0 %v1974, 32
    %v1977 = vpop.permute.xlu0 %1976
    %v1979 = vmul.f32 %v1958, %v1977
    %1981 = vrot.lane.b32.xlu0 %v1979, 16
    %v1982 = vpop.permute.xlu0 %1981
    %1984 = vst.msk [vmem:[#allocation3] sm:$0x3] %vm351, %v1982
    %v1985 = vld [vmem:[#allocation2] sm:$0xff]
    %v1986 = vld [vmem:[#allocation2 + $0x8] sm:$0xff]
    %v1987 = vld [vmem:[%s6] sm:$0xff]
    %v1988 = vld [vmem:[%s6 + $0x8] sm:$0xff]
    %v1989 = vld [vmem:[#allocation3] sm:$0xff]
    %v1990 = vld [vmem:[#allocation3 + $0x8] sm:$0xff]
    %v1991 = vld [vmem:[%s7] sm:$0xff]
    %v1992 = vld [vmem:[%s7 + $0x8] sm:$0xff]
    %v1994 = vsel %vm250, %v1989, 0
    %v1997 = vsel %vm250, %v1990, 0
    %1999 = vmatprep.subr.mxu0 0.0
    %2000 = vmatpush1.msra.mxu0 %v1991
    %2001 = vmatprep.subr.mxu0 0.0
    %2002 = vmatpush1.msra.mxu0 %v1992
    %2003 = vmatprep.subr.mxu0 0.0
    %2004 = vmatpush1.msra.mxu0 0.0
    %2005 = vmatprep.subr.mxu0 0.0
    %2006 = vmatpush1.msra.mxu0 0.0
    %2007 = vmatprep.subr.mxu0 0.0
    %2008 = vmatpush1.msra.mxu0 0.0
    %2009 = vmatprep.subr.mxu0 0.0
    %2010 = vmatpush1.msra.mxu0 0.0
    %2011 = vmatprep.subr.mxu0 0.0
    %2012 = vmatpush1.msra.mxu0 0.0
    %2013 = vmatprep.subr.mxu0 0.0
    %2014 = vmatpush1.msra.mxu0 0.0
    %2015 = vmatprep.subr.mxu0 0.0
    %2016 = vmatpush1.msra.mxu0 0.0
    %2017 = vmatprep.subr.mxu0 0.0
    %2018 = vmatpush1.msra.mxu0 0.0
    %2019 = vmatprep.subr.mxu0 0.0
    %2020 = vmatpush1.msra.mxu0 0.0
    %2021 = vmatprep.subr.mxu0 0.0
    %2022 = vmatpush1.msra.mxu0 0.0
    %2023 = vmatprep.subr.mxu0 0.0
    %2024 = vmatpush1.msra.mxu0 0.0
    %2025 = vmatprep.subr.mxu0 0.0
    %2026 = vmatpush1.msra.mxu0 0.0
    %2027 = vmatprep.subr.mxu0 0.0
    %2028 = vmatpush1.msra.mxu0 0.0
    %2029 = vmatprep.subr.mxu0 0.0
    %2030 = vmatpush1.msra.mxu0 0.0
    %2031 = vmatprep.subr.mxu0 0.0
    %2032 = vmatpush1.msra.mxu0 0.0
    %2033 = vmatprep.subr.mxu0 0.0
    %2034 = vmatpush1.msra.mxu0 0.0
    %2035 = vmatprep.subr.mxu0 0.0
    %2036 = vmatpush1.msra.mxu0 0.0
    %2037 = vmatprep.subr.mxu0 0.0
    %2038 = vmatpush1.msra.mxu0 0.0
    %2039 = vmatprep.subr.mxu0 0.0
    %2040 = vmatpush1.msra.mxu0 0.0
    %2041 = vmatprep.subr.mxu0 0.0
    %2042 = vmatpush1.msra.mxu0 0.0
    %2043 = vmatprep.subr.mxu0 0.0
    %2044 = vmatpush1.msra.mxu0 0.0
    %2045 = vmatprep.subr.mxu0 0.0
    %2046 = vmatpush1.msra.mxu0 0.0
    %2047 = vmatprep.subr.mxu0 0.0
    %2048 = vmatpush1.msra.mxu0 0.0
    %2049 = vmatprep.subr.mxu0 0.0
    %2050 = vmatpush1.msra.mxu0 0.0
    %2051 = vmatprep.subr.mxu0 0.0
    %2052 = vmatpush1.msra.mxu0 0.0
    %2053 = vmatprep.subr.mxu0 0.0
    %2054 = vmatpush1.msra.mxu0 0.0
    %2055 = vmatprep.subr.mxu0 0.0
    %2056 = vmatpush1.msra.mxu0 0.0
    %2057 = vmatprep.subr.mxu0 0.0
    %2058 = vmatpush1.msra.mxu0 0.0
    %2059 = vmatprep.subr.mxu0 0.0
    %2060 = vmatpush1.msra.mxu0 0.0
    %2061 = vmatprep.subr.mxu0 0.0
    %2062 = vmatpush1.msra.mxu0 0.0
    %2063 = vmatprep.mubr.f32.mxu0 0.0
    %2064 = vmatmul.mubr.f32.gmra.mrb[0].mxu0 %v1994
    %v2065 = vpop.f32.mrb[0].mxu0
    %v2066 = vadd.f32 0.0, %v2065
    %v2067 = vpop.f32.mrb[0].mxu0
    %2068 = vmatprep.mubr.f32.mxu0 0.0
    %2069 = vmatmul.mubr.f32.gmra.mrb[0].mxu0 %v1997
    %v2070 = vpop.f32.mrb[0].mxu0
    %v2071 = vadd.f32 0.0, %v2070
    %v2072 = vpop.f32.mrb[0].mxu0
    %2073 = vdwg.mxu0
    %v2075 = vsel %vm250, %v1985, 0
    %v2078 = vsel %vm250, %v1986, 0
    %2080 = vmatprep.subr.mxu0 0.0
    %2081 = vmatpush1.msra.mxu0 %v1987
    %2082 = vmatprep.subr.mxu0 0.0
    %2083 = vmatpush1.msra.mxu0 %v1988
    %2084 = vmatprep.subr.mxu0 0.0
    %2085 = vmatpush1.msra.mxu0 0.0
    %2086 = vmatprep.subr.mxu0 0.0
    %2087 = vmatpush1.msra.mxu0 0.0
    %2088 = vmatprep.subr.mxu0 0.0
    %2089 = vmatpush1.msra.mxu0 0.0
    %2090 = vmatprep.subr.mxu0 0.0
    %2091 = vmatpush1.msra.mxu0 0.0
    %2092 = vmatprep.subr.mxu0 0.0
    %2093 = vmatpush1.msra.mxu0 0.0
    %2094 = vmatprep.subr.mxu0 0.0
    %2095 = vmatpush1.msra.mxu0 0.0
    %2096 = vmatprep.subr.mxu0 0.0
    %2097 = vmatpush1.msra.mxu0 0.0
    %2098 = vmatprep.subr.mxu0 0.0
    %2099 = vmatpush1.msra.mxu0 0.0
    %2100 = vmatprep.subr.mxu0 0.0
    %2101 = vmatpush1.msra.mxu0 0.0
    %2102 = vmatprep.subr.mxu0 0.0
    %2103 = vmatpush1.msra.mxu0 0.0
    %2104 = vmatprep.subr.mxu0 0.0
    %2105 = vmatpush1.msra.mxu0 0.0
    %2106 = vmatprep.subr.mxu0 0.0
    %2107 = vmatpush1.msra.mxu0 0.0
    %2108 = vmatprep.subr.mxu0 0.0
    %2109 = vmatpush1.msra.mxu0 0.0
    %2110 = vmatprep.subr.mxu0 0.0
    %2111 = vmatpush1.msra.mxu0 0.0
    %2112 = vmatprep.subr.mxu0 0.0
    %2113 = vmatpush1.msra.mxu0 0.0
    %2114 = vmatprep.subr.mxu0 0.0
    %2115 = vmatpush1.msra.mxu0 0.0
    %2116 = vmatprep.subr.mxu0 0.0
    %2117 = vmatpush1.msra.mxu0 0.0
    %2118 = vmatprep.subr.mxu0 0.0
    %2119 = vmatpush1.msra.mxu0 0.0
    %2120 = vmatprep.subr.mxu0 0.0
    %2121 = vmatpush1.msra.mxu0 0.0
    %2122 = vmatprep.subr.mxu0 0.0
    %2123 = vmatpush1.msra.mxu0 0.0
    %2124 = vmatprep.subr.mxu0 0.0
    %2125 = vmatpush1.msra.mxu0 0.0
    %2126 = vmatprep.subr.mxu0 0.0
    %2127 = vmatpush1.msra.mxu0 0.0
    %2128 = vmatprep.subr.mxu0 0.0
    %2129 = vmatpush1.msra.mxu0 0.0
    %2130 = vmatprep.subr.mxu0 0.0
    %2131 = vmatpush1.msra.mxu0 0.0
    %2132 = vmatprep.subr.mxu0 0.0
    %2133 = vmatpush1.msra.mxu0 0.0
    %2134 = vmatprep.subr.mxu0 0.0
    %2135 = vmatpush1.msra.mxu0 0.0
    %2136 = vmatprep.subr.mxu0 0.0
    %2137 = vmatpush1.msra.mxu0 0.0
    %2138 = vmatprep.subr.mxu0 0.0
    %2139 = vmatpush1.msra.mxu0 0.0
    %2140 = vmatprep.subr.mxu0 0.0
    %2141 = vmatpush1.msra.mxu0 0.0
    %2142 = vmatprep.subr.mxu0 0.0
    %2143 = vmatpush1.msra.mxu0 0.0
    %2144 = vmatprep.mubr.f32.mxu0 0.0
    %2145 = vmatmul.mubr.f32.gmra.mrb[0].mxu0 %v2075
    %v2146 = vpop.f32.mrb[0].mxu0
    %v2147 = vadd.f32 %v2066, %v2146
    %v2148 = vpop.f32.mrb[0].mxu0
    %2149 = vmatprep.mubr.f32.mxu0 0.0
    %2150 = vmatmul.mubr.f32.gmra.mrb[0].mxu0 %v2078
    %v2151 = vpop.f32.mrb[0].mxu0
    %v2152 = vadd.f32 %v2071, %v2151
    %v2153 = vpop.f32.mrb[0].mxu0
    %2154 = vdwg.mxu0
    %v2155 = vld [vmem:[%s8] sm:$0x1]
    %v2157 = vlaneseq
    %v2158 = vshrl.u32 %v2157, 7
    %v2159 = vsub.s32 0, %v2158
    %v2160 = vrot.slane %v2155, %v2159
    %v2162 = vadd.f32 %v2147, %v2160
    %v2163 = vadd.f32 %v2152, %v2160
    %vm2164 = vcmask 39936
    %2165 = vst.msk [vmem:[%s12] sm:$0xff] %vm2164, %v2162
    %2166 = vst.msk [vmem:[%s12 + $0x8] sm:$0xff] %vm2164, %v2163
    %v2167 = vld [vmem:[%s9] sm:$0x1f]
    %v2168 = vld [vmem:[%s10] sm:$0x1]
    %v2170 = vlaneseq
    %v2171 = vshrl.u32 %v2170, 7
    %v2172 = vsub.s32 0, %v2171
    %v2173 = vrot.slane %v2168, %v2172
    %v2175 = vadd.f32 %v2173, %v2162
    %v2178 = vunpack.c.l.s4 1966171168
    %v2179 = vunpack.c.0.s8 %v2178
    %v2180 = vlaneseq
    %v2181 = vshrl.u32 %v2180, 7
    %v2182 = vsub.s32 %v2179, %v2181
    %v2183 = vrot.slane %v2175, %v2182
    %v2184 = vcombine.high %v2183, %v2183
    %v2186 = vunpack.c.l.s4 1966171168
    %v2187 = vunpack.c.0.s8 %v2186
    %v2188 = vlaneseq
    %v2189 = vshrl.u32 %v2188, 7
    %v2190 = vsub.s32 %v2187, %v2189
    %v2191 = vrot.slane %v2183, %v2190
    %v2193 = vunpack.c.l.s4 1966171168
    %v2194 = vunpack.c.0.s8 %v2193
    %v2195 = vlaneseq
    %v2196 = vshrl.u32 %v2195, 7
    %v2197 = vsub.s32 %v2194, %v2196
    %v2198 = vrot.slane %v2184, %v2197
    %v2199 = vlaneseq
    %v2200 = vshrl.u32 %v2199, 7
    %v2201 = vsub.s32 0, %v2200
    %v2202 = vrot.slane %v2191, %v2201
    %v2203 = vlaneseq
    %v2204 = vshrl.u32 %v2203, 7
    %v2205 = vsub.s32 0, %v2204
    %v2206 = vrot.slane %v2198, %v2205
    %v2209 = vadd.f32 %v2202, %v2167
    %v2210 = vadd.f32 %v2206, %v2167
    %v2211 = vlaneseq
    %v2212 = vshrl.u32 %v2211, 7
    %v2213 = vsub.s32 2, %v2212
    %v2214 = vrot.slane %v2162, %v2213
    %2216 = vbcast.lane.b32.xlu0 %v2214, 256
    %v2217 = vpop.permute.xlu0 %2216
    %v2218 = vlaneseq
    %v2219 = vshrl.u32 %v2218, 7
    %v2220 = vsub.s32 3, %v2219
    %v2221 = vrot.slane %v2162, %v2220
    %2223 = vbcast.lane.b32.xlu0 %v2221, 256
    %v2224 = vpop.permute.xlu0 %2223
    %v2225 = vadd.f32 %v2209, %v2217
    %v2226 = vadd.f32 %v2210, %v2224
    %vm2227 = vcmask 36864
    %v2228 = vsel %vm2227, %v2225, -inf
    %2229 = vmax.xlane.f32.xlu0 %v2228
    %v2230 = vpop.xlane.xlu0 %2229
    %v2231 = vsel %vm2227, %v2226, -inf
    %2232 = vmax.xlane.f32.xlu0 %v2231
    %v2233 = vpop.xlane.xlu0 %2232
    %vm2234 = vcmp.eq.f32.partialorder %v2225, %v2230
    %vm2235 = vcmp.eq.f32.partialorder %v2226, %v2233
    %v2236 = vsel %vm2234, %v47, 5
    %v2237 = vsel %vm2235, %v47, 5
    %v2238 = vsel %vm2227, %v2236, 2147483647
    %v2239 = vand.u32 %v2238, 65535
    %v2240 = vshra.s32 %v2238, 16
    %v2241 = vcvt.s32.f32 %v2239
    %v2242 = vcvt.s32.f32 %v2240
    %2243 = vmin.xlane.f32.xlu0 %v2242
    %v2244 = vpop.xlane.xlu0 %2243
    %vm2245 = vcmp.eq.f32.partialorder %v2242, %v2244
    %v2246 = vsel %vm2245, %v2241, inf
    %2247 = vmin.xlane.f32.xlu0 %v2246
    %v2248 = vpop.xlane.xlu0 %2247
    %v2249 = vcvt.f32.s32 %v2248
    %v2250 = vcvt.f32.s32 %v2244
    %v2251 = vshll.u32 %v2250, 16
    %v2252 = vadd.s32 %v2251, %v2249
    %v2253 = vsel %vm2227, %v2237, 2147483647
    %v2254 = vand.u32 %v2253, 65535
    %v2255 = vshra.s32 %v2253, 16
    %v2256 = vcvt.s32.f32 %v2254
    %v2257 = vcvt.s32.f32 %v2255
    %2258 = vmin.xlane.f32.xlu0 %v2257
    %v2259 = vpop.xlane.xlu0 %2258
    %vm2260 = vcmp.eq.f32.partialorder %v2257, %v2259
    %v2261 = vsel %vm2260, %v2256, inf
    %2262 = vmin.xlane.f32.xlu0 %v2261
    %v2263 = vpop.xlane.xlu0 %2262
    %v2264 = vcvt.f32.s32 %v2263
    %v2265 = vcvt.f32.s32 %v2259
    %v2266 = vshll.u32 %v2265, 16
    %v2267 = vadd.s32 %v2266, %v2264
    %v2269 = vlaneseq
    %v2270 = vshrl.u32 %v2269, 7
    %v2271 = vsub.s32 0, %v2270
    %v2272 = vrot.slane %v2167, %v2271
    %2274 = vbcast.lane.b32.xlu0 %v2272, 256
    %v2275 = vpop.permute.xlu0 %2274
    %v2276 = vlaneseq
    %v2277 = vshrl.u32 %v2276, 7
    %v2278 = vsub.s32 1, %v2277
    %v2279 = vrot.slane %v2167, %v2278
    %2281 = vbcast.lane.b32.xlu0 %v2279, 256
    %v2282 = vpop.permute.xlu0 %2281
    %v2283 = vlaneseq
    %v2284 = vshrl.u32 %v2283, 7
    %v2285 = vsub.s32 2, %v2284
    %v2286 = vrot.slane %v2167, %v2285
    %2288 = vbcast.lane.b32.xlu0 %v2286, 256
    %v2289 = vpop.permute.xlu0 %2288
    %v2290 = vlaneseq
    %v2291 = vshrl.u32 %v2290, 7
    %v2292 = vsub.s32 3, %v2291
    %v2293 = vrot.slane %v2167, %v2292
    %2295 = vbcast.lane.b32.xlu0 %v2293, 256
    %v2296 = vpop.permute.xlu0 %2295
    %v2297 = vlaneseq
    %v2298 = vshrl.u32 %v2297, 7
    %v2299 = vsub.s32 4, %v2298
    %v2300 = vrot.slane %v2167, %v2299
    %2302 = vbcast.lane.b32.xlu0 %v2300, 256
    %v2303 = vpop.permute.xlu0 %2302
    %v2309 = vadd.f32 %v2230, %v2275
    %v2310 = vadd.f32 %v2230, %v2282
    %v2311 = vadd.f32 %v2230, %v2289
    %v2312 = vadd.f32 %v2230, %v2296
    %v2313 = vadd.f32 %v2230, %v2303
    %v2314 = vadd.f32 %v2233, %v2275
    %v2315 = vadd.f32 %v2233, %v2282
    %v2316 = vadd.f32 %v2233, %v2289
    %v2317 = vadd.f32 %v2233, %v2296
    %v2318 = vadd.f32 %v2233, %v2303
    %v2319 = vlaneseq
    %v2320 = vshrl.u32 %v2319, 7
    %v2321 = vsub.s32 4, %v2320
    %v2322 = vrot.slane %v2162, %v2321
    %2324 = vbcast.lane.b32.xlu0 %v2322, 256
    %v2325 = vpop.permute.xlu0 %2324
    %v2326 = vlaneseq
    %v2327 = vshrl.u32 %v2326, 7
    %v2328 = vsub.s32 5, %v2327
    %v2329 = vrot.slane %v2162, %v2328
    %2331 = vbcast.lane.b32.xlu0 %v2329, 256
    %v2332 = vpop.permute.xlu0 %2331
    %v2335 = vlaneseq
    %v2336 = vshrl.u32 %v2335, 7
    %v2337 = vsub.s32 0, %v2336
    %v2338 = vrot.slane %v2325, %v2337
    %v2339 = vlaneseq
    %v2340 = vshrl.u32 %v2339, 7
    %v2341 = vsub.s32 1, %v2340
    %v2342 = vrot.slane %v2325, %v2341
    %v2343 = vlaneseq
    %v2344 = vshrl.u32 %v2343, 7
    %v2345 = vsub.s32 2, %v2344
    %v2346 = vrot.slane %v2325, %v2345
    %v2347 = vlaneseq
    %v2348 = vshrl.u32 %v2347, 7
    %v2349 = vsub.s32 3, %v2348
    %v2350 = vrot.slane %v2325, %v2349
    %v2351 = vlaneseq
    %v2352 = vshrl.u32 %v2351, 7
    %v2353 = vsub.s32 4, %v2352
    %v2354 = vrot.slane %v2325, %v2353
    %v2355 = vlaneseq
    %v2356 = vshrl.u32 %v2355, 7
    %v2357 = vsub.s32 0, %v2356
    %v2358 = vrot.slane %v2332, %v2357
    %v2359 = vlaneseq
    %v2360 = vshrl.u32 %v2359, 7
    %v2361 = vsub.s32 1, %v2360
    %v2362 = vrot.slane %v2332, %v2361
    %v2363 = vlaneseq
    %v2364 = vshrl.u32 %v2363, 7
    %v2365 = vsub.s32 2, %v2364
    %v2366 = vrot.slane %v2332, %v2365
    %v2367 = vlaneseq
    %v2368 = vshrl.u32 %v2367, 7
    %v2369 = vsub.s32 3, %v2368
    %v2370 = vrot.slane %v2332, %v2369
    %v2371 = vlaneseq
    %v2372 = vshrl.u32 %v2371, 7
    %v2373 = vsub.s32 4, %v2372
    %v2374 = vrot.slane %v2332, %v2373
    %v2385 = vadd.f32 %v2309, %v2338
    %v2386 = vadd.f32 %v2310, %v2342
    %v2387 = vadd.f32 %v2311, %v2346
    %v2388 = vadd.f32 %v2312, %v2350
    %v2389 = vadd.f32 %v2313, %v2354
    %v2390 = vadd.f32 %v2314, %v2358
    %v2391 = vadd.f32 %v2315, %v2362
    %v2392 = vadd.f32 %v2316, %v2366
    %v2393 = vadd.f32 %v2317, %v2370
    %v2394 = vadd.f32 %v2318, %v2374
    %2405 = vset.pattern.permute.xlu0 0
    %2406 = vperm.xlu0 %2405, %v2385
    %v2407 = vpop.permute.xlu0 %2406
    %2408 = vset.pattern.permute.xlu0 0
    %2409 = vperm.xlu0 %2408, %v2386
    %v2410 = vpop.permute.xlu0 %2409
    %2411 = vset.pattern.permute.xlu0 0
    %2412 = vperm.xlu0 %2411, %v2387
    %v2413 = vpop.permute.xlu0 %2412
    %2414 = vset.pattern.permute.xlu0 0
    %2415 = vperm.xlu0 %2414, %v2388
    %v2416 = vpop.permute.xlu0 %2415
    %2417 = vset.pattern.permute.xlu0 0
    %2418 = vperm.xlu0 %2417, %v2389
    %v2419 = vpop.permute.xlu0 %2418
    %2420 = vset.pattern.permute.xlu0 0
    %2421 = vperm.xlu0 %2420, %v2390
    %v2422 = vpop.permute.xlu0 %2421
    %2423 = vset.pattern.permute.xlu0 0
    %2424 = vperm.xlu0 %2423, %v2391
    %v2425 = vpop.permute.xlu0 %2424
    %2426 = vset.pattern.permute.xlu0 0
    %2427 = vperm.xlu0 %2426, %v2392
    %v2428 = vpop.permute.xlu0 %2427
    %2429 = vset.pattern.permute.xlu0 0
    %2430 = vperm.xlu0 %2429, %v2393
    %v2431 = vpop.permute.xlu0 %2430
    %2432 = vset.pattern.permute.xlu0 0
    %2433 = vperm.xlu0 %2432, %v2394
    %v2434 = vpop.permute.xlu0 %2433
    %v2435 = vlaneseq
    %v2436 = vshrl.u32 %v2435, 7
    %v2437 = vsub.s32 %v47, %v2436
    %v2438 = vrot.slane %v2407, %v2437
    %v2439 = vlaneseq
    %v2440 = vshrl.u32 %v2439, 7
    %v2441 = vsub.s32 %v47, %v2440
    %v2442 = vrot.slane %v2410, %v2441
    %v2443 = vlaneseq
    %v2444 = vshrl.u32 %v2443, 7
    %v2445 = vsub.s32 %v47, %v2444
    %v2446 = vrot.slane %v2413, %v2445
    %v2447 = vlaneseq
    %v2448 = vshrl.u32 %v2447, 7
    %v2449 = vsub.s32 %v47, %v2448
    %v2450 = vrot.slane %v2416, %v2449
    %v2451 = vlaneseq
    %v2452 = vshrl.u32 %v2451, 7
    %v2453 = vsub.s32 %v47, %v2452
    %v2454 = vrot.slane %v2419, %v2453
    %v2455 = vlaneseq
    %v2456 = vshrl.u32 %v2455, 7
    %v2457 = vsub.s32 %v47, %v2456
    %v2458 = vrot.slane %v2422, %v2457
    %v2459 = vlaneseq
    %v2460 = vshrl.u32 %v2459, 7
    %v2461 = vsub.s32 %v47, %v2460
    %v2462 = vrot.slane %v2425, %v2461
    %v2463 = vlaneseq
    %v2464 = vshrl.u32 %v2463, 7
    %v2465 = vsub.s32 %v47, %v2464
    %v2466 = vrot.slane %v2428, %v2465
    %v2467 = vlaneseq
    %v2468 = vshrl.u32 %v2467, 7
    %v2469 = vsub.s32 %v47, %v2468
    %v2470 = vrot.slane %v2431, %v2469
    %v2471 = vlaneseq
    %v2472 = vshrl.u32 %v2471, 7
    %v2473 = vsub.s32 %v47, %v2472
    %v2474 = vrot.slane %v2434, %v2473
    %vm2475 = vcmask 1041409
    %v2476 = vsel %vm2475, %v2442, %v2438
    %vm2477 = vcmask 1042434
    %v2478 = vsel %vm2477, %v2446, %v2476
    %vm2479 = vcmask 1043459
    %v2480 = vsel %vm2479, %v2450, %v2478
    %vm2481 = vcmask 1044484
    %v2482 = vsel %vm2481, %v2454, %v2480
    %v2483 = vsel %vm2475, %v2462, %v2458
    %v2484 = vsel %vm2477, %v2466, %v2483
    %v2485 = vsel %vm2479, %v2470, %v2484
    %v2486 = vsel %vm2481, %v2474, %v2485
    %v2489 = vsel %vm2227, %v2482, -inf
    %2490 = vmax.xlane.f32.xlu0 %v2489
    %v2491 = vpop.xlane.xlu0 %2490
    %v2492 = vsel %vm2227, %v2486, -inf
    %2493 = vmax.xlane.f32.xlu0 %v2492
    %v2494 = vpop.xlane.xlu0 %2493
    %v2497 = vlaneseq
    %v2498 = vshrl.u32 %v2497, 7
    %v2499 = vsub.s32 0, %v2498
    %v2500 = vrot.slane %v2491, %v2499
    %v2501 = vlaneseq
    %v2502 = vshrl.u32 %v2501, 7
    %v2503 = vsub.s32 1, %v2502
    %v2504 = vrot.slane %v2491, %v2503
    %v2505 = vlaneseq
    %v2506 = vshrl.u32 %v2505, 7
    %v2507 = vsub.s32 2, %v2506
    %v2508 = vrot.slane %v2491, %v2507
    %v2509 = vlaneseq
    %v2510 = vshrl.u32 %v2509, 7
    %v2511 = vsub.s32 3, %v2510
    %v2512 = vrot.slane %v2491, %v2511
    %v2513 = vlaneseq
    %v2514 = vshrl.u32 %v2513, 7
    %v2515 = vsub.s32 4, %v2514
    %v2516 = vrot.slane %v2491, %v2515
    %v2517 = vlaneseq
    %v2518 = vshrl.u32 %v2517, 7
    %v2519 = vsub.s32 0, %v2518
    %v2520 = vrot.slane %v2494, %v2519
    %v2521 = vlaneseq
    %v2522 = vshrl.u32 %v2521, 7
    %v2523 = vsub.s32 1, %v2522
    %v2524 = vrot.slane %v2494, %v2523
    %v2525 = vlaneseq
    %v2526 = vshrl.u32 %v2525, 7
    %v2527 = vsub.s32 2, %v2526
    %v2528 = vrot.slane %v2494, %v2527
    %v2529 = vlaneseq
    %v2530 = vshrl.u32 %v2529, 7
    %v2531 = vsub.s32 3, %v2530
    %v2532 = vrot.slane %v2494, %v2531
    %v2533 = vlaneseq
    %v2534 = vshrl.u32 %v2533, 7
    %v2535 = vsub.s32 4, %v2534
    %v2536 = vrot.slane %v2494, %v2535
    %vm2547 = vcmp.eq.f32.partialorder %v2385, %v2500
    %vm2548 = vcmp.eq.f32.partialorder %v2386, %v2504
    %vm2549 = vcmp.eq.f32.partialorder %v2387, %v2508
    %vm2550 = vcmp.eq.f32.partialorder %v2388, %v2512
    %vm2551 = vcmp.eq.f32.partialorder %v2389, %v2516
    %vm2552 = vcmp.eq.f32.partialorder %v2390, %v2520
    %vm2553 = vcmp.eq.f32.partialorder %v2391, %v2524
    %vm2554 = vcmp.eq.f32.partialorder %v2392, %v2528
    %vm2555 = vcmp.eq.f32.partialorder %v2393, %v2532
    %vm2556 = vcmp.eq.f32.partialorder %v2394, %v2536
    %2558 = vbcast.lane.b32.xlu0 %v47, 256
    %v2559 = vpop.permute.xlu0 %2558
    %v2560 = vsel %vm2547, %v2559, 5
    %v2561 = vsel %vm2548, %v2559, 5
    %v2562 = vsel %vm2549, %v2559, 5
    %v2563 = vsel %vm2550, %v2559, 5
    %v2564 = vsel %vm2551, %v2559, 5
    %v2565 = vsel %vm2552, %v2559, 5
    %v2566 = vsel %vm2553, %v2559, 5
    %v2567 = vsel %vm2554, %v2559, 5
    %v2568 = vsel %vm2555, %v2559, 5
    %v2569 = vsel %vm2556, %v2559, 5
    %2570 = vset.pattern.permute.xlu0 0
    %2571 = vperm.xlu0 %2570, %v2560
    %v2572 = vpop.permute.xlu0 %2571
    %2573 = vset.pattern.permute.xlu0 0
    %2574 = vperm.xlu0 %2573, %v2561
    %v2575 = vpop.permute.xlu0 %2574
    %2576 = vset.pattern.permute.xlu0 0
    %2577 = vperm.xlu0 %2576, %v2562
    %v2578 = vpop.permute.xlu0 %2577
    %2579 = vset.pattern.permute.xlu0 0
    %2580 = vperm.xlu0 %2579, %v2563
    %v2581 = vpop.permute.xlu0 %2580
    %2582 = vset.pattern.permute.xlu0 0
    %2583 = vperm.xlu0 %2582, %v2564
    %v2584 = vpop.permute.xlu0 %2583
    %2585 = vset.pattern.permute.xlu0 0
    %2586 = vperm.xlu0 %2585, %v2565
    %v2587 = vpop.permute.xlu0 %2586
    %2588 = vset.pattern.permute.xlu0 0
    %2589 = vperm.xlu0 %2588, %v2566
    %v2590 = vpop.permute.xlu0 %2589
    %2591 = vset.pattern.permute.xlu0 0
    %2592 = vperm.xlu0 %2591, %v2567
    %v2593 = vpop.permute.xlu0 %2592
    %2594 = vset.pattern.permute.xlu0 0
    %2595 = vperm.xlu0 %2594, %v2568
    %v2596 = vpop.permute.xlu0 %2595
    %2597 = vset.pattern.permute.xlu0 0
    %2598 = vperm.xlu0 %2597, %v2569
    %v2599 = vpop.permute.xlu0 %2598
    %v2600 = vlaneseq
    %v2601 = vshrl.u32 %v2600, 7
    %v2602 = vsub.s32 %v47, %v2601
    %v2603 = vrot.slane %v2572, %v2602
    %v2604 = vlaneseq
    %v2605 = vshrl.u32 %v2604, 7
    %v2606 = vsub.s32 %v47, %v2605
    %v2607 = vrot.slane %v2575, %v2606
    %v2608 = vlaneseq
    %v2609 = vshrl.u32 %v2608, 7
    %v2610 = vsub.s32 %v47, %v2609
    %v2611 = vrot.slane %v2578, %v2610
    %v2612 = vlaneseq
    %v2613 = vshrl.u32 %v2612, 7
    %v2614 = vsub.s32 %v47, %v2613
    %v2615 = vrot.slane %v2581, %v2614
    %v2616 = vlaneseq
    %v2617 = vshrl.u32 %v2616, 7
    %v2618 = vsub.s32 %v47, %v2617
    %v2619 = vrot.slane %v2584, %v2618
    %v2620 = vlaneseq
    %v2621 = vshrl.u32 %v2620, 7
    %v2622 = vsub.s32 %v47, %v2621
    %v2623 = vrot.slane %v2587, %v2622
    %v2624 = vlaneseq
    %v2625 = vshrl.u32 %v2624, 7
    %v2626 = vsub.s32 %v47, %v2625
    %v2627 = vrot.slane %v2590, %v2626
    %v2628 = vlaneseq
    %v2629 = vshrl.u32 %v2628, 7
    %v2630 = vsub.s32 %v47, %v2629
    %v2631 = vrot.slane %v2593, %v2630
    %v2632 = vlaneseq
    %v2633 = vshrl.u32 %v2632, 7
    %v2634 = vsub.s32 %v47, %v2633
    %v2635 = vrot.slane %v2596, %v2634
    %v2636 = vlaneseq
    %v2637 = vshrl.u32 %v2636, 7
    %v2638 = vsub.s32 %v47, %v2637
    %v2639 = vrot.slane %v2599, %v2638
    %v2640 = vsel %vm2475, %v2607, %v2603
    %v2641 = vsel %vm2477, %v2611, %v2640
    %v2642 = vsel %vm2479, %v2615, %v2641
    %v2643 = vsel %vm2481, %v2619, %v2642
    %v2644 = vsel %vm2475, %v2627, %v2623
    %v2645 = vsel %vm2477, %v2631, %v2644
    %v2646 = vsel %vm2479, %v2635, %v2645
    %v2647 = vsel %vm2481, %v2639, %v2646
    %v2648 = vsel %vm2227, %v2643, 2147483647
    %v2649 = vand.u32 %v2648, 65535
    %v2650 = vshra.s32 %v2648, 16
    %v2651 = vcvt.s32.f32 %v2649
    %v2652 = vcvt.s32.f32 %v2650
    %2653 = vmin.xlane.f32.xlu0 %v2652
    %v2654 = vpop.xlane.xlu0 %2653
    %vm2655 = vcmp.eq.f32.partialorder %v2652, %v2654
    %v2656 = vsel %vm2655, %v2651, inf
    %2657 = vmin.xlane.f32.xlu0 %v2656
    %v2658 = vpop.xlane.xlu0 %2657
    %v2659 = vcvt.f32.s32 %v2658
    %v2660 = vcvt.f32.s32 %v2654
    %v2661 = vshll.u32 %v2660, 16
    %v2662 = vadd.s32 %v2661, %v2659
    %v2663 = vsel %vm2227, %v2647, 2147483647
    %v2664 = vand.u32 %v2663, 65535
    %v2665 = vshra.s32 %v2663, 16
    %v2666 = vcvt.s32.f32 %v2664
    %v2667 = vcvt.s32.f32 %v2665
    %2668 = vmin.xlane.f32.xlu0 %v2667
    %v2669 = vpop.xlane.xlu0 %2668
    %vm2670 = vcmp.eq.f32.partialorder %v2667, %v2669
    %v2671 = vsel %vm2670, %v2666, inf
    %2672 = vmin.xlane.f32.xlu0 %v2671
    %v2673 = vpop.xlane.xlu0 %2672
    %v2674 = vcvt.f32.s32 %v2673
    %v2675 = vcvt.f32.s32 %v2669
    %v2676 = vshll.u32 %v2675, 16
    %v2677 = vadd.s32 %v2676, %v2674
    %v2678 = vadd.f32 %v2491, %v2275
    %v2679 = vadd.f32 %v2491, %v2282
    %v2680 = vadd.f32 %v2491, %v2289
    %v2681 = vadd.f32 %v2491, %v2296
    %v2682 = vadd.f32 %v2491, %v2303
    %v2683 = vadd.f32 %v2494, %v2275
    %v2684 = vadd.f32 %v2494, %v2282
    %v2685 = vadd.f32 %v2494, %v2289
    %v2686 = vadd.f32 %v2494, %v2296
    %v2687 = vadd.f32 %v2494, %v2303
    %v2688 = vlaneseq
    %v2689 = vshrl.u32 %v2688, 7
    %v2690 = vsub.s32 6, %v2689
    %v2691 = vrot.slane %v2162, %v2690
    %2693 = vbcast.lane.b32.xlu0 %v2691, 256
    %v2694 = vpop.permute.xlu0 %2693
    %v2695 = vlaneseq
    %v2696 = vshrl.u32 %v2695, 7
    %v2697 = vsub.s32 7, %v2696
    %v2698 = vrot.slane %v2162, %v2697
    %2700 = vbcast.lane.b32.xlu0 %v2698, 256
    %v2701 = vpop.permute.xlu0 %2700
    %v2704 = vlaneseq
    %v2705 = vshrl.u32 %v2704, 7
    %v2706 = vsub.s32 0, %v2705
    %v2707 = vrot.slane %v2694, %v2706
    %v2708 = vlaneseq
    %v2709 = vshrl.u32 %v2708, 7
    %v2710 = vsub.s32 1, %v2709
    %v2711 = vrot.slane %v2694, %v2710
    %v2712 = vlaneseq
    %v2713 = vshrl.u32 %v2712, 7
    %v2714 = vsub.s32 2, %v2713
    %v2715 = vrot.slane %v2694, %v2714
    %v2716 = vlaneseq
    %v2717 = vshrl.u32 %v2716, 7
    %v2718 = vsub.s32 3, %v2717
    %v2719 = vrot.slane %v2694, %v2718
    %v2720 = vlaneseq
    %v2721 = vshrl.u32 %v2720, 7
    %v2722 = vsub.s32 4, %v2721
    %v2723 = vrot.slane %v2694, %v2722
    %v2724 = vlaneseq
    %v2725 = vshrl.u32 %v2724, 7
    %v2726 = vsub.s32 0, %v2725
    %v2727 = vrot.slane %v2701, %v2726
    %v2728 = vlaneseq
    %v2729 = vshrl.u32 %v2728, 7
    %v2730 = vsub.s32 1, %v2729
    %v2731 = vrot.slane %v2701, %v2730
    %v2732 = vlaneseq
    %v2733 = vshrl.u32 %v2732, 7
    %v2734 = vsub.s32 2, %v2733
    %v2735 = vrot.slane %v2701, %v2734
    %v2736 = vlaneseq
    %v2737 = vshrl.u32 %v2736, 7
    %v2738 = vsub.s32 3, %v2737
    %v2739 = vrot.slane %v2701, %v2738
    %v2740 = vlaneseq
    %v2741 = vshrl.u32 %v2740, 7
    %v2742 = vsub.s32 4, %v2741
    %v2743 = vrot.slane %v2701, %v2742
    %v2754 = vadd.f32 %v2678, %v2707
    %v2755 = vadd.f32 %v2679, %v2711
    %v2756 = vadd.f32 %v2680, %v2715
    %v2757 = vadd.f32 %v2681, %v2719
    %v2758 = vadd.f32 %v2682, %v2723
    %v2759 = vadd.f32 %v2683, %v2727
    %v2760 = vadd.f32 %v2684, %v2731
    %v2761 = vadd.f32 %v2685, %v2735
    %v2762 = vadd.f32 %v2686, %v2739
    %v2763 = vadd.f32 %v2687, %v2743
    %2774 = vset.pattern.permute.xlu0 0
    %2775 = vperm.xlu0 %2774, %v2754
    %v2776 = vpop.permute.xlu0 %2775
    %2777 = vset.pattern.permute.xlu0 0
    %2778 = vperm.xlu0 %2777, %v2755
    %v2779 = vpop.permute.xlu0 %2778
    %2780 = vset.pattern.permute.xlu0 0
    %2781 = vperm.xlu0 %2780, %v2756
    %v2782 = vpop.permute.xlu0 %2781
    %2783 = vset.pattern.permute.xlu0 0
    %2784 = vperm.xlu0 %2783, %v2757
    %v2785 = vpop.permute.xlu0 %2784
    %2786 = vset.pattern.permute.xlu0 0
    %2787 = vperm.xlu0 %2786, %v2758
    %v2788 = vpop.permute.xlu0 %2787
    %2789 = vset.pattern.permute.xlu0 0
    %2790 = vperm.xlu0 %2789, %v2759
    %v2791 = vpop.permute.xlu0 %2790
    %2792 = vset.pattern.permute.xlu0 0
    %2793 = vperm.xlu0 %2792, %v2760
    %v2794 = vpop.permute.xlu0 %2793
    %2795 = vset.pattern.permute.xlu0 0
    %2796 = vperm.xlu0 %2795, %v2761
    %v2797 = vpop.permute.xlu0 %2796
    %2798 = vset.pattern.permute.xlu0 0
    %2799 = vperm.xlu0 %2798, %v2762
    %v2800 = vpop.permute.xlu0 %2799
    %2801 = vset.pattern.permute.xlu0 0
    %2802 = vperm.xlu0 %2801, %v2763
    %v2803 = vpop.permute.xlu0 %2802
    %v2804 = vlaneseq
    %v2805 = vshrl.u32 %v2804, 7
    %v2806 = vsub.s32 %v47, %v2805
    %v2807 = vrot.slane %v2776, %v2806
    %v2808 = vlaneseq
    %v2809 = vshrl.u32 %v2808, 7
    %v2810 = vsub.s32 %v47, %v2809
    %v2811 = vrot.slane %v2779, %v2810
    %v2812 = vlaneseq
    %v2813 = vshrl.u32 %v2812, 7
    %v2814 = vsub.s32 %v47, %v2813
    %v2815 = vrot.slane %v2782, %v2814
    %v2816 = vlaneseq
    %v2817 = vshrl.u32 %v2816, 7
    %v2818 = vsub.s32 %v47, %v2817
    %v2819 = vrot.slane %v2785, %v2818
    %v2820 = vlaneseq
    %v2821 = vshrl.u32 %v2820, 7
    %v2822 = vsub.s32 %v47, %v2821
    %v2823 = vrot.slane %v2788, %v2822
    %v2824 = vlaneseq
    %v2825 = vshrl.u32 %v2824, 7
    %v2826 = vsub.s32 %v47, %v2825
    %v2827 = vrot.slane %v2791, %v2826
    %v2828 = vlaneseq
    %v2829 = vshrl.u32 %v2828, 7
    %v2830 = vsub.s32 %v47, %v2829
    %v2831 = vrot.slane %v2794, %v2830
    %v2832 = vlaneseq
    %v2833 = vshrl.u32 %v2832, 7
    %v2834 = vsub.s32 %v47, %v2833
    %v2835 = vrot.slane %v2797, %v2834
    %v2836 = vlaneseq
    %v2837 = vshrl.u32 %v2836, 7
    %v2838 = vsub.s32 %v47, %v2837
    %v2839 = vrot.slane %v2800, %v2838
    %v2840 = vlaneseq
    %v2841 = vshrl.u32 %v2840, 7
    %v2842 = vsub.s32 %v47, %v2841
    %v2843 = vrot.slane %v2803, %v2842
    %v2844 = vsel %vm2475, %v2811, %v2807
    %v2845 = vsel %vm2477, %v2815, %v2844
    %v2846 = vsel %vm2479, %v2819, %v2845
    %v2847 = vsel %vm2481, %v2823, %v2846
    %v2848 = vsel %vm2475, %v2831, %v2827
    %v2849 = vsel %vm2477, %v2835, %v2848
    %v2850 = vsel %vm2479, %v2839, %v2849
    %v2851 = vsel %vm2481, %v2843, %v2850
    %v2854 = vsel %vm2227, %v2847, -inf
    %2855 = vmax.xlane.f32.xlu0 %v2854
    %v2856 = vpop.xlane.xlu0 %2855
    %v2857 = vsel %vm2227, %v2851, -inf
    %2858 = vmax.xlane.f32.xlu0 %v2857
    %v2859 = vpop.xlane.xlu0 %2858
    %v2862 = vlaneseq
    %v2863 = vshrl.u32 %v2862, 7
    %v2864 = vsub.s32 0, %v2863
    %v2865 = vrot.slane %v2856, %v2864
    %v2866 = vlaneseq
    %v2867 = vshrl.u32 %v2866, 7
    %v2868 = vsub.s32 1, %v2867
    %v2869 = vrot.slane %v2856, %v2868
    %v2870 = vlaneseq
    %v2871 = vshrl.u32 %v2870, 7
    %v2872 = vsub.s32 2, %v2871
    %v2873 = vrot.slane %v2856, %v2872
    %v2874 = vlaneseq
    %v2875 = vshrl.u32 %v2874, 7
    %v2876 = vsub.s32 3, %v2875
    %v2877 = vrot.slane %v2856, %v2876
    %v2878 = vlaneseq
    %v2879 = vshrl.u32 %v2878, 7
    %v2880 = vsub.s32 4, %v2879
    %v2881 = vrot.slane %v2856, %v2880
    %v2882 = vlaneseq
    %v2883 = vshrl.u32 %v2882, 7
    %v2884 = vsub.s32 0, %v2883
    %v2885 = vrot.slane %v2859, %v2884
    %v2886 = vlaneseq
    %v2887 = vshrl.u32 %v2886, 7
    %v2888 = vsub.s32 1, %v2887
    %v2889 = vrot.slane %v2859, %v2888
    %v2890 = vlaneseq
    %v2891 = vshrl.u32 %v2890, 7
    %v2892 = vsub.s32 2, %v2891
    %v2893 = vrot.slane %v2859, %v2892
    %v2894 = vlaneseq
    %v2895 = vshrl.u32 %v2894, 7
    %v2896 = vsub.s32 3, %v2895
    %v2897 = vrot.slane %v2859, %v2896
    %v2898 = vlaneseq
    %v2899 = vshrl.u32 %v2898, 7
    %v2900 = vsub.s32 4, %v2899
    %v2901 = vrot.slane %v2859, %v2900
    %vm2912 = vcmp.eq.f32.partialorder %v2754, %v2865
    %vm2913 = vcmp.eq.f32.partialorder %v2755, %v2869
    %vm2914 = vcmp.eq.f32.partialorder %v2756, %v2873
    %vm2915 = vcmp.eq.f32.partialorder %v2757, %v2877
    %vm2916 = vcmp.eq.f32.partialorder %v2758, %v2881
    %vm2917 = vcmp.eq.f32.partialorder %v2759, %v2885
    %vm2918 = vcmp.eq.f32.partialorder %v2760, %v2889
    %vm2919 = vcmp.eq.f32.partialorder %v2761, %v2893
    %vm2920 = vcmp.eq.f32.partialorder %v2762, %v2897
    %vm2921 = vcmp.eq.f32.partialorder %v2763, %v2901
    %v2922 = vsel %vm2912, %v2559, 5
    %v2923 = vsel %vm2913, %v2559, 5
    %v2924 = vsel %vm2914, %v2559, 5
    %v2925 = vsel %vm2915, %v2559, 5
    %v2926 = vsel %vm2916, %v2559, 5
    %v2927 = vsel %vm2917, %v2559, 5
    %v2928 = vsel %vm2918, %v2559, 5
    %v2929 = vsel %vm2919, %v2559, 5
    %v2930 = vsel %vm2920, %v2559, 5
    %v2931 = vsel %vm2921, %v2559, 5
    %2932 = vset.pattern.permute.xlu0 0
    %2933 = vperm.xlu0 %2932, %v2922
    %v2934 = vpop.permute.xlu0 %2933
    %2935 = vset.pattern.permute.xlu0 0
    %2936 = vperm.xlu0 %2935, %v2923
    %v2937 = vpop.permute.xlu0 %2936
    %2938 = vset.pattern.permute.xlu0 0
    %2939 = vperm.xlu0 %2938, %v2924
    %v2940 = vpop.permute.xlu0 %2939
    %2941 = vset.pattern.permute.xlu0 0
    %2942 = vperm.xlu0 %2941, %v2925
    %v2943 = vpop.permute.xlu0 %2942
    %2944 = vset.pattern.permute.xlu0 0
    %2945 = vperm.xlu0 %2944, %v2926
    %v2946 = vpop.permute.xlu0 %2945
    %2947 = vset.pattern.permute.xlu0 0
    %2948 = vperm.xlu0 %2947, %v2927
    %v2949 = vpop.permute.xlu0 %2948
    %2950 = vset.pattern.permute.xlu0 0
    %2951 = vperm.xlu0 %2950, %v2928
    %v2952 = vpop.permute.xlu0 %2951
    %2953 = vset.pattern.permute.xlu0 0
    %2954 = vperm.xlu0 %2953, %v2929
    %v2955 = vpop.permute.xlu0 %2954
    %2956 = vset.pattern.permute.xlu0 0
    %2957 = vperm.xlu0 %2956, %v2930
    %v2958 = vpop.permute.xlu0 %2957
    %2959 = vset.pattern.permute.xlu0 0
    %2960 = vperm.xlu0 %2959, %v2931
    %v2961 = vpop.permute.xlu0 %2960
    %v2962 = vlaneseq
    %v2963 = vshrl.u32 %v2962, 7
    %v2964 = vsub.s32 %v47, %v2963
    %v2965 = vrot.slane %v2934, %v2964
    %v2966 = vlaneseq
    %v2967 = vshrl.u32 %v2966, 7
    %v2968 = vsub.s32 %v47, %v2967
    %v2969 = vrot.slane %v2937, %v2968
    %v2970 = vlaneseq
    %v2971 = vshrl.u32 %v2970, 7
    %v2972 = vsub.s32 %v47, %v2971
    %v2973 = vrot.slane %v2940, %v2972
    %v2974 = vlaneseq
    %v2975 = vshrl.u32 %v2974, 7
    %v2976 = vsub.s32 %v47, %v2975
    %v2977 = vrot.slane %v2943, %v2976
    %v2978 = vlaneseq
    %v2979 = vshrl.u32 %v2978, 7
    %v2980 = vsub.s32 %v47, %v2979
    %v2981 = vrot.slane %v2946, %v2980
    %v2982 = vlaneseq
    %v2983 = vshrl.u32 %v2982, 7
    %v2984 = vsub.s32 %v47, %v2983
    %v2985 = vrot.slane %v2949, %v2984
    %v2986 = vlaneseq
    %v2987 = vshrl.u32 %v2986, 7
    %v2988 = vsub.s32 %v47, %v2987
    %v2989 = vrot.slane %v2952, %v2988
    %v2990 = vlaneseq
    %v2991 = vshrl.u32 %v2990, 7
    %v2992 = vsub.s32 %v47, %v2991
    %v2993 = vrot.slane %v2955, %v2992
    %v2994 = vlaneseq
    %v2995 = vshrl.u32 %v2994, 7
    %v2996 = vsub.s32 %v47, %v2995
    %v2997 = vrot.slane %v2958, %v2996
    %v2998 = vlaneseq
    %v2999 = vshrl.u32 %v2998, 7
    %v3000 = vsub.s32 %v47, %v2999
    %v3001 = vrot.slane %v2961, %v3000
    %v3002 = vsel %vm2475, %v2969, %v2965
    %v3003 = vsel %vm2477, %v2973, %v3002
    %v3004 = vsel %vm2479, %v2977, %v3003
    %v3005 = vsel %vm2481, %v2981, %v3004
    %v3006 = vsel %vm2475, %v2989, %v2985
    %v3007 = vsel %vm2477, %v2993, %v3006
    %v3008 = vsel %vm2479, %v2997, %v3007
    %v3009 = vsel %vm2481, %v3001, %v3008
    %v3010 = vsel %vm2227, %v3005, 2147483647
    %v3011 = vand.u32 %v3010, 65535
    %v3012 = vshra.s32 %v3010, 16
    %v3013 = vcvt.s32.f32 %v3011
    %v3014 = vcvt.s32.f32 %v3012
    %3015 = vmin.xlane.f32.xlu0 %v3014
    %v3016 = vpop.xlane.xlu0 %3015
    %vm3017 = vcmp.eq.f32.partialorder %v3014, %v3016
    %v3018 = vsel %vm3017, %v3013, inf
    %3019 = vmin.xlane.f32.xlu0 %v3018
    %v3020 = vpop.xlane.xlu0 %3019
    %v3021 = vcvt.f32.s32 %v3020
    %v3022 = vcvt.f32.s32 %v3016
    %v3023 = vshll.u32 %v3022, 16
    %v3024 = vadd.s32 %v3023, %v3021
    %v3025 = vsel %vm2227, %v3009, 2147483647
    %v3026 = vand.u32 %v3025, 65535
    %v3027 = vshra.s32 %v3025, 16
    %v3028 = vcvt.s32.f32 %v3026
    %v3029 = vcvt.s32.f32 %v3027
    %3030 = vmin.xlane.f32.xlu0 %v3029
    %v3031 = vpop.xlane.xlu0 %3030
    %vm3032 = vcmp.eq.f32.partialorder %v3029, %v3031
    %v3033 = vsel %vm3032, %v3028, inf
    %3034 = vmin.xlane.f32.xlu0 %v3033
    %v3035 = vpop.xlane.xlu0 %3034
    %v3036 = vcvt.f32.s32 %v3035
    %v3037 = vcvt.f32.s32 %v3031
    %v3038 = vshll.u32 %v3037, 16
    %v3039 = vadd.s32 %v3038, %v3036
    %v3040 = vadd.f32 %v2856, %v2275
    %v3041 = vadd.f32 %v2856, %v2282
    %v3042 = vadd.f32 %v2856, %v2289
    %v3043 = vadd.f32 %v2856, %v2296
    %v3044 = vadd.f32 %v2856, %v2303
    %v3045 = vadd.f32 %v2859, %v2275
    %v3046 = vadd.f32 %v2859, %v2282
    %v3047 = vadd.f32 %v2859, %v2289
    %v3048 = vadd.f32 %v2859, %v2296
    %v3049 = vadd.f32 %v2859, %v2303
    %v3050 = vlaneseq
    %v3051 = vshrl.u32 %v3050, 7
    %v3052 = vsub.s32 0, %v3051
    %v3053 = vrot.slane %v2163, %v3052
    %3055 = vbcast.lane.b32.xlu0 %v3053, 256
    %v3056 = vpop.permute.xlu0 %3055
    %v3057 = vlaneseq
    %v3058 = vshrl.u32 %v3057, 7
    %v3059 = vsub.s32 1, %v3058
    %v3060 = vrot.slane %v2163, %v3059
    %3062 = vbcast.lane.b32.xlu0 %v3060, 256
    %v3063 = vpop.permute.xlu0 %3062
    %v3066 = vlaneseq
    %v3067 = vshrl.u32 %v3066, 7
    %v3068 = vsub.s32 0, %v3067
    %v3069 = vrot.slane %v3056, %v3068
    %v3070 = vlaneseq
    %v3071 = vshrl.u32 %v3070, 7
    %v3072 = vsub.s32 1, %v3071
    %v3073 = vrot.slane %v3056, %v3072
    %v3074 = vlaneseq
    %v3075 = vshrl.u32 %v3074, 7
    %v3076 = vsub.s32 2, %v3075
    %v3077 = vrot.slane %v3056, %v3076
    %v3078 = vlaneseq
    %v3079 = vshrl.u32 %v3078, 7
    %v3080 = vsub.s32 3, %v3079
    %v3081 = vrot.slane %v3056, %v3080
    %v3082 = vlaneseq
    %v3083 = vshrl.u32 %v3082, 7
    %v3084 = vsub.s32 4, %v3083
    %v3085 = vrot.slane %v3056, %v3084
    %v3086 = vlaneseq
    %v3087 = vshrl.u32 %v3086, 7
    %v3088 = vsub.s32 0, %v3087
    %v3089 = vrot.slane %v3063, %v3088
    %v3090 = vlaneseq
    %v3091 = vshrl.u32 %v3090, 7
    %v3092 = vsub.s32 1, %v3091
    %v3093 = vrot.slane %v3063, %v3092
    %v3094 = vlaneseq
    %v3095 = vshrl.u32 %v3094, 7
    %v3096 = vsub.s32 2, %v3095
    %v3097 = vrot.slane %v3063, %v3096
    %v3098 = vlaneseq
    %v3099 = vshrl.u32 %v3098, 7
    %v3100 = vsub.s32 3, %v3099
    %v3101 = vrot.slane %v3063, %v3100
    %v3102 = vlaneseq
    %v3103 = vshrl.u32 %v3102, 7
    %v3104 = vsub.s32 4, %v3103
    %v3105 = vrot.slane %v3063, %v3104
    %v3116 = vadd.f32 %v3040, %v3069
    %v3117 = vadd.f32 %v3041, %v3073
    %v3118 = vadd.f32 %v3042, %v3077
    %v3119 = vadd.f32 %v3043, %v3081
    %v3120 = vadd.f32 %v3044, %v3085
    %v3121 = vadd.f32 %v3045, %v3089
    %v3122 = vadd.f32 %v3046, %v3093
    %v3123 = vadd.f32 %v3047, %v3097
    %v3124 = vadd.f32 %v3048, %v3101
    %v3125 = vadd.f32 %v3049, %v3105
    %3136 = vset.pattern.permute.xlu0 0
    %3137 = vperm.xlu0 %3136, %v3116
    %v3138 = vpop.permute.xlu0 %3137
    %3139 = vset.pattern.permute.xlu0 0
    %3140 = vperm.xlu0 %3139, %v3117
    %v3141 = vpop.permute.xlu0 %3140
    %3142 = vset.pattern.permute.xlu0 0
    %3143 = vperm.xlu0 %3142, %v3118
    %v3144 = vpop.permute.xlu0 %3143
    %3145 = vset.pattern.permute.xlu0 0
    %3146 = vperm.xlu0 %3145, %v3119
    %v3147 = vpop.permute.xlu0 %3146
    %3148 = vset.pattern.permute.xlu0 0
    %3149 = vperm.xlu0 %3148, %v3120
    %v3150 = vpop.permute.xlu0 %3149
    %3151 = vset.pattern.permute.xlu0 0
    %3152 = vperm.xlu0 %3151, %v3121
    %v3153 = vpop.permute.xlu0 %3152
    %3154 = vset.pattern.permute.xlu0 0
    %3155 = vperm.xlu0 %3154, %v3122
    %v3156 = vpop.permute.xlu0 %3155
    %3157 = vset.pattern.permute.xlu0 0
    %3158 = vperm.xlu0 %3157, %v3123
    %v3159 = vpop.permute.xlu0 %3158
    %3160 = vset.pattern.permute.xlu0 0
    %3161 = vperm.xlu0 %3160, %v3124
    %v3162 = vpop.permute.xlu0 %3161
    %3163 = vset.pattern.permute.xlu0 0
    %3164 = vperm.xlu0 %3163, %v3125
    %v3165 = vpop.permute.xlu0 %3164
    %v3166 = vlaneseq
    %v3167 = vshrl.u32 %v3166, 7
    %v3168 = vsub.s32 %v47, %v3167
    %v3169 = vrot.slane %v3138, %v3168
    %v3170 = vlaneseq
    %v3171 = vshrl.u32 %v3170, 7
    %v3172 = vsub.s32 %v47, %v3171
    %v3173 = vrot.slane %v3141, %v3172
    %v3174 = vlaneseq
    %v3175 = vshrl.u32 %v3174, 7
    %v3176 = vsub.s32 %v47, %v3175
    %v3177 = vrot.slane %v3144, %v3176
    %v3178 = vlaneseq
    %v3179 = vshrl.u32 %v3178, 7
    %v3180 = vsub.s32 %v47, %v3179
    %v3181 = vrot.slane %v3147, %v3180
    %v3182 = vlaneseq
    %v3183 = vshrl.u32 %v3182, 7
    %v3184 = vsub.s32 %v47, %v3183
    %v3185 = vrot.slane %v3150, %v3184
    %v3186 = vlaneseq
    %v3187 = vshrl.u32 %v3186, 7
    %v3188 = vsub.s32 %v47, %v3187
    %v3189 = vrot.slane %v3153, %v3188
    %v3190 = vlaneseq
    %v3191 = vshrl.u32 %v3190, 7
    %v3192 = vsub.s32 %v47, %v3191
    %v3193 = vrot.slane %v3156, %v3192
    %v3194 = vlaneseq
    %v3195 = vshrl.u32 %v3194, 7
    %v3196 = vsub.s32 %v47, %v3195
    %v3197 = vrot.slane %v3159, %v3196
    %v3198 = vlaneseq
    %v3199 = vshrl.u32 %v3198, 7
    %v3200 = vsub.s32 %v47, %v3199
    %v3201 = vrot.slane %v3162, %v3200
    %v3202 = vlaneseq
    %v3203 = vshrl.u32 %v3202, 7
    %v3204 = vsub.s32 %v47, %v3203
    %v3205 = vrot.slane %v3165, %v3204
    %v3206 = vsel %vm2475, %v3173, %v3169
    %v3207 = vsel %vm2477, %v3177, %v3206
    %v3208 = vsel %vm2479, %v3181, %v3207
    %v3209 = vsel %vm2481, %v3185, %v3208
    %v3210 = vsel %vm2475, %v3193, %v3189
    %v3211 = vsel %vm2477, %v3197, %v3210
    %v3212 = vsel %vm2479, %v3201, %v3211
    %v3213 = vsel %vm2481, %v3205, %v3212
    %v3216 = vsel %vm2227, %v3209, -inf
    %3217 = vmax.xlane.f32.xlu0 %v3216
    %v3218 = vpop.xlane.xlu0 %3217
    %v3219 = vsel %vm2227, %v3213, -inf
    %3220 = vmax.xlane.f32.xlu0 %v3219
    %v3221 = vpop.xlane.xlu0 %3220
    %v3224 = vlaneseq
    %v3225 = vshrl.u32 %v3224, 7
    %v3226 = vsub.s32 0, %v3225
    %v3227 = vrot.slane %v3218, %v3226
    %v3228 = vlaneseq
    %v3229 = vshrl.u32 %v3228, 7
    %v3230 = vsub.s32 1, %v3229
    %v3231 = vrot.slane %v3218, %v3230
    %v3232 = vlaneseq
    %v3233 = vshrl.u32 %v3232, 7
    %v3234 = vsub.s32 2, %v3233
    %v3235 = vrot.slane %v3218, %v3234
    %v3236 = vlaneseq
    %v3237 = vshrl.u32 %v3236, 7
    %v3238 = vsub.s32 3, %v3237
    %v3239 = vrot.slane %v3218, %v3238
    %v3240 = vlaneseq
    %v3241 = vshrl.u32 %v3240, 7
    %v3242 = vsub.s32 4, %v3241
    %v3243 = vrot.slane %v3218, %v3242
    %v3244 = vlaneseq
    %v3245 = vshrl.u32 %v3244, 7
    %v3246 = vsub.s32 0, %v3245
    %v3247 = vrot.slane %v3221, %v3246
    %v3248 = vlaneseq
    %v3249 = vshrl.u32 %v3248, 7
    %v3250 = vsub.s32 1, %v3249
    %v3251 = vrot.slane %v3221, %v3250
    %v3252 = vlaneseq
    %v3253 = vshrl.u32 %v3252, 7
    %v3254 = vsub.s32 2, %v3253
    %v3255 = vrot.slane %v3221, %v3254
    %v3256 = vlaneseq
    %v3257 = vshrl.u32 %v3256, 7
    %v3258 = vsub.s32 3, %v3257
    %v3259 = vrot.slane %v3221, %v3258
    %v3260 = vlaneseq
    %v3261 = vshrl.u32 %v3260, 7
    %v3262 = vsub.s32 4, %v3261
    %v3263 = vrot.slane %v3221, %v3262
    %vm3274 = vcmp.eq.f32.partialorder %v3116, %v3227
    %vm3275 = vcmp.eq.f32.partialorder %v3117, %v3231
    %vm3276 = vcmp.eq.f32.partialorder %v3118, %v3235
    %vm3277 = vcmp.eq.f32.partialorder %v3119, %v3239
    %vm3278 = vcmp.eq.f32.partialorder %v3120, %v3243
    %vm3279 = vcmp.eq.f32.partialorder %v3121, %v3247
    %vm3280 = vcmp.eq.f32.partialorder %v3122, %v3251
    %vm3281 = vcmp.eq.f32.partialorder %v3123, %v3255
    %vm3282 = vcmp.eq.f32.partialorder %v3124, %v3259
    %vm3283 = vcmp.eq.f32.partialorder %v3125, %v3263
    %v3284 = vsel %vm3274, %v2559, 5
    %v3285 = vsel %vm3275, %v2559, 5
    %v3286 = vsel %vm3276, %v2559, 5
    %v3287 = vsel %vm3277, %v2559, 5
    %v3288 = vsel %vm3278, %v2559, 5
    %v3289 = vsel %vm3279, %v2559, 5
    %v3290 = vsel %vm3280, %v2559, 5
    %v3291 = vsel %vm3281, %v2559, 5
    %v3292 = vsel %vm3282, %v2559, 5
    %v3293 = vsel %vm3283, %v2559, 5
    %3294 = vset.pattern.permute.xlu0 0
    %3295 = vperm.xlu0 %3294, %v3284
    %v3296 = vpop.permute.xlu0 %3295
    %3297 = vset.pattern.permute.xlu0 0
    %3298 = vperm.xlu0 %3297, %v3285
    %v3299 = vpop.permute.xlu0 %3298
    %3300 = vset.pattern.permute.xlu0 0
    %3301 = vperm.xlu0 %3300, %v3286
    %v3302 = vpop.permute.xlu0 %3301
    %3303 = vset.pattern.permute.xlu0 0
    %3304 = vperm.xlu0 %3303, %v3287
    %v3305 = vpop.permute.xlu0 %3304
    %3306 = vset.pattern.permute.xlu0 0
    %3307 = vperm.xlu0 %3306, %v3288
    %v3308 = vpop.permute.xlu0 %3307
    %3309 = vset.pattern.permute.xlu0 0
    %3310 = vperm.xlu0 %3309, %v3289
    %v3311 = vpop.permute.xlu0 %3310
    %3312 = vset.pattern.permute.xlu0 0
    %3313 = vperm.xlu0 %3312, %v3290
    %v3314 = vpop.permute.xlu0 %3313
    %3315 = vset.pattern.permute.xlu0 0
    %3316 = vperm.xlu0 %3315, %v3291
    %v3317 = vpop.permute.xlu0 %3316
    %3318 = vset.pattern.permute.xlu0 0
    %3319 = vperm.xlu0 %3318, %v3292
    %v3320 = vpop.permute.xlu0 %3319
    %3321 = vset.pattern.permute.xlu0 0
    %3322 = vperm.xlu0 %3321, %v3293
    %v3323 = vpop.permute.xlu0 %3322
    %v3324 = vlaneseq
    %v3325 = vshrl.u32 %v3324, 7
    %v3326 = vsub.s32 %v47, %v3325
    %v3327 = vrot.slane %v3296, %v3326
    %v3328 = vlaneseq
    %v3329 = vshrl.u32 %v3328, 7
    %v3330 = vsub.s32 %v47, %v3329
    %v3331 = vrot.slane %v3299, %v3330
    %v3332 = vlaneseq
    %v3333 = vshrl.u32 %v3332, 7
    %v3334 = vsub.s32 %v47, %v3333
    %v3335 = vrot.slane %v3302, %v3334
    %v3336 = vlaneseq
    %v3337 = vshrl.u32 %v3336, 7
    %v3338 = vsub.s32 %v47, %v3337
    %v3339 = vrot.slane %v3305, %v3338
    %v3340 = vlaneseq
    %v3341 = vshrl.u32 %v3340, 7
    %v3342 = vsub.s32 %v47, %v3341
    %v3343 = vrot.slane %v3308, %v3342
    %v3344 = vlaneseq
    %v3345 = vshrl.u32 %v3344, 7
    %v3346 = vsub.s32 %v47, %v3345
    %v3347 = vrot.slane %v3311, %v3346
    %v3348 = vlaneseq
    %v3349 = vshrl.u32 %v3348, 7
    %v3350 = vsub.s32 %v47, %v3349
    %v3351 = vrot.slane %v3314, %v3350
    %v3352 = vlaneseq
    %v3353 = vshrl.u32 %v3352, 7
    %v3354 = vsub.s32 %v47, %v3353
    %v3355 = vrot.slane %v3317, %v3354
    %v3356 = vlaneseq
    %v3357 = vshrl.u32 %v3356, 7
    %v3358 = vsub.s32 %v47, %v3357
    %v3359 = vrot.slane %v3320, %v3358
    %v3360 = vlaneseq
    %v3361 = vshrl.u32 %v3360, 7
    %v3362 = vsub.s32 %v47, %v3361
    %v3363 = vrot.slane %v3323, %v3362
    %v3364 = vsel %vm2475, %v3331, %v3327
    %v3365 = vsel %vm2477, %v3335, %v3364
    %v3366 = vsel %vm2479, %v3339, %v3365
    %v3367 = vsel %vm2481, %v3343, %v3366
    %v3368 = vsel %vm2475, %v3351, %v3347
    %v3369 = vsel %vm2477, %v3355, %v3368
    %v3370 = vsel %vm2479, %v3359, %v3369
    %v3371 = vsel %vm2481, %v3363, %v3370
    %v3372 = vsel %vm2227, %v3367, 2147483647
    %v3373 = vand.u32 %v3372, 65535
    %v3374 = vshra.s32 %v3372, 16
    %v3375 = vcvt.s32.f32 %v3373
    %v3376 = vcvt.s32.f32 %v3374
    %3377 = vmin.xlane.f32.xlu0 %v3376
    %v3378 = vpop.xlane.xlu0 %3377
    %vm3379 = vcmp.eq.f32.partialorder %v3376, %v3378
    %v3380 = vsel %vm3379, %v3375, inf
    %3381 = vmin.xlane.f32.xlu0 %v3380
    %v3382 = vpop.xlane.xlu0 %3381
    %v3383 = vcvt.f32.s32 %v3382
    %v3384 = vcvt.f32.s32 %v3378
    %v3385 = vshll.u32 %v3384, 16
    %v3386 = vadd.s32 %v3385, %v3383
    %v3387 = vsel %vm2227, %v3371, 2147483647
    %v3388 = vand.u32 %v3387, 65535
    %v3389 = vshra.s32 %v3387, 16
    %v3390 = vcvt.s32.f32 %v3388
    %v3391 = vcvt.s32.f32 %v3389
    %3392 = vmin.xlane.f32.xlu0 %v3391
    %v3393 = vpop.xlane.xlu0 %3392
    %vm3394 = vcmp.eq.f32.partialorder %v3391, %v3393
    %v3395 = vsel %vm3394, %v3390, inf
    %3396 = vmin.xlane.f32.xlu0 %v3395
    %v3397 = vpop.xlane.xlu0 %3396
    %v3398 = vcvt.f32.s32 %v3397
    %v3399 = vcvt.f32.s32 %v3393
    %v3400 = vshll.u32 %v3399, 16
    %v3401 = vadd.s32 %v3400, %v3398
    %v3402 = vadd.f32 %v3218, %v2275
    %v3403 = vadd.f32 %v3218, %v2282
    %v3404 = vadd.f32 %v3218, %v2289
    %v3405 = vadd.f32 %v3218, %v2296
    %v3406 = vadd.f32 %v3218, %v2303
    %v3407 = vadd.f32 %v3221, %v2275
    %v3408 = vadd.f32 %v3221, %v2282
    %v3409 = vadd.f32 %v3221, %v2289
    %v3410 = vadd.f32 %v3221, %v2296
    %v3411 = vadd.f32 %v3221, %v2303
    %v3412 = vlaneseq
    %v3413 = vshrl.u32 %v3412, 7
    %v3414 = vsub.s32 2, %v3413
    %v3415 = vrot.slane %v2163, %v3414
    %3417 = vbcast.lane.b32.xlu0 %v3415, 256
    %v3418 = vpop.permute.xlu0 %3417
    %v3419 = vlaneseq
    %v3420 = vshrl.u32 %v3419, 7
    %v3421 = vsub.s32 3, %v3420
    %v3422 = vrot.slane %v2163, %v3421
    %3424 = vbcast.lane.b32.xlu0 %v3422, 256
    %v3425 = vpop.permute.xlu0 %3424
    %v3428 = vlaneseq
    %v3429 = vshrl.u32 %v3428, 7
    %v3430 = vsub.s32 0, %v3429
    %v3431 = vrot.slane %v3418, %v3430
    %v3432 = vlaneseq
    %v3433 = vshrl.u32 %v3432, 7
    %v3434 = vsub.s32 1, %v3433
    %v3435 = vrot.slane %v3418, %v3434
    %v3436 = vlaneseq
    %v3437 = vshrl.u32 %v3436, 7
    %v3438 = vsub.s32 2, %v3437
    %v3439 = vrot.slane %v3418, %v3438
    %v3440 = vlaneseq
    %v3441 = vshrl.u32 %v3440, 7
    %v3442 = vsub.s32 3, %v3441
    %v3443 = vrot.slane %v3418, %v3442
    %v3444 = vlaneseq
    %v3445 = vshrl.u32 %v3444, 7
    %v3446 = vsub.s32 4, %v3445
    %v3447 = vrot.slane %v3418, %v3446
    %v3448 = vlaneseq
    %v3449 = vshrl.u32 %v3448, 7
    %v3450 = vsub.s32 0, %v3449
    %v3451 = vrot.slane %v3425, %v3450
    %v3452 = vlaneseq
    %v3453 = vshrl.u32 %v3452, 7
    %v3454 = vsub.s32 1, %v3453
    %v3455 = vrot.slane %v3425, %v3454
    %v3456 = vlaneseq
    %v3457 = vshrl.u32 %v3456, 7
    %v3458 = vsub.s32 2, %v3457
    %v3459 = vrot.slane %v3425, %v3458
    %v3460 = vlaneseq
    %v3461 = vshrl.u32 %v3460, 7
    %v3462 = vsub.s32 3, %v3461
    %v3463 = vrot.slane %v3425, %v3462
    %v3464 = vlaneseq
    %v3465 = vshrl.u32 %v3464, 7
    %v3466 = vsub.s32 4, %v3465
    %v3467 = vrot.slane %v3425, %v3466
    %v3478 = vadd.f32 %v3402, %v3431
    %v3479 = vadd.f32 %v3403, %v3435
    %v3480 = vadd.f32 %v3404, %v3439
    %v3481 = vadd.f32 %v3405, %v3443
    %v3482 = vadd.f32 %v3406, %v3447
    %v3483 = vadd.f32 %v3407, %v3451
    %v3484 = vadd.f32 %v3408, %v3455
    %v3485 = vadd.f32 %v3409, %v3459
    %v3486 = vadd.f32 %v3410, %v3463
    %v3487 = vadd.f32 %v3411, %v3467
    %3498 = vset.pattern.permute.xlu0 0
    %3499 = vperm.xlu0 %3498, %v3478
    %v3500 = vpop.permute.xlu0 %3499
    %3501 = vset.pattern.permute.xlu0 0
    %3502 = vperm.xlu0 %3501, %v3479
    %v3503 = vpop.permute.xlu0 %3502
    %3504 = vset.pattern.permute.xlu0 0
    %3505 = vperm.xlu0 %3504, %v3480
    %v3506 = vpop.permute.xlu0 %3505
    %3507 = vset.pattern.permute.xlu0 0
    %3508 = vperm.xlu0 %3507, %v3481
    %v3509 = vpop.permute.xlu0 %3508
    %3510 = vset.pattern.permute.xlu0 0
    %3511 = vperm.xlu0 %3510, %v3482
    %v3512 = vpop.permute.xlu0 %3511
    %3513 = vset.pattern.permute.xlu0 0
    %3514 = vperm.xlu0 %3513, %v3483
    %v3515 = vpop.permute.xlu0 %3514
    %3516 = vset.pattern.permute.xlu0 0
    %3517 = vperm.xlu0 %3516, %v3484
    %v3518 = vpop.permute.xlu0 %3517
    %3519 = vset.pattern.permute.xlu0 0
    %3520 = vperm.xlu0 %3519, %v3485
    %v3521 = vpop.permute.xlu0 %3520
    %3522 = vset.pattern.permute.xlu0 0
    %3523 = vperm.xlu0 %3522, %v3486
    %v3524 = vpop.permute.xlu0 %3523
    %3525 = vset.pattern.permute.xlu0 0
    %3526 = vperm.xlu0 %3525, %v3487
    %v3527 = vpop.permute.xlu0 %3526
    %v3528 = vlaneseq
    %v3529 = vshrl.u32 %v3528, 7
    %v3530 = vsub.s32 %v47, %v3529
    %v3531 = vrot.slane %v3500, %v3530
    %v3532 = vlaneseq
    %v3533 = vshrl.u32 %v3532, 7
    %v3534 = vsub.s32 %v47, %v3533
    %v3535 = vrot.slane %v3503, %v3534
    %v3536 = vlaneseq
    %v3537 = vshrl.u32 %v3536, 7
    %v3538 = vsub.s32 %v47, %v3537
    %v3539 = vrot.slane %v3506, %v3538
    %v3540 = vlaneseq
    %v3541 = vshrl.u32 %v3540, 7
    %v3542 = vsub.s32 %v47, %v3541
    %v3543 = vrot.slane %v3509, %v3542
    %v3544 = vlaneseq
    %v3545 = vshrl.u32 %v3544, 7
    %v3546 = vsub.s32 %v47, %v3545
    %v3547 = vrot.slane %v3512, %v3546
    %v3548 = vlaneseq
    %v3549 = vshrl.u32 %v3548, 7
    %v3550 = vsub.s32 %v47, %v3549
    %v3551 = vrot.slane %v3515, %v3550
    %v3552 = vlaneseq
    %v3553 = vshrl.u32 %v3552, 7
    %v3554 = vsub.s32 %v47, %v3553
    %v3555 = vrot.slane %v3518, %v3554
    %v3556 = vlaneseq
    %v3557 = vshrl.u32 %v3556, 7
    %v3558 = vsub.s32 %v47, %v3557
    %v3559 = vrot.slane %v3521, %v3558
    %v3560 = vlaneseq
    %v3561 = vshrl.u32 %v3560, 7
    %v3562 = vsub.s32 %v47, %v3561
    %v3563 = vrot.slane %v3524, %v3562
    %v3564 = vlaneseq
    %v3565 = vshrl.u32 %v3564, 7
    %v3566 = vsub.s32 %v47, %v3565
    %v3567 = vrot.slane %v3527, %v3566
    %v3568 = vsel %vm2475, %v3535, %v3531
    %v3569 = vsel %vm2477, %v3539, %v3568
    %v3570 = vsel %vm2479, %v3543, %v3569
    %v3571 = vsel %vm2481, %v3547, %v3570
    %v3572 = vsel %vm2475, %v3555, %v3551
    %v3573 = vsel %vm2477, %v3559, %v3572
    %v3574 = vsel %vm2479, %v3563, %v3573
    %v3575 = vsel %vm2481, %v3567, %v3574
    %v3578 = vsel %vm2227, %v3571, -inf
    %3579 = vmax.xlane.f32.xlu0 %v3578
    %v3580 = vpop.xlane.xlu0 %3579
    %v3581 = vsel %vm2227, %v3575, -inf
    %3582 = vmax.xlane.f32.xlu0 %v3581
    %v3583 = vpop.xlane.xlu0 %3582
    %v3586 = vlaneseq
    %v3587 = vshrl.u32 %v3586, 7
    %v3588 = vsub.s32 0, %v3587
    %v3589 = vrot.slane %v3580, %v3588
    %v3590 = vlaneseq
    %v3591 = vshrl.u32 %v3590, 7
    %v3592 = vsub.s32 1, %v3591
    %v3593 = vrot.slane %v3580, %v3592
    %v3594 = vlaneseq
    %v3595 = vshrl.u32 %v3594, 7
    %v3596 = vsub.s32 2, %v3595
    %v3597 = vrot.slane %v3580, %v3596
    %v3598 = vlaneseq
    %v3599 = vshrl.u32 %v3598, 7
    %v3600 = vsub.s32 3, %v3599
    %v3601 = vrot.slane %v3580, %v3600
    %v3602 = vlaneseq
    %v3603 = vshrl.u32 %v3602, 7
    %v3604 = vsub.s32 4, %v3603
    %v3605 = vrot.slane %v3580, %v3604
    %v3606 = vlaneseq
    %v3607 = vshrl.u32 %v3606, 7
    %v3608 = vsub.s32 0, %v3607
    %v3609 = vrot.slane %v3583, %v3608
    %v3610 = vlaneseq
    %v3611 = vshrl.u32 %v3610, 7
    %v3612 = vsub.s32 1, %v3611
    %v3613 = vrot.slane %v3583, %v3612
    %v3614 = vlaneseq
    %v3615 = vshrl.u32 %v3614, 7
    %v3616 = vsub.s32 2, %v3615
    %v3617 = vrot.slane %v3583, %v3616
    %v3618 = vlaneseq
    %v3619 = vshrl.u32 %v3618, 7
    %v3620 = vsub.s32 3, %v3619
    %v3621 = vrot.slane %v3583, %v3620
    %v3622 = vlaneseq
    %v3623 = vshrl.u32 %v3622, 7
    %v3624 = vsub.s32 4, %v3623
    %v3625 = vrot.slane %v3583, %v3624
    %vm3636 = vcmp.eq.f32.partialorder %v3478, %v3589
    %vm3637 = vcmp.eq.f32.partialorder %v3479, %v3593
    %vm3638 = vcmp.eq.f32.partialorder %v3480, %v3597
    %vm3639 = vcmp.eq.f32.partialorder %v3481, %v3601
    %vm3640 = vcmp.eq.f32.partialorder %v3482, %v3605
    %vm3641 = vcmp.eq.f32.partialorder %v3483, %v3609
    %vm3642 = vcmp.eq.f32.partialorder %v3484, %v3613
    %vm3643 = vcmp.eq.f32.partialorder %v3485, %v3617
    %vm3644 = vcmp.eq.f32.partialorder %v3486, %v3621
    %vm3645 = vcmp.eq.f32.partialorder %v3487, %v3625
    %v3646 = vsel %vm3636, %v2559, 5
    %v3647 = vsel %vm3637, %v2559, 5
    %v3648 = vsel %vm3638, %v2559, 5
    %v3649 = vsel %vm3639, %v2559, 5
    %v3650 = vsel %vm3640, %v2559, 5
    %v3651 = vsel %vm3641, %v2559, 5
    %v3652 = vsel %vm3642, %v2559, 5
    %v3653 = vsel %vm3643, %v2559, 5
    %v3654 = vsel %vm3644, %v2559, 5
    %v3655 = vsel %vm3645, %v2559, 5
    %3656 = vset.pattern.permute.xlu0 0
    %3657 = vperm.xlu0 %3656, %v3646
    %v3658 = vpop.permute.xlu0 %3657
    %3659 = vset.pattern.permute.xlu0 0
    %3660 = vperm.xlu0 %3659, %v3647
    %v3661 = vpop.permute.xlu0 %3660
    %3662 = vset.pattern.permute.xlu0 0
    %3663 = vperm.xlu0 %3662, %v3648
    %v3664 = vpop.permute.xlu0 %3663
    %3665 = vset.pattern.permute.xlu0 0
    %3666 = vperm.xlu0 %3665, %v3649
    %v3667 = vpop.permute.xlu0 %3666
    %3668 = vset.pattern.permute.xlu0 0
    %3669 = vperm.xlu0 %3668, %v3650
    %v3670 = vpop.permute.xlu0 %3669
    %3671 = vset.pattern.permute.xlu0 0
    %3672 = vperm.xlu0 %3671, %v3651
    %v3673 = vpop.permute.xlu0 %3672
    %3674 = vset.pattern.permute.xlu0 0
    %3675 = vperm.xlu0 %3674, %v3652
    %v3676 = vpop.permute.xlu0 %3675
    %3677 = vset.pattern.permute.xlu0 0
    %3678 = vperm.xlu0 %3677, %v3653
    %v3679 = vpop.permute.xlu0 %3678
    %3680 = vset.pattern.permute.xlu0 0
    %3681 = vperm.xlu0 %3680, %v3654
    %v3682 = vpop.permute.xlu0 %3681
    %3683 = vset.pattern.permute.xlu0 0
    %3684 = vperm.xlu0 %3683, %v3655
    %v3685 = vpop.permute.xlu0 %3684
    %v3686 = vlaneseq
    %v3687 = vshrl.u32 %v3686, 7
    %v3688 = vsub.s32 %v47, %v3687
    %v3689 = vrot.slane %v3658, %v3688
    %v3690 = vlaneseq
    %v3691 = vshrl.u32 %v3690, 7
    %v3692 = vsub.s32 %v47, %v3691
    %v3693 = vrot.slane %v3661, %v3692
    %v3694 = vlaneseq
    %v3695 = vshrl.u32 %v3694, 7
    %v3696 = vsub.s32 %v47, %v3695
    %v3697 = vrot.slane %v3664, %v3696
    %v3698 = vlaneseq
    %v3699 = vshrl.u32 %v3698, 7
    %v3700 = vsub.s32 %v47, %v3699
    %v3701 = vrot.slane %v3667, %v3700
    %v3702 = vlaneseq
    %v3703 = vshrl.u32 %v3702, 7
    %v3704 = vsub.s32 %v47, %v3703
    %v3705 = vrot.slane %v3670, %v3704
    %v3706 = vlaneseq
    %v3707 = vshrl.u32 %v3706, 7
    %v3708 = vsub.s32 %v47, %v3707
    %v3709 = vrot.slane %v3673, %v3708
    %v3710 = vlaneseq
    %v3711 = vshrl.u32 %v3710, 7
    %v3712 = vsub.s32 %v47, %v3711
    %v3713 = vrot.slane %v3676, %v3712
    %v3714 = vlaneseq
    %v3715 = vshrl.u32 %v3714, 7
    %v3716 = vsub.s32 %v47, %v3715
    %v3717 = vrot.slane %v3679, %v3716
    %v3718 = vlaneseq
    %v3719 = vshrl.u32 %v3718, 7
    %v3720 = vsub.s32 %v47, %v3719
    %v3721 = vrot.slane %v3682, %v3720
    %v3722 = vlaneseq
    %v3723 = vshrl.u32 %v3722, 7
    %v3724 = vsub.s32 %v47, %v3723
    %v3725 = vrot.slane %v3685, %v3724
    %v3726 = vsel %vm2475, %v3693, %v3689
    %v3727 = vsel %vm2477, %v3697, %v3726
    %v3728 = vsel %vm2479, %v3701, %v3727
    %v3729 = vsel %vm2481, %v3705, %v3728
    %v3730 = vsel %vm2475, %v3713, %v3709
    %v3731 = vsel %vm2477, %v3717, %v3730
    %v3732 = vsel %vm2479, %v3721, %v3731
    %v3733 = vsel %vm2481, %v3725, %v3732
    %v3734 = vsel %vm2227, %v3729, 2147483647
    %v3735 = vand.u32 %v3734, 65535
    %v3736 = vshra.s32 %v3734, 16
    %v3737 = vcvt.s32.f32 %v3735
    %v3738 = vcvt.s32.f32 %v3736
    %3739 = vmin.xlane.f32.xlu0 %v3738
    %v3740 = vpop.xlane.xlu0 %3739
    %vm3741 = vcmp.eq.f32.partialorder %v3738, %v3740
    %v3742 = vsel %vm3741, %v3737, inf
    %3743 = vmin.xlane.f32.xlu0 %v3742
    %v3744 = vpop.xlane.xlu0 %3743
    %v3745 = vcvt.f32.s32 %v3744
    %v3746 = vcvt.f32.s32 %v3740
    %v3747 = vshll.u32 %v3746, 16
    %v3748 = vadd.s32 %v3747, %v3745
    %v3749 = vsel %vm2227, %v3733, 2147483647
    %v3750 = vand.u32 %v3749, 65535
    %v3751 = vshra.s32 %v3749, 16
    %v3752 = vcvt.s32.f32 %v3750
    %v3753 = vcvt.s32.f32 %v3751
    %3754 = vmin.xlane.f32.xlu0 %v3753
    %v3755 = vpop.xlane.xlu0 %3754
    %vm3756 = vcmp.eq.f32.partialorder %v3753, %v3755
    %v3757 = vsel %vm3756, %v3752, inf
    %3758 = vmin.xlane.f32.xlu0 %v3757
    %v3759 = vpop.xlane.xlu0 %3758
    %v3760 = vcvt.f32.s32 %v3759
    %v3761 = vcvt.f32.s32 %v3755
    %v3762 = vshll.u32 %v3761, 16
    %v3763 = vadd.s32 %v3762, %v3760
    %v3764 = vadd.f32 %v3580, %v2275
    %v3765 = vadd.f32 %v3580, %v2282
    %v3766 = vadd.f32 %v3580, %v2289
    %v3767 = vadd.f32 %v3580, %v2296
    %v3768 = vadd.f32 %v3580, %v2303
    %v3769 = vadd.f32 %v3583, %v2275
    %v3770 = vadd.f32 %v3583, %v2282
    %v3771 = vadd.f32 %v3583, %v2289
    %v3772 = vadd.f32 %v3583, %v2296
    %v3773 = vadd.f32 %v3583, %v2303
    %v3774 = vlaneseq
    %v3775 = vshrl.u32 %v3774, 7
    %v3776 = vsub.s32 4, %v3775
    %v3777 = vrot.slane %v2163, %v3776
    %3779 = vbcast.lane.b32.xlu0 %v3777, 256
    %v3780 = vpop.permute.xlu0 %3779
    %v3781 = vlaneseq
    %v3782 = vshrl.u32 %v3781, 7
    %v3783 = vsub.s32 5, %v3782
    %v3784 = vrot.slane %v2163, %v3783
    %3786 = vbcast.lane.b32.xlu0 %v3784, 256
    %v3787 = vpop.permute.xlu0 %3786
    %v3790 = vlaneseq
    %v3791 = vshrl.u32 %v3790, 7
    %v3792 = vsub.s32 0, %v3791
    %v3793 = vrot.slane %v3780, %v3792
    %v3794 = vlaneseq
    %v3795 = vshrl.u32 %v3794, 7
    %v3796 = vsub.s32 1, %v3795
    %v3797 = vrot.slane %v3780, %v3796
    %v3798 = vlaneseq
    %v3799 = vshrl.u32 %v3798, 7
    %v3800 = vsub.s32 2, %v3799
    %v3801 = vrot.slane %v3780, %v3800
    %v3802 = vlaneseq
    %v3803 = vshrl.u32 %v3802, 7
    %v3804 = vsub.s32 3, %v3803
    %v3805 = vrot.slane %v3780, %v3804
    %v3806 = vlaneseq
    %v3807 = vshrl.u32 %v3806, 7
    %v3808 = vsub.s32 4, %v3807
    %v3809 = vrot.slane %v3780, %v3808
    %v3810 = vlaneseq
    %v3811 = vshrl.u32 %v3810, 7
    %v3812 = vsub.s32 0, %v3811
    %v3813 = vrot.slane %v3787, %v3812
    %v3814 = vlaneseq
    %v3815 = vshrl.u32 %v3814, 7
    %v3816 = vsub.s32 1, %v3815
    %v3817 = vrot.slane %v3787, %v3816
    %v3818 = vlaneseq
    %v3819 = vshrl.u32 %v3818, 7
    %v3820 = vsub.s32 2, %v3819
    %v3821 = vrot.slane %v3787, %v3820
    %v3822 = vlaneseq
    %v3823 = vshrl.u32 %v3822, 7
    %v3824 = vsub.s32 3, %v3823
    %v3825 = vrot.slane %v3787, %v3824
    %v3826 = vlaneseq
    %v3827 = vshrl.u32 %v3826, 7
    %v3828 = vsub.s32 4, %v3827
    %v3829 = vrot.slane %v3787, %v3828
    %v3840 = vadd.f32 %v3764, %v3793
    %v3841 = vadd.f32 %v3765, %v3797
    %v3842 = vadd.f32 %v3766, %v3801
    %v3843 = vadd.f32 %v3767, %v3805
    %v3844 = vadd.f32 %v3768, %v3809
    %v3845 = vadd.f32 %v3769, %v3813
    %v3846 = vadd.f32 %v3770, %v3817
    %v3847 = vadd.f32 %v3771, %v3821
    %v3848 = vadd.f32 %v3772, %v3825
    %v3849 = vadd.f32 %v3773, %v3829
    %3860 = vset.pattern.permute.xlu0 0
    %3861 = vperm.xlu0 %3860, %v3840
    %v3862 = vpop.permute.xlu0 %3861
    %3863 = vset.pattern.permute.xlu0 0
    %3864 = vperm.xlu0 %3863, %v3841
    %v3865 = vpop.permute.xlu0 %3864
    %3866 = vset.pattern.permute.xlu0 0
    %3867 = vperm.xlu0 %3866, %v3842
    %v3868 = vpop.permute.xlu0 %3867
    %3869 = vset.pattern.permute.xlu0 0
    %3870 = vperm.xlu0 %3869, %v3843
    %v3871 = vpop.permute.xlu0 %3870
    %3872 = vset.pattern.permute.xlu0 0
    %3873 = vperm.xlu0 %3872, %v3844
    %v3874 = vpop.permute.xlu0 %3873
    %3875 = vset.pattern.permute.xlu0 0
    %3876 = vperm.xlu0 %3875, %v3845
    %v3877 = vpop.permute.xlu0 %3876
    %3878 = vset.pattern.permute.xlu0 0
    %3879 = vperm.xlu0 %3878, %v3846
    %v3880 = vpop.permute.xlu0 %3879
    %3881 = vset.pattern.permute.xlu0 0
    %3882 = vperm.xlu0 %3881, %v3847
    %v3883 = vpop.permute.xlu0 %3882
    %3884 = vset.pattern.permute.xlu0 0
    %3885 = vperm.xlu0 %3884, %v3848
    %v3886 = vpop.permute.xlu0 %3885
    %3887 = vset.pattern.permute.xlu0 0
    %3888 = vperm.xlu0 %3887, %v3849
    %v3889 = vpop.permute.xlu0 %3888
    %v3890 = vlaneseq
    %v3891 = vshrl.u32 %v3890, 7
    %v3892 = vsub.s32 %v47, %v3891
    %v3893 = vrot.slane %v3862, %v3892
    %v3894 = vlaneseq
    %v3895 = vshrl.u32 %v3894, 7
    %v3896 = vsub.s32 %v47, %v3895
    %v3897 = vrot.slane %v3865, %v3896
    %v3898 = vlaneseq
    %v3899 = vshrl.u32 %v3898, 7
    %v3900 = vsub.s32 %v47, %v3899
    %v3901 = vrot.slane %v3868, %v3900
    %v3902 = vlaneseq
    %v3903 = vshrl.u32 %v3902, 7
    %v3904 = vsub.s32 %v47, %v3903
    %v3905 = vrot.slane %v3871, %v3904
    %v3906 = vlaneseq
    %v3907 = vshrl.u32 %v3906, 7
    %v3908 = vsub.s32 %v47, %v3907
    %v3909 = vrot.slane %v3874, %v3908
    %v3910 = vlaneseq
    %v3911 = vshrl.u32 %v3910, 7
    %v3912 = vsub.s32 %v47, %v3911
    %v3913 = vrot.slane %v3877, %v3912
    %v3914 = vlaneseq
    %v3915 = vshrl.u32 %v3914, 7
    %v3916 = vsub.s32 %v47, %v3915
    %v3917 = vrot.slane %v3880, %v3916
    %v3918 = vlaneseq
    %v3919 = vshrl.u32 %v3918, 7
    %v3920 = vsub.s32 %v47, %v3919
    %v3921 = vrot.slane %v3883, %v3920
    %v3922 = vlaneseq
    %v3923 = vshrl.u32 %v3922, 7
    %v3924 = vsub.s32 %v47, %v3923
    %v3925 = vrot.slane %v3886, %v3924
    %v3926 = vlaneseq
    %v3927 = vshrl.u32 %v3926, 7
    %v3928 = vsub.s32 %v47, %v3927
    %v3929 = vrot.slane %v3889, %v3928
    %v3930 = vsel %vm2475, %v3897, %v3893
    %v3931 = vsel %vm2477, %v3901, %v3930
    %v3932 = vsel %vm2479, %v3905, %v3931
    %v3933 = vsel %vm2481, %v3909, %v3932
    %v3934 = vsel %vm2475, %v3917, %v3913
    %v3935 = vsel %vm2477, %v3921, %v3934
    %v3936 = vsel %vm2479, %v3925, %v3935
    %v3937 = vsel %vm2481, %v3929, %v3936
    %v3940 = vsel %vm2227, %v3933, -inf
    %3941 = vmax.xlane.f32.xlu0 %v3940
    %v3942 = vpop.xlane.xlu0 %3941
    %v3943 = vsel %vm2227, %v3937, -inf
    %3944 = vmax.xlane.f32.xlu0 %v3943
    %v3945 = vpop.xlane.xlu0 %3944
    %v3948 = vlaneseq
    %v3949 = vshrl.u32 %v3948, 7
    %v3950 = vsub.s32 0, %v3949
    %v3951 = vrot.slane %v3942, %v3950
    %v3952 = vlaneseq
    %v3953 = vshrl.u32 %v3952, 7
    %v3954 = vsub.s32 1, %v3953
    %v3955 = vrot.slane %v3942, %v3954
    %v3956 = vlaneseq
    %v3957 = vshrl.u32 %v3956, 7
    %v3958 = vsub.s32 2, %v3957
    %v3959 = vrot.slane %v3942, %v3958
    %v3960 = vlaneseq
    %v3961 = vshrl.u32 %v3960, 7
    %v3962 = vsub.s32 3, %v3961
    %v3963 = vrot.slane %v3942, %v3962
    %v3964 = vlaneseq
    %v3965 = vshrl.u32 %v3964, 7
    %v3966 = vsub.s32 4, %v3965
    %v3967 = vrot.slane %v3942, %v3966
    %v3968 = vlaneseq
    %v3969 = vshrl.u32 %v3968, 7
    %v3970 = vsub.s32 0, %v3969
    %v3971 = vrot.slane %v3945, %v3970
    %v3972 = vlaneseq
    %v3973 = vshrl.u32 %v3972, 7
    %v3974 = vsub.s32 1, %v3973
    %v3975 = vrot.slane %v3945, %v3974
    %v3976 = vlaneseq
    %v3977 = vshrl.u32 %v3976, 7
    %v3978 = vsub.s32 2, %v3977
    %v3979 = vrot.slane %v3945, %v3978
    %v3980 = vlaneseq
    %v3981 = vshrl.u32 %v3980, 7
    %v3982 = vsub.s32 3, %v3981
    %v3983 = vrot.slane %v3945, %v3982
    %v3984 = vlaneseq
    %v3985 = vshrl.u32 %v3984, 7
    %v3986 = vsub.s32 4, %v3985
    %v3987 = vrot.slane %v3945, %v3986
    %vm3998 = vcmp.eq.f32.partialorder %v3840, %v3951
    %vm3999 = vcmp.eq.f32.partialorder %v3841, %v3955
    %vm4000 = vcmp.eq.f32.partialorder %v3842, %v3959
    %vm4001 = vcmp.eq.f32.partialorder %v3843, %v3963
    %vm4002 = vcmp.eq.f32.partialorder %v3844, %v3967
    %vm4003 = vcmp.eq.f32.partialorder %v3845, %v3971
    %vm4004 = vcmp.eq.f32.partialorder %v3846, %v3975
    %vm4005 = vcmp.eq.f32.partialorder %v3847, %v3979
    %vm4006 = vcmp.eq.f32.partialorder %v3848, %v3983
    %vm4007 = vcmp.eq.f32.partialorder %v3849, %v3987
    %v4008 = vsel %vm3998, %v2559, 5
    %v4009 = vsel %vm3999, %v2559, 5
    %v4010 = vsel %vm4000, %v2559, 5
    %v4011 = vsel %vm4001, %v2559, 5
    %v4012 = vsel %vm4002, %v2559, 5
    %v4013 = vsel %vm4003, %v2559, 5
    %v4014 = vsel %vm4004, %v2559, 5
    %v4015 = vsel %vm4005, %v2559, 5
    %v4016 = vsel %vm4006, %v2559, 5
    %v4017 = vsel %vm4007, %v2559, 5
    %4018 = vset.pattern.permute.xlu0 0
    %4019 = vperm.xlu0 %4018, %v4008
    %v4020 = vpop.permute.xlu0 %4019
    %4021 = vset.pattern.permute.xlu0 0
    %4022 = vperm.xlu0 %4021, %v4009
    %v4023 = vpop.permute.xlu0 %4022
    %4024 = vset.pattern.permute.xlu0 0
    %4025 = vperm.xlu0 %4024, %v4010
    %v4026 = vpop.permute.xlu0 %4025
    %4027 = vset.pattern.permute.xlu0 0
    %4028 = vperm.xlu0 %4027, %v4011
    %v4029 = vpop.permute.xlu0 %4028
    %4030 = vset.pattern.permute.xlu0 0
    %4031 = vperm.xlu0 %4030, %v4012
    %v4032 = vpop.permute.xlu0 %4031
    %4033 = vset.pattern.permute.xlu0 0
    %4034 = vperm.xlu0 %4033, %v4013
    %v4035 = vpop.permute.xlu0 %4034
    %4036 = vset.pattern.permute.xlu0 0
    %4037 = vperm.xlu0 %4036, %v4014
    %v4038 = vpop.permute.xlu0 %4037
    %4039 = vset.pattern.permute.xlu0 0
    %4040 = vperm.xlu0 %4039, %v4015
    %v4041 = vpop.permute.xlu0 %4040
    %4042 = vset.pattern.permute.xlu0 0
    %4043 = vperm.xlu0 %4042, %v4016
    %v4044 = vpop.permute.xlu0 %4043
    %4045 = vset.pattern.permute.xlu0 0
    %4046 = vperm.xlu0 %4045, %v4017
    %v4047 = vpop.permute.xlu0 %4046
    %v4048 = vlaneseq
    %v4049 = vshrl.u32 %v4048, 7
    %v4050 = vsub.s32 %v47, %v4049
    %v4051 = vrot.slane %v4020, %v4050
    %v4052 = vlaneseq
    %v4053 = vshrl.u32 %v4052, 7
    %v4054 = vsub.s32 %v47, %v4053
    %v4055 = vrot.slane %v4023, %v4054
    %v4056 = vlaneseq
    %v4057 = vshrl.u32 %v4056, 7
    %v4058 = vsub.s32 %v47, %v4057
    %v4059 = vrot.slane %v4026, %v4058
    %v4060 = vlaneseq
    %v4061 = vshrl.u32 %v4060, 7
    %v4062 = vsub.s32 %v47, %v4061
    %v4063 = vrot.slane %v4029, %v4062
    %v4064 = vlaneseq
    %v4065 = vshrl.u32 %v4064, 7
    %v4066 = vsub.s32 %v47, %v4065
    %v4067 = vrot.slane %v4032, %v4066
    %v4068 = vlaneseq
    %v4069 = vshrl.u32 %v4068, 7
    %v4070 = vsub.s32 %v47, %v4069
    %v4071 = vrot.slane %v4035, %v4070
    %v4072 = vlaneseq
    %v4073 = vshrl.u32 %v4072, 7
    %v4074 = vsub.s32 %v47, %v4073
    %v4075 = vrot.slane %v4038, %v4074
    %v4076 = vlaneseq
    %v4077 = vshrl.u32 %v4076, 7
    %v4078 = vsub.s32 %v47, %v4077
    %v4079 = vrot.slane %v4041, %v4078
    %v4080 = vlaneseq
    %v4081 = vshrl.u32 %v4080, 7
    %v4082 = vsub.s32 %v47, %v4081
    %v4083 = vrot.slane %v4044, %v4082
    %v4084 = vlaneseq
    %v4085 = vshrl.u32 %v4084, 7
    %v4086 = vsub.s32 %v47, %v4085
    %v4087 = vrot.slane %v4047, %v4086
    %v4088 = vsel %vm2475, %v4055, %v4051
    %v4089 = vsel %vm2477, %v4059, %v4088
    %v4090 = vsel %vm2479, %v4063, %v4089
    %v4091 = vsel %vm2481, %v4067, %v4090
    %v4092 = vsel %vm2475, %v4075, %v4071
    %v4093 = vsel %vm2477, %v4079, %v4092
    %v4094 = vsel %vm2479, %v4083, %v4093
    %v4095 = vsel %vm2481, %v4087, %v4094
    %v4096 = vsel %vm2227, %v4091, 2147483647
    %v4097 = vand.u32 %v4096, 65535
    %v4098 = vshra.s32 %v4096, 16
    %v4099 = vcvt.s32.f32 %v4097
    %v4100 = vcvt.s32.f32 %v4098
    %4101 = vmin.xlane.f32.xlu0 %v4100
    %v4102 = vpop.xlane.xlu0 %4101
    %vm4103 = vcmp.eq.f32.partialorder %v4100, %v4102
    %v4104 = vsel %vm4103, %v4099, inf
    %4105 = vmin.xlane.f32.xlu0 %v4104
    %v4106 = vpop.xlane.xlu0 %4105
    %v4107 = vcvt.f32.s32 %v4106
    %v4108 = vcvt.f32.s32 %v4102
    %v4109 = vshll.u32 %v4108, 16
    %v4110 = vadd.s32 %v4109, %v4107
    %v4111 = vsel %vm2227, %v4095, 2147483647
    %v4112 = vand.u32 %v4111, 65535
    %v4113 = vshra.s32 %v4111, 16
    %v4114 = vcvt.s32.f32 %v4112
    %v4115 = vcvt.s32.f32 %v4113
    %4116 = vmin.xlane.f32.xlu0 %v4115
    %v4117 = vpop.xlane.xlu0 %4116
    %vm4118 = vcmp.eq.f32.partialorder %v4115, %v4117
    %v4119 = vsel %vm4118, %v4114, inf
    %4120 = vmin.xlane.f32.xlu0 %v4119
    %v4121 = vpop.xlane.xlu0 %4120
    %v4122 = vcvt.f32.s32 %v4121
    %v4123 = vcvt.f32.s32 %v4117
    %v4124 = vshll.u32 %v4123, 16
    %v4125 = vadd.s32 %v4124, %v4122
    %v4126 = vadd.f32 %v3942, %v2275
    %v4127 = vadd.f32 %v3942, %v2282
    %v4128 = vadd.f32 %v3942, %v2289
    %v4129 = vadd.f32 %v3942, %v2296
    %v4130 = vadd.f32 %v3942, %v2303
    %v4131 = vadd.f32 %v3945, %v2275
    %v4132 = vadd.f32 %v3945, %v2282
    %v4133 = vadd.f32 %v3945, %v2289
    %v4134 = vadd.f32 %v3945, %v2296
    %v4135 = vadd.f32 %v3945, %v2303
    %v4136 = vlaneseq
    %v4137 = vshrl.u32 %v4136, 7
    %v4138 = vsub.s32 6, %v4137
    %v4139 = vrot.slane %v2163, %v4138
    %4141 = vbcast.lane.b32.xlu0 %v4139, 256
    %v4142 = vpop.permute.xlu0 %4141
    %v4143 = vlaneseq
    %v4144 = vshrl.u32 %v4143, 7
    %v4145 = vsub.s32 7, %v4144
    %v4146 = vrot.slane %v2163, %v4145
    %4148 = vbcast.lane.b32.xlu0 %v4146, 256
    %v4149 = vpop.permute.xlu0 %4148
    %v4152 = vlaneseq
    %v4153 = vshrl.u32 %v4152, 7
    %v4154 = vsub.s32 0, %v4153
    %v4155 = vrot.slane %v4142, %v4154
    %v4156 = vlaneseq
    %v4157 = vshrl.u32 %v4156, 7
    %v4158 = vsub.s32 1, %v4157
    %v4159 = vrot.slane %v4142, %v4158
    %v4160 = vlaneseq
    %v4161 = vshrl.u32 %v4160, 7
    %v4162 = vsub.s32 2, %v4161
    %v4163 = vrot.slane %v4142, %v4162
    %v4164 = vlaneseq
    %v4165 = vshrl.u32 %v4164, 7
    %v4166 = vsub.s32 3, %v4165
    %v4167 = vrot.slane %v4142, %v4166
    %v4168 = vlaneseq
    %v4169 = vshrl.u32 %v4168, 7
    %v4170 = vsub.s32 4, %v4169
    %v4171 = vrot.slane %v4142, %v4170
    %v4172 = vlaneseq
    %v4173 = vshrl.u32 %v4172, 7
    %v4174 = vsub.s32 0, %v4173
    %v4175 = vrot.slane %v4149, %v4174
    %v4176 = vlaneseq
    %v4177 = vshrl.u32 %v4176, 7
    %v4178 = vsub.s32 1, %v4177
    %v4179 = vrot.slane %v4149, %v4178
    %v4180 = vlaneseq
    %v4181 = vshrl.u32 %v4180, 7
    %v4182 = vsub.s32 2, %v4181
    %v4183 = vrot.slane %v4149, %v4182
    %v4184 = vlaneseq
    %v4185 = vshrl.u32 %v4184, 7
    %v4186 = vsub.s32 3, %v4185
    %v4187 = vrot.slane %v4149, %v4186
    %v4188 = vlaneseq
    %v4189 = vshrl.u32 %v4188, 7
    %v4190 = vsub.s32 4, %v4189
    %v4191 = vrot.slane %v4149, %v4190
    %v4202 = vadd.f32 %v4126, %v4155
    %v4203 = vadd.f32 %v4127, %v4159
    %v4204 = vadd.f32 %v4128, %v4163
    %v4205 = vadd.f32 %v4129, %v4167
    %v4206 = vadd.f32 %v4130, %v4171
    %v4207 = vadd.f32 %v4131, %v4175
    %v4208 = vadd.f32 %v4132, %v4179
    %v4209 = vadd.f32 %v4133, %v4183
    %v4210 = vadd.f32 %v4134, %v4187
    %v4211 = vadd.f32 %v4135, %v4191
    %4222 = vset.pattern.permute.xlu0 0
    %4223 = vperm.xlu0 %4222, %v4202
    %v4224 = vpop.permute.xlu0 %4223
    %4225 = vset.pattern.permute.xlu0 0
    %4226 = vperm.xlu0 %4225, %v4203
    %v4227 = vpop.permute.xlu0 %4226
    %4228 = vset.pattern.permute.xlu0 0
    %4229 = vperm.xlu0 %4228, %v4204
    %v4230 = vpop.permute.xlu0 %4229
    %4231 = vset.pattern.permute.xlu0 0
    %4232 = vperm.xlu0 %4231, %v4205
    %v4233 = vpop.permute.xlu0 %4232
    %4234 = vset.pattern.permute.xlu0 0
    %4235 = vperm.xlu0 %4234, %v4206
    %v4236 = vpop.permute.xlu0 %4235
    %4237 = vset.pattern.permute.xlu0 0
    %4238 = vperm.xlu0 %4237, %v4207
    %v4239 = vpop.permute.xlu0 %4238
    %4240 = vset.pattern.permute.xlu0 0
    %4241 = vperm.xlu0 %4240, %v4208
    %v4242 = vpop.permute.xlu0 %4241
    %4243 = vset.pattern.permute.xlu0 0
    %4244 = vperm.xlu0 %4243, %v4209
    %v4245 = vpop.permute.xlu0 %4244
    %4246 = vset.pattern.permute.xlu0 0
    %4247 = vperm.xlu0 %4246, %v4210
    %v4248 = vpop.permute.xlu0 %4247
    %4249 = vset.pattern.permute.xlu0 0
    %4250 = vperm.xlu0 %4249, %v4211
    %v4251 = vpop.permute.xlu0 %4250
    %v4252 = vlaneseq
    %v4253 = vshrl.u32 %v4252, 7
    %v4254 = vsub.s32 %v47, %v4253
    %v4255 = vrot.slane %v4224, %v4254
    %v4256 = vlaneseq
    %v4257 = vshrl.u32 %v4256, 7
    %v4258 = vsub.s32 %v47, %v4257
    %v4259 = vrot.slane %v4227, %v4258
    %v4260 = vlaneseq
    %v4261 = vshrl.u32 %v4260, 7
    %v4262 = vsub.s32 %v47, %v4261
    %v4263 = vrot.slane %v4230, %v4262
    %v4264 = vlaneseq
    %v4265 = vshrl.u32 %v4264, 7
    %v4266 = vsub.s32 %v47, %v4265
    %v4267 = vrot.slane %v4233, %v4266
    %v4268 = vlaneseq
    %v4269 = vshrl.u32 %v4268, 7
    %v4270 = vsub.s32 %v47, %v4269
    %v4271 = vrot.slane %v4236, %v4270
    %v4272 = vlaneseq
    %v4273 = vshrl.u32 %v4272, 7
    %v4274 = vsub.s32 %v47, %v4273
    %v4275 = vrot.slane %v4239, %v4274
    %v4276 = vlaneseq
    %v4277 = vshrl.u32 %v4276, 7
    %v4278 = vsub.s32 %v47, %v4277
    %v4279 = vrot.slane %v4242, %v4278
    %v4280 = vlaneseq
    %v4281 = vshrl.u32 %v4280, 7
    %v4282 = vsub.s32 %v47, %v4281
    %v4283 = vrot.slane %v4245, %v4282
    %v4284 = vlaneseq
    %v4285 = vshrl.u32 %v4284, 7
    %v4286 = vsub.s32 %v47, %v4285
    %v4287 = vrot.slane %v4248, %v4286
    %v4288 = vlaneseq
    %v4289 = vshrl.u32 %v4288, 7
    %v4290 = vsub.s32 %v47, %v4289
    %v4291 = vrot.slane %v4251, %v4290
    %v4292 = vsel %vm2475, %v4259, %v4255
    %v4293 = vsel %vm2477, %v4263, %v4292
    %v4294 = vsel %vm2479, %v4267, %v4293
    %v4295 = vsel %vm2481, %v4271, %v4294
    %v4296 = vsel %vm2475, %v4279, %v4275
    %v4297 = vsel %vm2477, %v4283, %v4296
    %v4298 = vsel %vm2479, %v4287, %v4297
    %v4299 = vsel %vm2481, %v4291, %v4298
    %v4302 = vsel %vm2227, %v4295, -inf
    %4303 = vmax.xlane.f32.xlu0 %v4302
    %v4304 = vpop.xlane.xlu0 %4303
    %v4305 = vsel %vm2227, %v4299, -inf
    %4306 = vmax.xlane.f32.xlu0 %v4305
    %v4307 = vpop.xlane.xlu0 %4306
    %v4310 = vlaneseq
    %v4311 = vshrl.u32 %v4310, 7
    %v4312 = vsub.s32 0, %v4311
    %v4313 = vrot.slane %v4304, %v4312
    %v4314 = vlaneseq
    %v4315 = vshrl.u32 %v4314, 7
    %v4316 = vsub.s32 1, %v4315
    %v4317 = vrot.slane %v4304, %v4316
    %v4318 = vlaneseq
    %v4319 = vshrl.u32 %v4318, 7
    %v4320 = vsub.s32 2, %v4319
    %v4321 = vrot.slane %v4304, %v4320
    %v4322 = vlaneseq
    %v4323 = vshrl.u32 %v4322, 7
    %v4324 = vsub.s32 3, %v4323
    %v4325 = vrot.slane %v4304, %v4324
    %v4326 = vlaneseq
    %v4327 = vshrl.u32 %v4326, 7
    %v4328 = vsub.s32 4, %v4327
    %v4329 = vrot.slane %v4304, %v4328
    %v4330 = vlaneseq
    %v4331 = vshrl.u32 %v4330, 7
    %v4332 = vsub.s32 0, %v4331
    %v4333 = vrot.slane %v4307, %v4332
    %v4334 = vlaneseq
    %v4335 = vshrl.u32 %v4334, 7
    %v4336 = vsub.s32 1, %v4335
    %v4337 = vrot.slane %v4307, %v4336
    %v4338 = vlaneseq
    %v4339 = vshrl.u32 %v4338, 7
    %v4340 = vsub.s32 2, %v4339
    %v4341 = vrot.slane %v4307, %v4340
    %v4342 = vlaneseq
    %v4343 = vshrl.u32 %v4342, 7
    %v4344 = vsub.s32 3, %v4343
    %v4345 = vrot.slane %v4307, %v4344
    %v4346 = vlaneseq
    %v4347 = vshrl.u32 %v4346, 7
    %v4348 = vsub.s32 4, %v4347
    %v4349 = vrot.slane %v4307, %v4348
    %vm4360 = vcmp.eq.f32.partialorder %v4202, %v4313
    %vm4361 = vcmp.eq.f32.partialorder %v4203, %v4317
    %vm4362 = vcmp.eq.f32.partialorder %v4204, %v4321
    %vm4363 = vcmp.eq.f32.partialorder %v4205, %v4325
    %vm4364 = vcmp.eq.f32.partialorder %v4206, %v4329
    %vm4365 = vcmp.eq.f32.partialorder %v4207, %v4333
    %vm4366 = vcmp.eq.f32.partialorder %v4208, %v4337
    %vm4367 = vcmp.eq.f32.partialorder %v4209, %v4341
    %vm4368 = vcmp.eq.f32.partialorder %v4210, %v4345
    %vm4369 = vcmp.eq.f32.partialorder %v4211, %v4349
    %v4370 = vsel %vm4360, %v2559, 5
    %v4371 = vsel %vm4361, %v2559, 5
    %v4372 = vsel %vm4362, %v2559, 5
    %v4373 = vsel %vm4363, %v2559, 5
    %v4374 = vsel %vm4364, %v2559, 5
    %v4375 = vsel %vm4365, %v2559, 5
    %v4376 = vsel %vm4366, %v2559, 5
    %v4377 = vsel %vm4367, %v2559, 5
    %v4378 = vsel %vm4368, %v2559, 5
    %v4379 = vsel %vm4369, %v2559, 5
    %4380 = vset.pattern.permute.xlu0 0
    %4381 = vperm.xlu0 %4380, %v4370
    %v4382 = vpop.permute.xlu0 %4381
    %4383 = vset.pattern.permute.xlu0 0
    %4384 = vperm.xlu0 %4383, %v4371
    %v4385 = vpop.permute.xlu0 %4384
    %4386 = vset.pattern.permute.xlu0 0
    %4387 = vperm.xlu0 %4386, %v4372
    %v4388 = vpop.permute.xlu0 %4387
    %4389 = vset.pattern.permute.xlu0 0
    %4390 = vperm.xlu0 %4389, %v4373
    %v4391 = vpop.permute.xlu0 %4390
    %4392 = vset.pattern.permute.xlu0 0
    %4393 = vperm.xlu0 %4392, %v4374
    %v4394 = vpop.permute.xlu0 %4393
    %4395 = vset.pattern.permute.xlu0 0
    %4396 = vperm.xlu0 %4395, %v4375
    %v4397 = vpop.permute.xlu0 %4396
    %4398 = vset.pattern.permute.xlu0 0
    %4399 = vperm.xlu0 %4398, %v4376
    %v4400 = vpop.permute.xlu0 %4399
    %4401 = vset.pattern.permute.xlu0 0
    %4402 = vperm.xlu0 %4401, %v4377
    %v4403 = vpop.permute.xlu0 %4402
    %4404 = vset.pattern.permute.xlu0 0
    %4405 = vperm.xlu0 %4404, %v4378
    %v4406 = vpop.permute.xlu0 %4405
    %4407 = vset.pattern.permute.xlu0 0
    %4408 = vperm.xlu0 %4407, %v4379
    %v4409 = vpop.permute.xlu0 %4408
    %v4410 = vlaneseq
    %v4411 = vshrl.u32 %v4410, 7
    %v4412 = vsub.s32 %v47, %v4411
    %v4413 = vrot.slane %v4382, %v4412
    %v4414 = vlaneseq
    %v4415 = vshrl.u32 %v4414, 7
    %v4416 = vsub.s32 %v47, %v4415
    %v4417 = vrot.slane %v4385, %v4416
    %v4418 = vlaneseq
    %v4419 = vshrl.u32 %v4418, 7
    %v4420 = vsub.s32 %v47, %v4419
    %v4421 = vrot.slane %v4388, %v4420
    %v4422 = vlaneseq
    %v4423 = vshrl.u32 %v4422, 7
    %v4424 = vsub.s32 %v47, %v4423
    %v4425 = vrot.slane %v4391, %v4424
    %v4426 = vlaneseq
    %v4427 = vshrl.u32 %v4426, 7
    %v4428 = vsub.s32 %v47, %v4427
    %v4429 = vrot.slane %v4394, %v4428
    %v4430 = vlaneseq
    %v4431 = vshrl.u32 %v4430, 7
    %v4432 = vsub.s32 %v47, %v4431
    %v4433 = vrot.slane %v4397, %v4432
    %v4434 = vlaneseq
    %v4435 = vshrl.u32 %v4434, 7
    %v4436 = vsub.s32 %v47, %v4435
    %v4437 = vrot.slane %v4400, %v4436
    %v4438 = vlaneseq
    %v4439 = vshrl.u32 %v4438, 7
    %v4440 = vsub.s32 %v47, %v4439
    %v4441 = vrot.slane %v4403, %v4440
    %v4442 = vlaneseq
    %v4443 = vshrl.u32 %v4442, 7
    %v4444 = vsub.s32 %v47, %v4443
    %v4445 = vrot.slane %v4406, %v4444
    %v4446 = vlaneseq
    %v4447 = vshrl.u32 %v4446, 7
    %v4448 = vsub.s32 %v47, %v4447
    %v4449 = vrot.slane %v4409, %v4448
    %v4450 = vsel %vm2475, %v4417, %v4413
    %v4451 = vsel %vm2477, %v4421, %v4450
    %v4452 = vsel %vm2479, %v4425, %v4451
    %v4453 = vsel %vm2481, %v4429, %v4452
    %v4454 = vsel %vm2475, %v4437, %v4433
    %v4455 = vsel %vm2477, %v4441, %v4454
    %v4456 = vsel %vm2479, %v4445, %v4455
    %v4457 = vsel %vm2481, %v4449, %v4456
    %v4458 = vsel %vm2227, %v4453, 2147483647
    %v4459 = vand.u32 %v4458, 65535
    %v4460 = vshra.s32 %v4458, 16
    %v4461 = vcvt.s32.f32 %v4459
    %v4462 = vcvt.s32.f32 %v4460
    %4463 = vmin.xlane.f32.xlu0 %v4462
    %v4464 = vpop.xlane.xlu0 %4463
    %vm4465 = vcmp.eq.f32.partialorder %v4462, %v4464
    %v4466 = vsel %vm4465, %v4461, inf
    %4467 = vmin.xlane.f32.xlu0 %v4466
    %v4468 = vpop.xlane.xlu0 %4467
    %v4469 = vcvt.f32.s32 %v4468
    %v4470 = vcvt.f32.s32 %v4464
    %v4471 = vshll.u32 %v4470, 16
    %v4472 = vadd.s32 %v4471, %v4469
    %v4473 = vsel %vm2227, %v4457, 2147483647
    %v4474 = vand.u32 %v4473, 65535
    %v4475 = vshra.s32 %v4473, 16
    %v4476 = vcvt.s32.f32 %v4474
    %v4477 = vcvt.s32.f32 %v4475
    %4478 = vmin.xlane.f32.xlu0 %v4477
    %v4479 = vpop.xlane.xlu0 %4478
    %vm4480 = vcmp.eq.f32.partialorder %v4477, %v4479
    %v4481 = vsel %vm4480, %v4476, inf
    %4482 = vmin.xlane.f32.xlu0 %v4481
    %v4483 = vpop.xlane.xlu0 %4482
    %v4484 = vcvt.f32.s32 %v4483
    %v4485 = vcvt.f32.s32 %v4479
    %v4486 = vshll.u32 %v4485, 16
    %v4487 = vadd.s32 %v4486, %v4484
    %v4488 = vld [vmem:[%s11] sm:$0x1]
    %v4490 = vlaneseq
    %v4491 = vshrl.u32 %v4490, 7
    %v4492 = vsub.s32 0, %v4491
    %v4493 = vrot.slane %v4488, %v4492
    %4495 = vbcast.lane.b32.xlu0 %v4493, 256
    %v4496 = vpop.permute.xlu0 %4495
    %v4498 = vadd.f32 %v4304, %v4496
    %v4499 = vadd.f32 %v4307, %v4496
    %4502 = vset.pattern.permute.xlu0 0
    %4503 = vperm.xlu0 %4502, %v4498
    %v4504 = vpop.permute.xlu0 %4503
    %4505 = vset.pattern.permute.xlu0 0
    %4506 = vperm.xlu0 %4505, %v4499
    %v4507 = vpop.permute.xlu0 %4506
    %v4508 = vlaneseq
    %v4509 = vshrl.u32 %v4508, 7
    %v4510 = vsub.s32 %v47, %v4509
    %v4511 = vrot.slane %v4504, %v4510
    %v4512 = vlaneseq
    %v4513 = vshrl.u32 %v4512, 7
    %v4514 = vsub.s32 %v47, %v4513
    %v4515 = vrot.slane %v4507, %v4514
    %v4516 = vsel %vm2475, %v4515, %v4511
    %vm4518 = vcmask 33792
    %v4519 = vsel %vm4518, %v4516, -inf
    %4520 = vmax.xlane.f32.xlu0 %v4519
    %v4521 = vpop.xlane.xlu0 %4520
    %v4523 = vlaneseq
    %v4524 = vshrl.u32 %v4523, 7
    %v4525 = vsub.s32 0, %v4524
    %v4526 = vrot.slane %v4521, %v4525
    %v4527 = vlaneseq
    %v4528 = vshrl.u32 %v4527, 7
    %v4529 = vsub.s32 1, %v4528
    %v4530 = vrot.slane %v4521, %v4529
    %vm4533 = vcmp.eq.f32.partialorder %v4498, %v4526
    %vm4534 = vcmp.eq.f32.partialorder %v4499, %v4530
    %v4535 = vsel %vm4533, %v2559, 5
    %v4536 = vsel %vm4534, %v2559, 5
    %4537 = vset.pattern.permute.xlu0 0
    %4538 = vperm.xlu0 %4537, %v4535
    %v4539 = vpop.permute.xlu0 %4538
    %4540 = vset.pattern.permute.xlu0 0
    %4541 = vperm.xlu0 %4540, %v4536
    %v4542 = vpop.permute.xlu0 %4541
    %v4543 = vlaneseq
    %v4544 = vshrl.u32 %v4543, 7
    %v4545 = vsub.s32 %v47, %v4544
    %v4546 = vrot.slane %v4539, %v4545
    %v4547 = vlaneseq
    %v4548 = vshrl.u32 %v4547, 7
    %v4549 = vsub.s32 %v47, %v4548
    %v4550 = vrot.slane %v4542, %v4549
    %v4551 = vsel %vm2475, %v4550, %v4546
    %v4552 = vsel %vm4518, %v4551, 2147483647
    %v4553 = vand.u32 %v4552, 65535
    %v4554 = vshra.s32 %v4552, 16
    %v4555 = vcvt.s32.f32 %v4553
    %v4556 = vcvt.s32.f32 %v4554
    %4557 = vmin.xlane.f32.xlu0 %v4556
    %v4558 = vpop.xlane.xlu0 %4557
    %vm4559 = vcmp.eq.f32.partialorder %v4556, %v4558
    %v4560 = vsel %vm4559, %v4555, inf
    %4561 = vmin.xlane.f32.xlu0 %v4560
    %v4562 = vpop.xlane.xlu0 %4561
    %v4563 = vcvt.f32.s32 %v4562
    %v4564 = vcvt.f32.s32 %v4558
    %v4565 = vshll.u32 %v4564, 16
    %v4566 = vadd.s32 %v4565, %v4563
    %vm4567 = vcmp.eq.s32.totalorder %v47, 7
    %v4568 = vsel %vm4567, %v4566, 0
    %vm4569 = vcmp.eq.s32.totalorder %v47, %v4566
    %v4570 = vlaneseq
    %v4571 = vshrl.u32 %v4570, 7
    %v4572 = vsub.s32 %v47, %v4571
    %v4573 = vrot.slane %v4472, %v4572
    %v4574 = vlaneseq
    %v4575 = vshrl.u32 %v4574, 7
    %v4576 = vsub.s32 %v47, %v4575
    %v4577 = vrot.slane %v4487, %v4576
    %v4578 = vsel %vm2475, %v4577, %v4573
    %v4579 = vsel %vm4569, %v4578, 0
    %v4580 = vsel %vm4518, %v4579, 0
    %v4581 = vand.u32 %v4580, 65535
    %v4582 = vshrl.u32 %v4580, 16
    %v4583 = vcvt.s32.f32 %v4581
    %v4584 = vcvt.s32.f32 %v4582
    %4585 = vadd.xlane.f32.xlu0 %v4583
    %v4586 = vpop.xlane.xlu0 %4585
    %4587 = vadd.xlane.f32.xlu0 %v4584
    %v4588 = vpop.xlane.xlu0 %4587
    %v4589 = vcvt.f32.s32 %v4586
    %v4590 = vcvt.f32.s32 %v4588
    %v4591 = vshll.u32 %v4590, 16
    %v4592 = vadd.s32 %v4591, %v4589
    %vm4593 = vcmp.eq.s32.totalorder %v47, 6
    %v4594 = vsel %vm4593, %v4592, %v4568
    %vm4595 = vcmp.eq.s32.totalorder %v47, %v4592
    %v4596 = vlaneseq
    %v4597 = vshrl.u32 %v4596, 7
    %v4598 = vsub.s32 %v47, %v4597
    %v4599 = vrot.slane %v4110, %v4598
    %v4600 = vlaneseq
    %v4601 = vshrl.u32 %v4600, 7
    %v4602 = vsub.s32 %v47, %v4601
    %v4603 = vrot.slane %v4125, %v4602
    %v4604 = vsel %vm2475, %v4603, %v4599
    %v4605 = vsel %vm4595, %v4604, 0
    %v4606 = vsel %vm4518, %v4605, 0
    %v4607 = vand.u32 %v4606, 65535
    %v4608 = vshrl.u32 %v4606, 16
    %v4609 = vcvt.s32.f32 %v4607
    %v4610 = vcvt.s32.f32 %v4608
    %4611 = vadd.xlane.f32.xlu0 %v4609
    %v4612 = vpop.xlane.xlu0 %4611
    %4613 = vadd.xlane.f32.xlu0 %v4610
    %v4614 = vpop.xlane.xlu0 %4613
    %v4615 = vcvt.f32.s32 %v4612
    %v4616 = vcvt.f32.s32 %v4614
    %v4617 = vshll.u32 %v4616, 16
    %v4618 = vadd.s32 %v4617, %v4615
    %vm4619 = vcmp.eq.s32.totalorder %v47, 5
    %v4620 = vsel %vm4619, %v4618, %v4594
    %vm4621 = vcmp.eq.s32.totalorder %v47, %v4618
    %v4622 = vlaneseq
    %v4623 = vshrl.u32 %v4622, 7
    %v4624 = vsub.s32 %v47, %v4623
    %v4625 = vrot.slane %v3748, %v4624
    %v4626 = vlaneseq
    %v4627 = vshrl.u32 %v4626, 7
    %v4628 = vsub.s32 %v47, %v4627
    %v4629 = vrot.slane %v3763, %v4628
    %v4630 = vsel %vm2475, %v4629, %v4625
    %v4631 = vsel %vm4621, %v4630, 0
    %v4632 = vsel %vm4518, %v4631, 0
    %v4633 = vand.u32 %v4632, 65535
    %v4634 = vshrl.u32 %v4632, 16
    %v4635 = vcvt.s32.f32 %v4633
    %v4636 = vcvt.s32.f32 %v4634
    %4637 = vadd.xlane.f32.xlu0 %v4635
    %v4638 = vpop.xlane.xlu0 %4637
    %4639 = vadd.xlane.f32.xlu0 %v4636
    %v4640 = vpop.xlane.xlu0 %4639
    %v4641 = vcvt.f32.s32 %v4638
    %v4642 = vcvt.f32.s32 %v4640
    %v4643 = vshll.u32 %v4642, 16
    %v4644 = vadd.s32 %v4643, %v4641
    %vm4645 = vcmp.eq.s32.totalorder %v47, 4
    %v4646 = vsel %vm4645, %v4644, %v4620
    %vm4647 = vcmp.eq.s32.totalorder %v47, %v4644
    %v4648 = vlaneseq
    %v4649 = vshrl.u32 %v4648, 7
    %v4650 = vsub.s32 %v47, %v4649
    %v4651 = vrot.slane %v3386, %v4650
    %v4652 = vlaneseq
    %v4653 = vshrl.u32 %v4652, 7
    %v4654 = vsub.s32 %v47, %v4653
    %v4655 = vrot.slane %v3401, %v4654
    %v4656 = vsel %vm2475, %v4655, %v4651
    %v4657 = vsel %vm4647, %v4656, 0
    %v4658 = vsel %vm4518, %v4657, 0
    %v4659 = vand.u32 %v4658, 65535
    %v4660 = vshrl.u32 %v4658, 16
    %v4661 = vcvt.s32.f32 %v4659
    %v4662 = vcvt.s32.f32 %v4660
    %4663 = vadd.xlane.f32.xlu0 %v4661
    %v4664 = vpop.xlane.xlu0 %4663
    %4665 = vadd.xlane.f32.xlu0 %v4662
    %v4666 = vpop.xlane.xlu0 %4665
    %v4667 = vcvt.f32.s32 %v4664
    %v4668 = vcvt.f32.s32 %v4666
    %v4669 = vshll.u32 %v4668, 16
    %v4670 = vadd.s32 %v4669, %v4667
    %vm4671 = vcmp.eq.s32.totalorder %v47, 3
    %v4672 = vsel %vm4671, %v4670, %v4646
    %vm4673 = vcmp.eq.s32.totalorder %v47, %v4670
    %v4674 = vlaneseq
    %v4675 = vshrl.u32 %v4674, 7
    %v4676 = vsub.s32 %v47, %v4675
    %v4677 = vrot.slane %v3024, %v4676
    %v4678 = vlaneseq
    %v4679 = vshrl.u32 %v4678, 7
    %v4680 = vsub.s32 %v47, %v4679
    %v4681 = vrot.slane %v3039, %v4680
    %v4682 = vsel %vm2475, %v4681, %v4677
    %v4683 = vsel %vm4673, %v4682, 0
    %v4684 = vsel %vm4518, %v4683, 0
    %v4685 = vand.u32 %v4684, 65535
    %v4686 = vshrl.u32 %v4684, 16
    %v4687 = vcvt.s32.f32 %v4685
    %v4688 = vcvt.s32.f32 %v4686
    %4689 = vadd.xlane.f32.xlu0 %v4687
    %v4690 = vpop.xlane.xlu0 %4689
    %4691 = vadd.xlane.f32.xlu0 %v4688
    %v4692 = vpop.xlane.xlu0 %4691
    %v4693 = vcvt.f32.s32 %v4690
    %v4694 = vcvt.f32.s32 %v4692
    %v4695 = vshll.u32 %v4694, 16
    %v4696 = vadd.s32 %v4695, %v4693
    %vm4697 = vcmp.eq.s32.totalorder %v47, 2
    %v4698 = vsel %vm4697, %v4696, %v4672
    %vm4699 = vcmp.eq.s32.totalorder %v47, %v4696
    %v4700 = vlaneseq
    %v4701 = vshrl.u32 %v4700, 7
    %v4702 = vsub.s32 %v47, %v4701
    %v4703 = vrot.slane %v2662, %v4702
    %v4704 = vlaneseq
    %v4705 = vshrl.u32 %v4704, 7
    %v4706 = vsub.s32 %v47, %v4705
    %v4707 = vrot.slane %v2677, %v4706
    %v4708 = vsel %vm2475, %v4707, %v4703
    %v4709 = vsel %vm4699, %v4708, 0
    %v4710 = vsel %vm4518, %v4709, 0
    %v4711 = vand.u32 %v4710, 65535
    %v4712 = vshrl.u32 %v4710, 16
    %v4713 = vcvt.s32.f32 %v4711
    %v4714 = vcvt.s32.f32 %v4712
    %4715 = vadd.xlane.f32.xlu0 %v4713
    %v4716 = vpop.xlane.xlu0 %4715
    %4717 = vadd.xlane.f32.xlu0 %v4714
    %v4718 = vpop.xlane.xlu0 %4717
    %v4719 = vcvt.f32.s32 %v4716
    %v4720 = vcvt.f32.s32 %v4718
    %v4721 = vshll.u32 %v4720, 16
    %v4722 = vadd.s32 %v4721, %v4719
    %vm4723 = vcmp.eq.s32.totalorder %v47, 1
    %v4724 = vsel %vm4723, %v4722, %v4698
    %vm4725 = vcmp.eq.s32.totalorder %v47, %v4722
    %v4726 = vlaneseq
    %v4727 = vshrl.u32 %v4726, 7
    %v4728 = vsub.s32 %v47, %v4727
    %v4729 = vrot.slane %v2252, %v4728
    %v4730 = vlaneseq
    %v4731 = vshrl.u32 %v4730, 7
    %v4732 = vsub.s32 %v47, %v4731
    %v4733 = vrot.slane %v2267, %v4732
    %v4734 = vsel %vm2475, %v4733, %v4729
    %v4735 = vsel %vm4725, %v4734, 0
    %v4736 = vsel %vm4518, %v4735, 0
    %v4737 = vand.u32 %v4736, 65535
    %v4738 = vshrl.u32 %v4736, 16
    %v4739 = vcvt.s32.f32 %v4737
    %v4740 = vcvt.s32.f32 %v4738
    %4741 = vadd.xlane.f32.xlu0 %v4739
    %v4742 = vpop.xlane.xlu0 %4741
    %4743 = vadd.xlane.f32.xlu0 %v4740
    %v4744 = vpop.xlane.xlu0 %4743
    %v4745 = vcvt.f32.s32 %v4742
    %v4746 = vcvt.f32.s32 %v4744
    %v4747 = vshll.u32 %v4746, 16
    %v4748 = vadd.s32 %v4747, %v4745
    %vm4749 = vcmp.eq.s32.totalorder %v47, 0
    %v4750 = vsel %vm4749, %v4748, %v4724
    %vm4751 = vcmask 58368
    %4752 = vst.msk [vmem:[#allocation4] sm:$0x3] %vm4751, %v4750
    // Predicated region
    $region50: #{tpu_custom_call.1} parent=1 // pred_check
      _
    $region51: #{tpu_custom_call.1} parent=1 // pred_check_branch
      %4754 = sbr.rel (0) target = $region53
    $region52: #{tpu_custom_call.1} parent=1 // pred_region
      _
    $region53: #{tpu_custom_call.1} parent=1 // pred_fallthru
      _
    // Predicated region
    $region54: #{tpu_custom_call.1} parent=1 // pred_check
      _
    $region55: #{tpu_custom_call.1} parent=1 // pred_check_branch
      %4756 = sbr.rel (0) target = $region57
    $region56: #{tpu_custom_call.1} parent=1 // pred_region
      %s4758 = ssub.s32 32, 32
      %4759 = vsyncadd [#allocation5], %s4758
      %s4761 = sshll.u32 [#allocation4], 4
      %s4762 = int_to_ptr.vmem [resolvable:$true] %s4761
      %4764 = dma.vmem_to_hbm [thread:$0]  %s4762, 32, %s13, [#allocation5]
    $region57: #{tpu_custom_call.1} parent=1 // pred_fallthru
      _
    // Predicated region
    $region58: #{tpu_custom_call.1} parent=1 // pred_check
      _
    $region59: #{tpu_custom_call.1} parent=1 // pred_check_branch
      %4766 = sbr.rel (0) target = $region61
    $region60: #{tpu_custom_call.1} parent=1 // pred_region
      _
    $region61: #{tpu_custom_call.1} parent=1 // pred_fallthru
      _
    // Predicated region
    $region62: #{tpu_custom_call.1} parent=1 // pred_check
      _
    $region63: #{tpu_custom_call.1} parent=1 // pred_check_branch
      %4768 = sbr.rel (0) target = $region65
    $region64: #{tpu_custom_call.1} parent=1 // pred_region
      %4769 = dma.done [#allocation5], 32
    $region65: #{tpu_custom_call.1} parent=1 // pred_fallthru
      _
    %4770 = vsyncpa [#allocation5], 1

</llo_original>
